<compile_context>
chip_gen: v6e
topology: v6e:2x2x1
jax: 0.10.0
libtpu: 0.0.40
codegen_flags: <defaults>
</compile_context>

<pallas_src>
import functools

import jax
import jax.numpy as jnp
from jax.experimental import pallas as pl
from jax.experimental.pallas import tpu as pltpu

_EPS = 1e-5


# ------------------------------ Pallas kernel -------------------------------

def _make_fused_kernel(stride, H, W, Ho, Wo, cin_p, cout_p, has_sc_conv):
    """BN1+ReLU -> conv1(3x3/stride) -> BN2+ReLU -> conv2(3x3) + shortcut."""
    Hp, Wp = H + 2, W + 2          # o1 scratch with 1-pixel halo
    Hop, Wop = Ho + 2, Wo + 2      # a2 scratch with 1-pixel halo

    def kernel(*refs):
        if has_sc_conv:
            (x_ref, s1_ref, b1_ref, w1_ref, s2_ref, b2_ref, w2_ref, wsc_ref,
             o_ref, o1_scr, a2_scr) = refs
        else:
            (x_ref, s1_ref, b1_ref, w1_ref, s2_ref, b2_ref, w2_ref,
             o_ref, o1_scr, a2_scr) = refs
            wsc_ref = None

        # ---- BN1 + ReLU into the halo-padded o1 scratch --------------------
        # Zero only the halo ring (thin stores), every step: no cross-step
        # state, so megacore sharding of the batch axis stays correct.
        o1_scr[pl.ds(0, 1), :, :] = jnp.zeros((1, Wp, cin_p), jnp.float32)
        o1_scr[pl.ds(Hp - 1, 1), :, :] = jnp.zeros((1, Wp, cin_p), jnp.float32)
        o1_scr[:, pl.ds(0, 1), :] = jnp.zeros((Hp, 1, cin_p), jnp.float32)
        o1_scr[:, pl.ds(Wp - 1, 1), :] = jnp.zeros((Hp, 1, cin_p), jnp.float32)

        o1 = jnp.maximum(x_ref[0] * s1_ref[...] + b1_ref[...], 0.0)
        o1_scr[pl.ds(1, H), pl.ds(1, W), :] = o1        # interior only

        # ---- conv1: 9 in-VMEM taps -> bf16 MXU dots, f32 accumulation ------
        if stride == 1:
            def tap1(kh, kw):
                return o1_scr[pl.ds(kh, Ho), pl.ds(kw, Wo), :]
        else:
            def tap1(kh, kw):
                return o1_scr[pl.ds(kh, Ho, stride), pl.ds(kw, Wo, stride), :]

        acc = None
        for kh in range(3):
            for kw in range(3):
                t = tap1(kh, kw).reshape(Ho * Wo, cin_p).astype(jnp.bfloat16)
                k0 = (3 * kh + kw) * cin_p
                d = jnp.dot(t, w1_ref[k0:k0 + cin_p, :],
                            preferred_element_type=jnp.float32)
                acc = d if acc is None else acc + d     # first dot inits acc

        # ---- BN2 + ReLU into the halo-padded a2 scratch ---------------------
        # (zero-padding after the ReLU matches conv2(F.relu(self.bn2(out)))).
        a2 = jnp.maximum(acc * s2_ref[...] + b2_ref[...], 0.0)
        a2_scr[pl.ds(0, 1), :, :] = jnp.zeros((1, Wop, cout_p), jnp.float32)
        a2_scr[pl.ds(Hop - 1, 1), :, :] = jnp.zeros((1, Wop, cout_p), jnp.float32)
        a2_scr[:, pl.ds(0, 1), :] = jnp.zeros((Hop, 1, cout_p), jnp.float32)
        a2_scr[:, pl.ds(Wop - 1, 1), :] = jnp.zeros((Hop, 1, cout_p), jnp.float32)
        a2_scr[pl.ds(1, Ho), pl.ds(1, Wo), :] = a2.reshape(Ho, Wo, cout_p)

        # ---- shortcut initialises the conv2 accumulator (free residual) ----
        if has_sc_conv:
            # 1x1/stride conv on relu(bn1(x)) == the centre tap of o1.
            sci = tap1(1, 1).reshape(Ho * Wo, cin_p).astype(jnp.bfloat16)
            acc2 = jnp.dot(sci, wsc_ref[...], preferred_element_type=jnp.float32)
        else:
            # identity: raw x (stride == 1 and cin_p == cout_p), read in place.
            acc2 = x_ref[0].reshape(Ho * Wo, cout_p)

        # ---- conv2: 9 in-VMEM taps + residual add ---------------------------
        for kh in range(3):
            for kw in range(3):
                t = a2_scr[pl.ds(kh, Ho), pl.ds(kw, Wo), :]
                t = t.reshape(Ho * Wo, cout_p).astype(jnp.bfloat16)
                k0 = (3 * kh + kw) * cout_p
                acc2 = acc2 + jnp.dot(t, w2_ref[k0:k0 + cout_p, :],
                                      preferred_element_type=jnp.float32)

        o_ref[0] = acc2

    return kernel


# --------------------- host-side parameter / layout prep --------------------

def _round_up(v, m):
    return (v + m - 1) // m * m


def _fold_bn(gamma, beta, mean, var, cpad):
    scale = gamma / jnp.sqrt(var + _EPS)
    bias = beta - mean * scale
    scale = jnp.pad(scale, (0, cpad - scale.shape[0]))
    bias = jnp.pad(bias, (0, cpad - bias.shape[0]))
    return scale.reshape(1, cpad), bias.reshape(1, cpad)


def _conv_matrix(w_oihw, cin_p, cout_p):
    """PyTorch (Cout, Cin, Kh, Kw) -> lane-dense (Kh*Kw*cin_p, cout_p) bf16."""
    cout, cin, kh, kw = w_oihw.shape
    wm = jnp.transpose(w_oihw, (2, 3, 1, 0))                   # (Kh, Kw, Cin, Cout)
    wm = jnp.pad(wm, ((0, 0), (0, 0), (0, cin_p - cin), (0, cout_p - cout)))
    return wm.reshape(kh * kw * cin_p, cout_p).astype(jnp.bfloat16)


def init_params(key, in_planes, planes, stride):
    ks = jax.random.split(key, 12)
    p = {
        "g1": jax.random.uniform(ks[0], (in_planes,), jnp.float32, 0.5, 1.5),
        "b1": jax.random.normal(ks[1], (in_planes,), jnp.float32) * 0.1,
        "m1": jax.random.normal(ks[2], (in_planes,), jnp.float32) * 0.1,
        "v1": jax.random.uniform(ks[3], (in_planes,), jnp.float32, 0.5, 1.5),
        "w1": jax.random.normal(ks[4], (planes, in_planes, 3, 3), jnp.float32) * 0.1,
        "g2": jax.random.uniform(ks[5], (planes,), jnp.float32, 0.5, 1.5),
        "b2": jax.random.normal(ks[6], (planes,), jnp.float32) * 0.1,
        "m2": jax.random.normal(ks[7], (planes,), jnp.float32) * 0.1,
        "v2": jax.random.uniform(ks[8], (planes,), jnp.float32, 0.5, 1.5),
        "w2": jax.random.normal(ks[9], (planes, planes, 3, 3), jnp.float32) * 0.1,
    }
    if stride != 1 or in_planes != planes:
        p["wsc"] = jax.random.normal(ks[10], (planes, in_planes, 1, 1), jnp.float32) * 0.1
    return p


# ------------------------------- forward pass --------------------------------

@functools.partial(jax.jit, static_argnames=("stride",))
def preact_block_forward(x_nchw, params, *, stride):
    N, cin, H, W = x_nchw.shape
    planes = params["w1"].shape[0]
    has_sc = "wsc" in params

    Ho = (H - 1) // stride + 1
    Wo = (W - 1) // stride + 1
    cin_p = _round_up(cin, 128)
    cout_p = _round_up(planes, 128)

    # NCHW -> NHWC, pad channels lane-dense (no spatial pad: halo is in-kernel).
    x = jnp.transpose(x_nchw, (0, 2, 3, 1)).astype(jnp.float32)
    x = jnp.pad(x, ((0, 0), (0, 0), (0, 0), (0, cin_p - cin)))

    s1, b1 = _fold_bn(params["g1"], params["b1"], params["m1"], params["v1"], cin_p)
    s2, b2 = _fold_bn(params["g2"], params["b2"], params["m2"], params["v2"], cout_p)
    w1m = _conv_matrix(params["w1"], cin_p, cout_p)
    w2m = _conv_matrix(params["w2"], cout_p, cout_p)

    rep = lambda shape: pl.BlockSpec(shape, lambda n: (0,) * len(shape))

    in_specs = [
        pl.BlockSpec((1, H, W, cin_p), lambda n: (n, 0, 0, 0)),   # x tile
        rep((1, cin_p)), rep((1, cin_p)),                         # bn1 scale / bias
        rep((9 * cin_p, cout_p)),                                 # w1 (bf16)
        rep((1, cout_p)), rep((1, cout_p)),                       # bn2 scale / bias
        rep((9 * cout_p, cout_p)),                                # w2 (bf16)
    ]
    inputs = [x, s1, b1, w1m, s2, b2, w2m]
    if has_sc:
        in_specs.append(rep((cin_p, cout_p)))                     # 1x1 shortcut weight
        inputs.append(_conv_matrix(params["wsc"], cin_p, cout_p))

    conv_flops = 2 * N * Ho * Wo * 9 * (cin_p * cout_p + cout_p * cout_p)
    if has_sc:
        conv_flops += 2 * N * Ho * Wo * cin_p * cout_p
    bytes_acc = (x.size * 4 + N * Ho * Wo * cout_p * 4
                 + 9 * cin_p * cout_p * 2 + 9 * cout_p * cout_p * 2
                 + (cin_p * cout_p * 2 if has_sc else 0))
    cost = pl.CostEstimate(flops=conv_flops, transcendentals=0,
                           bytes_accessed=bytes_acc)

    out = pl.pallas_call(
        _make_fused_kernel(stride, H, W, Ho, Wo, cin_p, cout_p, has_sc),
        out_shape=jax.ShapeDtypeStruct((N, Ho * Wo, cout_p), jnp.float32),
        grid_spec=pltpu.PrefetchScalarGridSpec(
            num_scalar_prefetch=0, grid=(N,),
            in_specs=in_specs,
            out_specs=pl.BlockSpec((1, Ho * Wo, cout_p), lambda n: (n, 0, 0)),
            scratch_shapes=[pltpu.VMEM((H + 2, W + 2, cin_p), jnp.float32),
                            pltpu.VMEM((Ho + 2, Wo + 2, cout_p), jnp.float32)]),
        compiler_params=pltpu.CompilerParams(
            dimension_semantics=("parallel",),
            # 48 MiB: fits v7x's 64 MiB physical VMEM; plenty on v5e/v6e.
            vmem_limit_bytes=48 * 1024 * 1024),
        cost_estimate=cost,
    )(*inputs)

    out = out.reshape(N, Ho, Wo, cout_p)[:, :, :, :planes]
    return jnp.transpose(out, (0, 3, 1, 2))                      # back to NCHW


# ---------------- pure-JAX reference (for correctness check) ----------------

def reference_forward(x, params, stride):
    def bn(t, g, b, m, v):
        return ((t - m[None, :, None, None])
                / jnp.sqrt(v[None, :, None, None] + _EPS)
                * g[None, :, None, None] + b[None, :, None, None])

    dn = ("NCHW", "OIHW", "NCHW")
    o1 = jax.nn.relu(bn(x, params["g1"], params["b1"], params["m1"], params["v1"]))
    if "wsc" in params:
        shortcut = jax.lax.conv_general_dilated(
            o1, params["wsc"], (stride, stride), "VALID", dimension_numbers=dn)
    else:
        shortcut = x
    c1 = jax.lax.conv_general_dilated(
        o1, params["w1"], (stride, stride), ((1, 1), (1, 1)), dimension_numbers=dn)
    o2 = jax.nn.relu(bn(c1, params["g2"], params["b2"], params["m2"], params["v2"]))
    c2 = jax.lax.conv_general_dilated(
        o2, params["w2"], (1, 1), ((1, 1), (1, 1)), dimension_numbers=dn)
    return c2 + shortcut


if __name__ == "__main__":
    key = jax.random.PRNGKey(0)
    N, H, W = 2, 16, 16

    # (in_planes, planes, stride): a strided block with the 1x1 shortcut conv,
    # and an identity-shortcut block (the module's default stride=1 path).
    configs = [(4, 8, 2), (8, 8, 1)]

    for in_planes, planes, stride in configs:
        kx, kp, key = jax.random.split(key, 3)
        x = jax.random.normal(kx, (N, in_planes, H, W), jnp.float32)
        params = init_params(kp, in_planes, planes, stride)

        out = jax.block_until_ready(preact_block_forward(x, params, stride=stride))
        ref = jax.block_until_ready(reference_forward(x, params, stride))

        assert out.shape == ref.shape == (N, planes, H // stride, W // stride), out.shape
        # bf16 MXU operands vs f32 reference -> loosened tolerance.
        assert jnp.allclose(out, ref, atol=5e-2, rtol=5e-2), \
            float(jnp.max(jnp.abs(out - ref)))

    print("KERNEL_OK")
</pallas_src>

<mosaic_0001>
module attributes {stable_mosaic.version = 11 : i64} {
  func.func @kernel(%arg0: i32, %arg1: memref<1x16x16x128xf32, #tpu.memory_space<vmem>>, %arg2: memref<1x128xf32, #tpu.memory_space<vmem>>, %arg3: memref<1x128xf32, #tpu.memory_space<vmem>>, %arg4: memref<1152x128xbf16, #tpu.memory_space<vmem>>, %arg5: memref<1x128xf32, #tpu.memory_space<vmem>>, %arg6: memref<1x128xf32, #tpu.memory_space<vmem>>, %arg7: memref<1152x128xbf16, #tpu.memory_space<vmem>>, %arg8: memref<128x128xbf16, #tpu.memory_space<vmem>>, %arg9: memref<1x64x128xf32, #tpu.memory_space<vmem>>, %arg10: memref<18x18x128xf32, #tpu.memory_space<vmem>>, %arg11: memref<10x10x128xf32, #tpu.memory_space<vmem>>) attributes {dimension_semantics = [#tpu.dimension_semantics<parallel>], iteration_bounds = array<i64: 2>, scalar_prefetch = 0 : i64, scratch_operands = 2 : i64, tpu.core_type = #tpu.core_type<tc>, window_params = [{transform_indices = @transform_0, window_bounds = array<i64: 1, 16, 16, 128>}, {pipeline_mode = #tpu.pipeline_mode<synchronous>, transform_indices = @transform_1, window_bounds = array<i64: 1, 128>}, {pipeline_mode = #tpu.pipeline_mode<synchronous>, transform_indices = @transform_2, window_bounds = array<i64: 1, 128>}, {pipeline_mode = #tpu.pipeline_mode<synchronous>, transform_indices = @transform_3, window_bounds = array<i64: 1152, 128>}, {pipeline_mode = #tpu.pipeline_mode<synchronous>, transform_indices = @transform_4, window_bounds = array<i64: 1, 128>}, {pipeline_mode = #tpu.pipeline_mode<synchronous>, transform_indices = @transform_5, window_bounds = array<i64: 1, 128>}, {pipeline_mode = #tpu.pipeline_mode<synchronous>, transform_indices = @transform_6, window_bounds = array<i64: 1152, 128>}, {pipeline_mode = #tpu.pipeline_mode<synchronous>, transform_indices = @transform_7, window_bounds = array<i64: 128, 128>}, {transform_indices = @transform_8, window_bounds = array<i64: 1, 64, 128>}]} {
    %cst = arith.constant 0.000000e+00 : f32
    %0 = vector.broadcast %cst : f32 to vector<1x18x128xf32>
    %c0 = arith.constant 0 : index
    %c0_0 = arith.constant 0 : index
    %c0_1 = arith.constant 0 : index
    %1 = vector.load %arg10[%c0, %c0_0, %c0_1] : memref<18x18x128xf32, #tpu.memory_space<vmem>>, vector<1x18x128xf32>
    tpu.vector_store %arg10[%c0, %c0_0, %c0_1], %0 {strides = array<i32>} : memref<18x18x128xf32, #tpu.memory_space<vmem>>, vector<1x18x128xf32>,
    %cst_2 = arith.constant 0.000000e+00 : f32
    %2 = vector.broadcast %cst_2 : f32 to vector<1x18x128xf32>
    %c17 = arith.constant 17 : index
    %c0_3 = arith.constant 0 : index
    %c0_4 = arith.constant 0 : index
    %3 = vector.load %arg10[%c17, %c0_3, %c0_4] : memref<18x18x128xf32, #tpu.memory_space<vmem>>, vector<1x18x128xf32>
    tpu.vector_store %arg10[%c17, %c0_3, %c0_4], %2 {strides = array<i32>} : memref<18x18x128xf32, #tpu.memory_space<vmem>>, vector<1x18x128xf32>,
    %cst_5 = arith.constant 0.000000e+00 : f32
    %4 = vector.broadcast %cst_5 : f32 to vector<18x1x128xf32>
    %c0_6 = arith.constant 0 : index
    %c0_7 = arith.constant 0 : index
    %c0_8 = arith.constant 0 : index
    %5 = vector.load %arg10[%c0_6, %c0_7, %c0_8] : memref<18x18x128xf32, #tpu.memory_space<vmem>>, vector<18x1x128xf32>
    tpu.vector_store %arg10[%c0_6, %c0_7, %c0_8], %4 {strides = array<i32>} : memref<18x18x128xf32, #tpu.memory_space<vmem>>, vector<18x1x128xf32>,
    %cst_9 = arith.constant 0.000000e+00 : f32
    %6 = vector.broadcast %cst_9 : f32 to vector<18x1x128xf32>
    %c0_10 = arith.constant 0 : index
    %c17_11 = arith.constant 17 : index
    %c0_12 = arith.constant 0 : index
    %7 = vector.load %arg10[%c0_10, %c17_11, %c0_12] : memref<18x18x128xf32, #tpu.memory_space<vmem>>, vector<18x1x128xf32>
    tpu.vector_store %arg10[%c0_10, %c17_11, %c0_12], %6 {strides = array<i32>} : memref<18x18x128xf32, #tpu.memory_space<vmem>>, vector<18x1x128xf32>,
    %c0_13 = arith.constant 0 : index
    %c0_14 = arith.constant 0 : index
    %c0_15 = arith.constant 0 : index
    %c0_16 = arith.constant 0 : index
    %8 = vector.load %arg1[%c0_13, %c0_14, %c0_15, %c0_16] : memref<1x16x16x128xf32, #tpu.memory_space<vmem>>, vector<1x16x16x128xf32>
    %9 = vector.shape_cast %8 : vector<1x16x16x128xf32> to vector<16x16x128xf32>
    %c0_17 = arith.constant 0 : index
    %c0_18 = arith.constant 0 : index
    %10 = vector.load %arg2[%c0_17, %c0_18] : memref<1x128xf32, #tpu.memory_space<vmem>>, vector<1x128xf32>
    %11 = vector.shape_cast %10 : vector<1x128xf32> to vector<1x1x128xf32>
    %12 = vector.broadcast %11 : vector<1x1x128xf32> to vector<16x16x128xf32>
    %13 = arith.mulf %9, %12 : vector<16x16x128xf32>
    %c0_19 = arith.constant 0 : index
    %c0_20 = arith.constant 0 : index
    %14 = vector.load %arg3[%c0_19, %c0_20] : memref<1x128xf32, #tpu.memory_space<vmem>>, vector<1x128xf32>
    %15 = vector.shape_cast %14 : vector<1x128xf32> to vector<1x1x128xf32>
    %16 = vector.broadcast %15 : vector<1x1x128xf32> to vector<16x16x128xf32>
    %17 = arith.addf %13, %16 : vector<16x16x128xf32>
    %cst_21 = arith.constant 0.000000e+00 : f32
    %18 = vector.broadcast %cst_21 : f32 to vector<16x16x128xf32>
    %19 = arith.maximumf %17, %18 : vector<16x16x128xf32>
    %c1 = arith.constant 1 : index
    %c1_22 = arith.constant 1 : index
    %c0_23 = arith.constant 0 : index
    %20 = vector.load %arg10[%c1, %c1_22, %c0_23] : memref<18x18x128xf32, #tpu.memory_space<vmem>>, vector<16x16x128xf32>
    tpu.vector_store %arg10[%c1, %c1_22, %c0_23], %19 {strides = array<i32>} : memref<18x18x128xf32, #tpu.memory_space<vmem>>, vector<16x16x128xf32>,
    %c0_24 = arith.constant 0 : index
    %c0_25 = arith.constant 0 : index
    %c0_26 = arith.constant 0 : index
    %21 = tpu.strided_load %arg10[%c0_24, %c0_25, %c0_26] {strides = array<i32: 2, 2, 1>} : memref<18x18x128xf32, #tpu.memory_space<vmem>>, vector<8x8x128xf32>
    %22 = vector.shape_cast %21 : vector<8x8x128xf32> to vector<64x128xf32>
    %23 = arith.truncf %22 : vector<64x128xf32> to vector<64x128xbf16>
    %c0_27 = arith.constant 0 : index
    %c0_28 = arith.constant 0 : index
    %24 = vector.load %arg4[%c0_27, %c0_28] : memref<1152x128xbf16, #tpu.memory_space<vmem>>, vector<128x128xbf16>
    %cst_29 = arith.constant dense<0.000000e+00> : vector<64x128xf32>
    %25 = tpu.matmul %23, %24, %cst_29 {dimension_numbers = #tpu.dot_dimension_numbers<[1], [0], [0], [1], [0, 0, 1, 1], [], []>} : vector<64x128xbf16>, vector<128x128xbf16>, vector<64x128xf32> -> vector<64x128xf32>
    %c0_30 = arith.constant 0 : index
    %c1_31 = arith.constant 1 : index
    %c0_32 = arith.constant 0 : index
    %26 = tpu.strided_load %arg10[%c0_30, %c1_31, %c0_32] {strides = array<i32: 2, 2, 1>} : memref<18x18x128xf32, #tpu.memory_space<vmem>>, vector<8x8x128xf32>
    %27 = vector.shape_cast %26 : vector<8x8x128xf32> to vector<64x128xf32>
    %28 = arith.truncf %27 : vector<64x128xf32> to vector<64x128xbf16>
    %c128 = arith.constant 128 : index
    %c0_33 = arith.constant 0 : index
    %29 = vector.load %arg4[%c128, %c0_33] : memref<1152x128xbf16, #tpu.memory_space<vmem>>, vector<128x128xbf16>
    %cst_34 = arith.constant dense<0.000000e+00> : vector<64x128xf32>
    %30 = tpu.matmul %28, %29, %cst_34 {dimension_numbers = #tpu.dot_dimension_numbers<[1], [0], [0], [1], [0, 0, 1, 1], [], []>} : vector<64x128xbf16>, vector<128x128xbf16>, vector<64x128xf32> -> vector<64x128xf32>
    %31 = arith.addf %25, %30 : vector<64x128xf32>
    %c0_35 = arith.constant 0 : index
    %c2 = arith.constant 2 : index
    %c0_36 = arith.constant 0 : index
    %32 = tpu.strided_load %arg10[%c0_35, %c2, %c0_36] {strides = array<i32: 2, 2, 1>} : memref<18x18x128xf32, #tpu.memory_space<vmem>>, vector<8x8x128xf32>
    %33 = vector.shape_cast %32 : vector<8x8x128xf32> to vector<64x128xf32>
    %34 = arith.truncf %33 : vector<64x128xf32> to vector<64x128xbf16>
    %c256 = arith.constant 256 : index
    %c0_37 = arith.constant 0 : index
    %35 = vector.load %arg4[%c256, %c0_37] : memref<1152x128xbf16, #tpu.memory_space<vmem>>, vector<128x128xbf16>
    %cst_38 = arith.constant dense<0.000000e+00> : vector<64x128xf32>
    %36 = tpu.matmul %34, %35, %cst_38 {dimension_numbers = #tpu.dot_dimension_numbers<[1], [0], [0], [1], [0, 0, 1, 1], [], []>} : vector<64x128xbf16>, vector<128x128xbf16>, vector<64x128xf32> -> vector<64x128xf32>
    %37 = arith.addf %31, %36 : vector<64x128xf32>
    %c1_39 = arith.constant 1 : index
    %c0_40 = arith.constant 0 : index
    %c0_41 = arith.constant 0 : index
    %38 = tpu.strided_load %arg10[%c1_39, %c0_40, %c0_41] {strides = array<i32: 2, 2, 1>} : memref<18x18x128xf32, #tpu.memory_space<vmem>>, vector<8x8x128xf32>
    %39 = vector.shape_cast %38 : vector<8x8x128xf32> to vector<64x128xf32>
    %40 = arith.truncf %39 : vector<64x128xf32> to vector<64x128xbf16>
    %c384 = arith.constant 384 : index
    %c0_42 = arith.constant 0 : index
    %41 = vector.load %arg4[%c384, %c0_42] : memref<1152x128xbf16, #tpu.memory_space<vmem>>, vector<128x128xbf16>
    %cst_43 = arith.constant dense<0.000000e+00> : vector<64x128xf32>
    %42 = tpu.matmul %40, %41, %cst_43 {dimension_numbers = #tpu.dot_dimension_numbers<[1], [0], [0], [1], [0, 0, 1, 1], [], []>} : vector<64x128xbf16>, vector<128x128xbf16>, vector<64x128xf32> -> vector<64x128xf32>
    %43 = arith.addf %37, %42 : vector<64x128xf32>
    %c1_44 = arith.constant 1 : index
    %c1_45 = arith.constant 1 : index
    %c0_46 = arith.constant 0 : index
    %44 = tpu.strided_load %arg10[%c1_44, %c1_45, %c0_46] {strides = array<i32: 2, 2, 1>} : memref<18x18x128xf32, #tpu.memory_space<vmem>>, vector<8x8x128xf32>
    %45 = vector.shape_cast %44 : vector<8x8x128xf32> to vector<64x128xf32>
    %46 = arith.truncf %45 : vector<64x128xf32> to vector<64x128xbf16>
    %c512 = arith.constant 512 : index
    %c0_47 = arith.constant 0 : index
    %47 = vector.load %arg4[%c512, %c0_47] : memref<1152x128xbf16, #tpu.memory_space<vmem>>, vector<128x128xbf16>
    %cst_48 = arith.constant dense<0.000000e+00> : vector<64x128xf32>
    %48 = tpu.matmul %46, %47, %cst_48 {dimension_numbers = #tpu.dot_dimension_numbers<[1], [0], [0], [1], [0, 0, 1, 1], [], []>} : vector<64x128xbf16>, vector<128x128xbf16>, vector<64x128xf32> -> vector<64x128xf32>
    %49 = arith.addf %43, %48 : vector<64x128xf32>
    %c1_49 = arith.constant 1 : index
    %c2_50 = arith.constant 2 : index
    %c0_51 = arith.constant 0 : index
    %50 = tpu.strided_load %arg10[%c1_49, %c2_50, %c0_51] {strides = array<i32: 2, 2, 1>} : memref<18x18x128xf32, #tpu.memory_space<vmem>>, vector<8x8x128xf32>
    %51 = vector.shape_cast %50 : vector<8x8x128xf32> to vector<64x128xf32>
    %52 = arith.truncf %51 : vector<64x128xf32> to vector<64x128xbf16>
    %c640 = arith.constant 640 : index
    %c0_52 = arith.constant 0 : index
    %53 = vector.load %arg4[%c640, %c0_52] : memref<1152x128xbf16, #tpu.memory_space<vmem>>, vector<128x128xbf16>
    %cst_53 = arith.constant dense<0.000000e+00> : vector<64x128xf32>
    %54 = tpu.matmul %52, %53, %cst_53 {dimension_numbers = #tpu.dot_dimension_numbers<[1], [0], [0], [1], [0, 0, 1, 1], [], []>} : vector<64x128xbf16>, vector<128x128xbf16>, vector<64x128xf32> -> vector<64x128xf32>
    %55 = arith.addf %49, %54 : vector<64x128xf32>
    %c2_54 = arith.constant 2 : index
    %c0_55 = arith.constant 0 : index
    %c0_56 = arith.constant 0 : index
    %56 = tpu.strided_load %arg10[%c2_54, %c0_55, %c0_56] {strides = array<i32: 2, 2, 1>} : memref<18x18x128xf32, #tpu.memory_space<vmem>>, vector<8x8x128xf32>
    %57 = vector.shape_cast %56 : vector<8x8x128xf32> to vector<64x128xf32>
    %58 = arith.truncf %57 : vector<64x128xf32> to vector<64x128xbf16>
    %c768 = arith.constant 768 : index
    %c0_57 = arith.constant 0 : index
    %59 = vector.load %arg4[%c768, %c0_57] : memref<1152x128xbf16, #tpu.memory_space<vmem>>, vector<128x128xbf16>
    %cst_58 = arith.constant dense<0.000000e+00> : vector<64x128xf32>
    %60 = tpu.matmul %58, %59, %cst_58 {dimension_numbers = #tpu.dot_dimension_numbers<[1], [0], [0], [1], [0, 0, 1, 1], [], []>} : vector<64x128xbf16>, vector<128x128xbf16>, vector<64x128xf32> -> vector<64x128xf32>
    %61 = arith.addf %55, %60 : vector<64x128xf32>
    %c2_59 = arith.constant 2 : index
    %c1_60 = arith.constant 1 : index
    %c0_61 = arith.constant 0 : index
    %62 = tpu.strided_load %arg10[%c2_59, %c1_60, %c0_61] {strides = array<i32: 2, 2, 1>} : memref<18x18x128xf32, #tpu.memory_space<vmem>>, vector<8x8x128xf32>
    %63 = vector.shape_cast %62 : vector<8x8x128xf32> to vector<64x128xf32>
    %64 = arith.truncf %63 : vector<64x128xf32> to vector<64x128xbf16>
    %c896 = arith.constant 896 : index
    %c0_62 = arith.constant 0 : index
    %65 = vector.load %arg4[%c896, %c0_62] : memref<1152x128xbf16, #tpu.memory_space<vmem>>, vector<128x128xbf16>
    %cst_63 = arith.constant dense<0.000000e+00> : vector<64x128xf32>
    %66 = tpu.matmul %64, %65, %cst_63 {dimension_numbers = #tpu.dot_dimension_numbers<[1], [0], [0], [1], [0, 0, 1, 1], [], []>} : vector<64x128xbf16>, vector<128x128xbf16>, vector<64x128xf32> -> vector<64x128xf32>
    %67 = arith.addf %61, %66 : vector<64x128xf32>
    %c2_64 = arith.constant 2 : index
    %c2_65 = arith.constant 2 : index
    %c0_66 = arith.constant 0 : index
    %68 = tpu.strided_load %arg10[%c2_64, %c2_65, %c0_66] {strides = array<i32: 2, 2, 1>} : memref<18x18x128xf32, #tpu.memory_space<vmem>>, vector<8x8x128xf32>
    %69 = vector.shape_cast %68 : vector<8x8x128xf32> to vector<64x128xf32>
    %70 = arith.truncf %69 : vector<64x128xf32> to vector<64x128xbf16>
    %c1024 = arith.constant 1024 : index
    %c0_67 = arith.constant 0 : index
    %71 = vector.load %arg4[%c1024, %c0_67] : memref<1152x128xbf16, #tpu.memory_space<vmem>>, vector<128x128xbf16>
    %cst_68 = arith.constant dense<0.000000e+00> : vector<64x128xf32>
    %72 = tpu.matmul %70, %71, %cst_68 {dimension_numbers = #tpu.dot_dimension_numbers<[1], [0], [0], [1], [0, 0, 1, 1], [], []>} : vector<64x128xbf16>, vector<128x128xbf16>, vector<64x128xf32> -> vector<64x128xf32>
    %73 = arith.addf %67, %72 : vector<64x128xf32>
    %c0_69 = arith.constant 0 : index
    %c0_70 = arith.constant 0 : index
    %74 = vector.load %arg5[%c0_69, %c0_70] : memref<1x128xf32, #tpu.memory_space<vmem>>, vector<1x128xf32>
    %75 = vector.broadcast %74 : vector<1x128xf32> to vector<64x128xf32>
    %76 = arith.mulf %73, %75 : vector<64x128xf32>
    %c0_71 = arith.constant 0 : index
    %c0_72 = arith.constant 0 : index
    %77 = vector.load %arg6[%c0_71, %c0_72] : memref<1x128xf32, #tpu.memory_space<vmem>>, vector<1x128xf32>
    %78 = vector.broadcast %77 : vector<1x128xf32> to vector<64x128xf32>
    %79 = arith.addf %76, %78 : vector<64x128xf32>
    %cst_73 = arith.constant 0.000000e+00 : f32
    %80 = vector.broadcast %cst_73 : f32 to vector<64x128xf32>
    %81 = arith.maximumf %79, %80 : vector<64x128xf32>
    %cst_74 = arith.constant 0.000000e+00 : f32
    %82 = vector.broadcast %cst_74 : f32 to vector<1x10x128xf32>
    %c0_75 = arith.constant 0 : index
    %c0_76 = arith.constant 0 : index
    %c0_77 = arith.constant 0 : index
    %83 = vector.load %arg11[%c0_75, %c0_76, %c0_77] : memref<10x10x128xf32, #tpu.memory_space<vmem>>, vector<1x10x128xf32>
    tpu.vector_store %arg11[%c0_75, %c0_76, %c0_77], %82 {strides = array<i32>} : memref<10x10x128xf32, #tpu.memory_space<vmem>>, vector<1x10x128xf32>,
    %cst_78 = arith.constant 0.000000e+00 : f32
    %84 = vector.broadcast %cst_78 : f32 to vector<1x10x128xf32>
    %c9 = arith.constant 9 : index
    %c0_79 = arith.constant 0 : index
    %c0_80 = arith.constant 0 : index
    %85 = vector.load %arg11[%c9, %c0_79, %c0_80] : memref<10x10x128xf32, #tpu.memory_space<vmem>>, vector<1x10x128xf32>
    tpu.vector_store %arg11[%c9, %c0_79, %c0_80], %84 {strides = array<i32>} : memref<10x10x128xf32, #tpu.memory_space<vmem>>, vector<1x10x128xf32>,
    %cst_81 = arith.constant 0.000000e+00 : f32
    %86 = vector.broadcast %cst_81 : f32 to vector<10x1x128xf32>
    %c0_82 = arith.constant 0 : index
    %c0_83 = arith.constant 0 : index
    %c0_84 = arith.constant 0 : index
    %87 = vector.load %arg11[%c0_82, %c0_83, %c0_84] : memref<10x10x128xf32, #tpu.memory_space<vmem>>, vector<10x1x128xf32>
    tpu.vector_store %arg11[%c0_82, %c0_83, %c0_84], %86 {strides = array<i32>} : memref<10x10x128xf32, #tpu.memory_space<vmem>>, vector<10x1x128xf32>,
    %cst_85 = arith.constant 0.000000e+00 : f32
    %88 = vector.broadcast %cst_85 : f32 to vector<10x1x128xf32>
    %c0_86 = arith.constant 0 : index
    %c9_87 = arith.constant 9 : index
    %c0_88 = arith.constant 0 : index
    %89 = vector.load %arg11[%c0_86, %c9_87, %c0_88] : memref<10x10x128xf32, #tpu.memory_space<vmem>>, vector<10x1x128xf32>
    tpu.vector_store %arg11[%c0_86, %c9_87, %c0_88], %88 {strides = array<i32>} : memref<10x10x128xf32, #tpu.memory_space<vmem>>, vector<10x1x128xf32>,
    %90 = vector.shape_cast %81 : vector<64x128xf32> to vector<8x8x128xf32>
    %c1_89 = arith.constant 1 : index
    %c1_90 = arith.constant 1 : index
    %c0_91 = arith.constant 0 : index
    %91 = vector.load %arg11[%c1_89, %c1_90, %c0_91] : memref<10x10x128xf32, #tpu.memory_space<vmem>>, vector<8x8x128xf32>
    tpu.vector_store %arg11[%c1_89, %c1_90, %c0_91], %90 {strides = array<i32>} : memref<10x10x128xf32, #tpu.memory_space<vmem>>, vector<8x8x128xf32>,
    %c1_92 = arith.constant 1 : index
    %c1_93 = arith.constant 1 : index
    %c0_94 = arith.constant 0 : index
    %92 = tpu.strided_load %arg10[%c1_92, %c1_93, %c0_94] {strides = array<i32: 2, 2, 1>} : memref<18x18x128xf32, #tpu.memory_space<vmem>>, vector<8x8x128xf32>
    %93 = vector.shape_cast %92 : vector<8x8x128xf32> to vector<64x128xf32>
    %94 = arith.truncf %93 : vector<64x128xf32> to vector<64x128xbf16>
    %c0_95 = arith.constant 0 : index
    %c0_96 = arith.constant 0 : index
    %95 = vector.load %arg8[%c0_95, %c0_96] : memref<128x128xbf16, #tpu.memory_space<vmem>>, vector<128x128xbf16>
    %cst_97 = arith.constant dense<0.000000e+00> : vector<64x128xf32>
    %96 = tpu.matmul %94, %95, %cst_97 {dimension_numbers = #tpu.dot_dimension_numbers<[1], [0], [0], [1], [0, 0, 1, 1], [], []>} : vector<64x128xbf16>, vector<128x128xbf16>, vector<64x128xf32> -> vector<64x128xf32>
    %c0_98 = arith.constant 0 : index
    %c0_99 = arith.constant 0 : index
    %c0_100 = arith.constant 0 : index
    %97 = vector.load %arg11[%c0_98, %c0_99, %c0_100] : memref<10x10x128xf32, #tpu.memory_space<vmem>>, vector<8x8x128xf32>
    %98 = vector.shape_cast %97 : vector<8x8x128xf32> to vector<64x128xf32>
    %99 = arith.truncf %98 : vector<64x128xf32> to vector<64x128xbf16>
    %c0_101 = arith.constant 0 : index
    %c0_102 = arith.constant 0 : index
    %100 = vector.load %arg7[%c0_101, %c0_102] : memref<1152x128xbf16, #tpu.memory_space<vmem>>, vector<128x128xbf16>
    %cst_103 = arith.constant dense<0.000000e+00> : vector<64x128xf32>
    %101 = tpu.matmul %99, %100, %cst_103 {dimension_numbers = #tpu.dot_dimension_numbers<[1], [0], [0], [1], [0, 0, 1, 1], [], []>} : vector<64x128xbf16>, vector<128x128xbf16>, vector<64x128xf32> -> vector<64x128xf32>
    %102 = arith.addf %96, %101 : vector<64x128xf32>
    %c0_104 = arith.constant 0 : index
    %c1_105 = arith.constant 1 : index
    %c0_106 = arith.constant 0 : index
    %103 = vector.load %arg11[%c0_104, %c1_105, %c0_106] : memref<10x10x128xf32, #tpu.memory_space<vmem>>, vector<8x8x128xf32>
    %104 = vector.shape_cast %103 : vector<8x8x128xf32> to vector<64x128xf32>
    %105 = arith.truncf %104 : vector<64x128xf32> to vector<64x128xbf16>
    %c128_107 = arith.constant 128 : index
    %c0_108 = arith.constant 0 : index
    %106 = vector.load %arg7[%c128_107, %c0_108] : memref<1152x128xbf16, #tpu.memory_space<vmem>>, vector<128x128xbf16>
    %cst_109 = arith.constant dense<0.000000e+00> : vector<64x128xf32>
    %107 = tpu.matmul %105, %106, %cst_109 {dimension_numbers = #tpu.dot_dimension_numbers<[1], [0], [0], [1], [0, 0, 1, 1], [], []>} : vector<64x128xbf16>, vector<128x128xbf16>, vector<64x128xf32> -> vector<64x128xf32>
    %108 = arith.addf %102, %107 : vector<64x128xf32>
    %c0_110 = arith.constant 0 : index
    %c2_111 = arith.constant 2 : index
    %c0_112 = arith.constant 0 : index
    %109 = vector.load %arg11[%c0_110, %c2_111, %c0_112] : memref<10x10x128xf32, #tpu.memory_space<vmem>>, vector<8x8x128xf32>
    %110 = vector.shape_cast %109 : vector<8x8x128xf32> to vector<64x128xf32>
    %111 = arith.truncf %110 : vector<64x128xf32> to vector<64x128xbf16>
    %c256_113 = arith.constant 256 : index
    %c0_114 = arith.constant 0 : index
    %112 = vector.load %arg7[%c256_113, %c0_114] : memref<1152x128xbf16, #tpu.memory_space<vmem>>, vector<128x128xbf16>
    %cst_115 = arith.constant dense<0.000000e+00> : vector<64x128xf32>
    %113 = tpu.matmul %111, %112, %cst_115 {dimension_numbers = #tpu.dot_dimension_numbers<[1], [0], [0], [1], [0, 0, 1, 1], [], []>} : vector<64x128xbf16>, vector<128x128xbf16>, vector<64x128xf32> -> vector<64x128xf32>
    %114 = arith.addf %108, %113 : vector<64x128xf32>
    %c1_116 = arith.constant 1 : index
    %c0_117 = arith.constant 0 : index
    %c0_118 = arith.constant 0 : index
    %115 = vector.load %arg11[%c1_116, %c0_117, %c0_118] : memref<10x10x128xf32, #tpu.memory_space<vmem>>, vector<8x8x128xf32>
    %116 = vector.shape_cast %115 : vector<8x8x128xf32> to vector<64x128xf32>
    %117 = arith.truncf %116 : vector<64x128xf32> to vector<64x128xbf16>
    %c384_119 = arith.constant 384 : index
    %c0_120 = arith.constant 0 : index
    %118 = vector.load %arg7[%c384_119, %c0_120] : memref<1152x128xbf16, #tpu.memory_space<vmem>>, vector<128x128xbf16>
    %cst_121 = arith.constant dense<0.000000e+00> : vector<64x128xf32>
    %119 = tpu.matmul %117, %118, %cst_121 {dimension_numbers = #tpu.dot_dimension_numbers<[1], [0], [0], [1], [0, 0, 1, 1], [], []>} : vector<64x128xbf16>, vector<128x128xbf16>, vector<64x128xf32> -> vector<64x128xf32>
    %120 = arith.addf %114, %119 : vector<64x128xf32>
    %c1_122 = arith.constant 1 : index
    %c1_123 = arith.constant 1 : index
    %c0_124 = arith.constant 0 : index
    %121 = vector.load %arg11[%c1_122, %c1_123, %c0_124] : memref<10x10x128xf32, #tpu.memory_space<vmem>>, vector<8x8x128xf32>
    %122 = vector.shape_cast %121 : vector<8x8x128xf32> to vector<64x128xf32>
    %123 = arith.truncf %122 : vector<64x128xf32> to vector<64x128xbf16>
    %c512_125 = arith.constant 512 : index
    %c0_126 = arith.constant 0 : index
    %124 = vector.load %arg7[%c512_125, %c0_126] : memref<1152x128xbf16, #tpu.memory_space<vmem>>, vector<128x128xbf16>
    %cst_127 = arith.constant dense<0.000000e+00> : vector<64x128xf32>
    %125 = tpu.matmul %123, %124, %cst_127 {dimension_numbers = #tpu.dot_dimension_numbers<[1], [0], [0], [1], [0, 0, 1, 1], [], []>} : vector<64x128xbf16>, vector<128x128xbf16>, vector<64x128xf32> -> vector<64x128xf32>
    %126 = arith.addf %120, %125 : vector<64x128xf32>
    %c1_128 = arith.constant 1 : index
    %c2_129 = arith.constant 2 : index
    %c0_130 = arith.constant 0 : index
    %127 = vector.load %arg11[%c1_128, %c2_129, %c0_130] : memref<10x10x128xf32, #tpu.memory_space<vmem>>, vector<8x8x128xf32>
    %128 = vector.shape_cast %127 : vector<8x8x128xf32> to vector<64x128xf32>
    %129 = arith.truncf %128 : vector<64x128xf32> to vector<64x128xbf16>
    %c640_131 = arith.constant 640 : index
    %c0_132 = arith.constant 0 : index
    %130 = vector.load %arg7[%c640_131, %c0_132] : memref<1152x128xbf16, #tpu.memory_space<vmem>>, vector<128x128xbf16>
    %cst_133 = arith.constant dense<0.000000e+00> : vector<64x128xf32>
    %131 = tpu.matmul %129, %130, %cst_133 {dimension_numbers = #tpu.dot_dimension_numbers<[1], [0], [0], [1], [0, 0, 1, 1], [], []>} : vector<64x128xbf16>, vector<128x128xbf16>, vector<64x128xf32> -> vector<64x128xf32>
    %132 = arith.addf %126, %131 : vector<64x128xf32>
    %c2_134 = arith.constant 2 : index
    %c0_135 = arith.constant 0 : index
    %c0_136 = arith.constant 0 : index
    %133 = vector.load %arg11[%c2_134, %c0_135, %c0_136] : memref<10x10x128xf32, #tpu.memory_space<vmem>>, vector<8x8x128xf32>
    %134 = vector.shape_cast %133 : vector<8x8x128xf32> to vector<64x128xf32>
    %135 = arith.truncf %134 : vector<64x128xf32> to vector<64x128xbf16>
    %c768_137 = arith.constant 768 : index
    %c0_138 = arith.constant 0 : index
    %136 = vector.load %arg7[%c768_137, %c0_138] : memref<1152x128xbf16, #tpu.memory_space<vmem>>, vector<128x128xbf16>
    %cst_139 = arith.constant dense<0.000000e+00> : vector<64x128xf32>
    %137 = tpu.matmul %135, %136, %cst_139 {dimension_numbers = #tpu.dot_dimension_numbers<[1], [0], [0], [1], [0, 0, 1, 1], [], []>} : vector<64x128xbf16>, vector<128x128xbf16>, vector<64x128xf32> -> vector<64x128xf32>
    %138 = arith.addf %132, %137 : vector<64x128xf32>
    %c2_140 = arith.constant 2 : index
    %c1_141 = arith.constant 1 : index
    %c0_142 = arith.constant 0 : index
    %139 = vector.load %arg11[%c2_140, %c1_141, %c0_142] : memref<10x10x128xf32, #tpu.memory_space<vmem>>, vector<8x8x128xf32>
    %140 = vector.shape_cast %139 : vector<8x8x128xf32> to vector<64x128xf32>
    %141 = arith.truncf %140 : vector<64x128xf32> to vector<64x128xbf16>
    %c896_143 = arith.constant 896 : index
    %c0_144 = arith.constant 0 : index
    %142 = vector.load %arg7[%c896_143, %c0_144] : memref<1152x128xbf16, #tpu.memory_space<vmem>>, vector<128x128xbf16>
    %cst_145 = arith.constant dense<0.000000e+00> : vector<64x128xf32>
    %143 = tpu.matmul %141, %142, %cst_145 {dimension_numbers = #tpu.dot_dimension_numbers<[1], [0], [0], [1], [0, 0, 1, 1], [], []>} : vector<64x128xbf16>, vector<128x128xbf16>, vector<64x128xf32> -> vector<64x128xf32>
    %144 = arith.addf %138, %143 : vector<64x128xf32>
    %c2_146 = arith.constant 2 : index
    %c2_147 = arith.constant 2 : index
    %c0_148 = arith.constant 0 : index
    %145 = vector.load %arg11[%c2_146, %c2_147, %c0_148] : memref<10x10x128xf32, #tpu.memory_space<vmem>>, vector<8x8x128xf32>
    %146 = vector.shape_cast %145 : vector<8x8x128xf32> to vector<64x128xf32>
    %147 = arith.truncf %146 : vector<64x128xf32> to vector<64x128xbf16>
    %c1024_149 = arith.constant 1024 : index
    %c0_150 = arith.constant 0 : index
    %148 = vector.load %arg7[%c1024_149, %c0_150] : memref<1152x128xbf16, #tpu.memory_space<vmem>>, vector<128x128xbf16>
    %cst_151 = arith.constant dense<0.000000e+00> : vector<64x128xf32>
    %149 = tpu.matmul %147, %148, %cst_151 {dimension_numbers = #tpu.dot_dimension_numbers<[1], [0], [0], [1], [0, 0, 1, 1], [], []>} : vector<64x128xbf16>, vector<128x128xbf16>, vector<64x128xf32> -> vector<64x128xf32>
    %150 = arith.addf %144, %149 : vector<64x128xf32>
    %c0_152 = arith.constant 0 : index
    %c0_153 = arith.constant 0 : index
    %c0_154 = arith.constant 0 : index
    %151 = vector.load %arg9[%c0_152, %c0_153, %c0_154] : memref<1x64x128xf32, #tpu.memory_space<vmem>>, vector<1x64x128xf32>
    %152 = vector.shape_cast %151 : vector<1x64x128xf32> to vector<64x128xf32>
    %153 = vector.shape_cast %150 : vector<64x128xf32> to vector<1x64x128xf32>
    tpu.vector_store %arg9[%c0_152, %c0_153, %c0_154], %153 {strides = array<i32>} : memref<1x64x128xf32, #tpu.memory_space<vmem>>, vector<1x64x128xf32>,
    return
  }
  func.func @transform_0(%arg0: i32) -> (i32, i32, i32, i32) {
    %c0_i32 = arith.constant 0 : i32
    %c0_i32_0 = arith.constant 0 : i32
    %c0_i32_1 = arith.constant 0 : i32
    %c0_i32_2 = arith.constant 0 : i32
    return %arg0, %c0_i32, %c0_i32_0, %c0_i32_1 : i32, i32, i32, i32
  }
  func.func @transform_1(%arg0: i32) -> (i32, i32) {
    %c0_i32 = arith.constant 0 : i32
    %c0_i32_0 = arith.constant 0 : i32
    %c0_i32_1 = arith.constant 0 : i32
    return %c0_i32, %c0_i32_0 : i32, i32
  }
  func.func @transform_2(%arg0: i32) -> (i32, i32) {
    %c0_i32 = arith.constant 0 : i32
    %c0_i32_0 = arith.constant 0 : i32
    %c0_i32_1 = arith.constant 0 : i32
    return %c0_i32, %c0_i32_0 : i32, i32
  }
  func.func @transform_3(%arg0: i32) -> (i32, i32) {
    %c0_i32 = arith.constant 0 : i32
    %c0_i32_0 = arith.constant 0 : i32
    %c0_i32_1 = arith.constant 0 : i32
    return %c0_i32, %c0_i32_0 : i32, i32
  }
  func.func @transform_4(%arg0: i32) -> (i32, i32) {
    %c0_i32 = arith.constant 0 : i32
    %c0_i32_0 = arith.constant 0 : i32
    %c0_i32_1 = arith.constant 0 : i32
    return %c0_i32, %c0_i32_0 : i32, i32
  }
  func.func @transform_5(%arg0: i32) -> (i32, i32) {
    %c0_i32 = arith.constant 0 : i32
    %c0_i32_0 = arith.constant 0 : i32
    %c0_i32_1 = arith.constant 0 : i32
    return %c0_i32, %c0_i32_0 : i32, i32
  }
  func.func @transform_6(%arg0: i32) -> (i32, i32) {
    %c0_i32 = arith.constant 0 : i32
    %c0_i32_0 = arith.constant 0 : i32
    %c0_i32_1 = arith.constant 0 : i32
    return %c0_i32, %c0_i32_0 : i32, i32
  }
  func.func @transform_7(%arg0: i32) -> (i32, i32) {
    %c0_i32 = arith.constant 0 : i32
    %c0_i32_0 = arith.constant 0 : i32
    %c0_i32_1 = arith.constant 0 : i32
    return %c0_i32, %c0_i32_0 : i32, i32
  }
  func.func @transform_8(%arg0: i32) -> (i32, i32, i32) {
    %c0_i32 = arith.constant 0 : i32
    %c0_i32_0 = arith.constant 0 : i32
    %c0_i32_1 = arith.constant 0 : i32
    return %arg0, %c0_i32, %c0_i32_0 : i32, i32, i32
  }
}

</mosaic_0001>

<llo_original>
// kernel: preact_block_forward.1
$region0: #{preact_block_forward.1}
  #allocation0 [shape = 'u32[]', space=smem, size = 0x4, offset = 0x4, fixed_abs, tag = 'smem constant byte address 0x4 - core index']
  #allocation1 [shape = 'u32[144,128]{1,0:T(1,128)}', space=vmem, size = 0x12000, scoped, tag = 'internal scratch']
  #allocation2 [shape = 'f32[18,18,128]{2,1,0:T(8,128)}', space=vmem, size = 0x36000, scoped, tag = 'scratch operand']
  #allocation3 [shape = 'f32[10,10,128]{2,1,0:T(8,128)}', space=vmem, size = 0x14000, scoped, tag = 'scratch operand']
  %s0 = inlined_call_operand.vmem [shape: f32[2,16,16,128], index: 0, kind: input, shape index: {}]
  %s1 = inlined_call_operand.vmem [shape: f32[1,128], index: 1, kind: input, shape index: {}]
  %s2 = inlined_call_operand.vmem [shape: f32[1,128], index: 2, kind: input, shape index: {}]
  %s3 = inlined_call_operand.vmem [shape: bf16[1152,128], index: 3, kind: input, shape index: {}]
  %s4 = inlined_call_operand.vmem [shape: f32[1,128], index: 4, kind: input, shape index: {}]
  %s5 = inlined_call_operand.vmem [shape: f32[1,128], index: 5, kind: input, shape index: {}]
  %s6 = inlined_call_operand.vmem [shape: bf16[1152,128], index: 6, kind: input, shape index: {}]
  %s7 = inlined_call_operand.vmem [shape: bf16[128,128], index: 7, kind: input, shape index: {}]
  %s8 = inlined_call_operand.vmem [shape: f32[2,64,128], index: 8, kind: output, shape index: {}]
  %s9 = sld [smem:[#allocation0]]
  $region65: #{preact_block_forward.1} parent=0
    _
  %s11 = ssub.s32 1, %s9
  %s12 = scalar_select 0, %s11, %s9
  loop: start=0, step=1, limit=4
  $region2: #{preact_block_forward.1} parent=0 // loop_pre_header
    _
  $region3: #{preact_block_forward.1} parent=0 // loop_header
    %s14 = sphi 0, %s18
    %p15 = scmp.ge.s32.totalorder %s14, 4
    %s24 = sphi 0, %s26
    %s27 = sphi 0, %s24
    %s28 = sphi 0, %s27
    %s44 = sphi 0, %s28
    %s48 = sphi 0, %s48
    %s50 = sphi 0, %s48
    %s51 = sphi 0, %s50
    %s65 = sphi 0, %s51
    %s69 = sphi 0, %s69
    %s71 = sphi 0, %s69
    %s72 = sphi 0, %s71
    %s86 = sphi 0, %s72
    %s90 = sphi 0, %s90
    %s92 = sphi 0, %s90
    %s93 = sphi 0, %s92
    %s107 = sphi 0, %s93
    %s111 = sphi 0, %s111
    %s113 = sphi 0, %s111
    %s114 = sphi 0, %s113
    %s128 = sphi 0, %s114
    %s132 = sphi 0, %s132
    %s134 = sphi 0, %s132
    %s135 = sphi 0, %s134
    %s149 = sphi 0, %s135
    %s153 = sphi 0, %s153
    %s155 = sphi 0, %s153
    %s156 = sphi 0, %s155
    %s170 = sphi 0, %s156
    %s174 = sphi 0, %s174
    %s176 = sphi 0, %s174
    %s177 = sphi 0, %s176
    %s191 = sphi 0, %s177
    %s197 = sphi 0, %s199
    %s200 = sphi 0, %s197
    %s201 = sphi 0, %s200
    %s217 = sphi 0, %s201
  $region4: #{preact_block_forward.1} parent=0 // loop_header_branch
    %17 = sbr.rel (%p15) target = $region8
  $region5: #{preact_block_forward.1} parent=0 // loop_body
    %s19 = ssub.s32 %s14, 1
    %s20 = ssub.s32 %s14, 2
    %s21 = sadd.s32 %s14, 1
    %s22 = ssub.s32 %s14, %s21
    %p23 = scmp.eq.s32.totalorder %s22, 0
    %s25 = sadd.s32 %s24, 1
    %s26 = scalar_select %p23, %s24, %s25
    %p29 = pneg %p23
    %p30 = scmp.eq.s32.totalorder %s14, 1
    %p31 = por %p29, %p30
    %p32 = scmp.ne.s32.totalorder %s24, %s27
    %p33 = scmp.eq.s32.totalorder %s14, 0
    %p34 = por %p32, %p33
    %p35 = scmp.ne.s32.totalorder %s24, %s27
    %p36 = scmp.eq.s32.totalorder %s19, 1
    %p37 = por %p35, %p36
    %p38 = scmp.ne.s32.totalorder %s27, %s28
    %p39 = scmp.eq.s32.totalorder %s19, 0
    %p40 = por %p38, %p39
    %p41 = scmp.ne.s32.totalorder %s27, %s28
    %p42 = scmp.eq.s32.totalorder %s20, 1
    %p43 = por %p41, %p42
    %p45 = scmp.ne.s32.totalorder %s28, %s44
    %p46 = scmp.eq.s32.totalorder %s20, 0
    %p47 = por %p45, %p46
    %s49 = sadd.s32 %s48, 1
    %p52 = scmp.eq.s32.totalorder %s14, 1
    %p53 = scmp.ne.s32.totalorder %s48, %s50
    %p54 = scmp.eq.s32.totalorder %s14, 0
    %p55 = por %p53, %p54
    %p56 = scmp.ne.s32.totalorder %s48, %s50
    %p57 = scmp.eq.s32.totalorder %s19, 1
    %p58 = por %p56, %p57
    %p59 = scmp.ne.s32.totalorder %s50, %s51
    %p60 = scmp.eq.s32.totalorder %s19, 0
    %p61 = por %p59, %p60
    %p62 = scmp.ne.s32.totalorder %s50, %s51
    %p63 = scmp.eq.s32.totalorder %s20, 1
    %p64 = por %p62, %p63
    %p66 = scmp.ne.s32.totalorder %s51, %s65
    %p67 = scmp.eq.s32.totalorder %s20, 0
    %p68 = por %p66, %p67
    %s70 = sadd.s32 %s69, 1
    %p73 = scmp.eq.s32.totalorder %s14, 1
    %p74 = scmp.ne.s32.totalorder %s69, %s71
    %p75 = scmp.eq.s32.totalorder %s14, 0
    %p76 = por %p74, %p75
    %p77 = scmp.ne.s32.totalorder %s69, %s71
    %p78 = scmp.eq.s32.totalorder %s19, 1
    %p79 = por %p77, %p78
    %p80 = scmp.ne.s32.totalorder %s71, %s72
    %p81 = scmp.eq.s32.totalorder %s19, 0
    %p82 = por %p80, %p81
    %p83 = scmp.ne.s32.totalorder %s71, %s72
    %p84 = scmp.eq.s32.totalorder %s20, 1
    %p85 = por %p83, %p84
    %p87 = scmp.ne.s32.totalorder %s72, %s86
    %p88 = scmp.eq.s32.totalorder %s20, 0
    %p89 = por %p87, %p88
    %s91 = sadd.s32 %s90, 1
    %p94 = scmp.eq.s32.totalorder %s14, 1
    %p95 = scmp.ne.s32.totalorder %s90, %s92
    %p96 = scmp.eq.s32.totalorder %s14, 0
    %p97 = por %p95, %p96
    %p98 = scmp.ne.s32.totalorder %s90, %s92
    %p99 = scmp.eq.s32.totalorder %s19, 1
    %p100 = por %p98, %p99
    %p101 = scmp.ne.s32.totalorder %s92, %s93
    %p102 = scmp.eq.s32.totalorder %s19, 0
    %p103 = por %p101, %p102
    %p104 = scmp.ne.s32.totalorder %s92, %s93
    %p105 = scmp.eq.s32.totalorder %s20, 1
    %p106 = por %p104, %p105
    %p108 = scmp.ne.s32.totalorder %s93, %s107
    %p109 = scmp.eq.s32.totalorder %s20, 0
    %p110 = por %p108, %p109
    %s112 = sadd.s32 %s111, 1
    %p115 = scmp.eq.s32.totalorder %s14, 1
    %p116 = scmp.ne.s32.totalorder %s111, %s113
    %p117 = scmp.eq.s32.totalorder %s14, 0
    %p118 = por %p116, %p117
    %p119 = scmp.ne.s32.totalorder %s111, %s113
    %p120 = scmp.eq.s32.totalorder %s19, 1
    %p121 = por %p119, %p120
    %p122 = scmp.ne.s32.totalorder %s113, %s114
    %p123 = scmp.eq.s32.totalorder %s19, 0
    %p124 = por %p122, %p123
    %p125 = scmp.ne.s32.totalorder %s113, %s114
    %p126 = scmp.eq.s32.totalorder %s20, 1
    %p127 = por %p125, %p126
    %p129 = scmp.ne.s32.totalorder %s114, %s128
    %p130 = scmp.eq.s32.totalorder %s20, 0
    %p131 = por %p129, %p130
    %s133 = sadd.s32 %s132, 1
    %p136 = scmp.eq.s32.totalorder %s14, 1
    %p137 = scmp.ne.s32.totalorder %s132, %s134
    %p138 = scmp.eq.s32.totalorder %s14, 0
    %p139 = por %p137, %p138
    %p140 = scmp.ne.s32.totalorder %s132, %s134
    %p141 = scmp.eq.s32.totalorder %s19, 1
    %p142 = por %p140, %p141
    %p143 = scmp.ne.s32.totalorder %s134, %s135
    %p144 = scmp.eq.s32.totalorder %s19, 0
    %p145 = por %p143, %p144
    %p146 = scmp.ne.s32.totalorder %s134, %s135
    %p147 = scmp.eq.s32.totalorder %s20, 1
    %p148 = por %p146, %p147
    %p150 = scmp.ne.s32.totalorder %s135, %s149
    %p151 = scmp.eq.s32.totalorder %s20, 0
    %p152 = por %p150, %p151
    %s154 = sadd.s32 %s153, 1
    %p157 = scmp.eq.s32.totalorder %s14, 1
    %p158 = scmp.ne.s32.totalorder %s153, %s155
    %p159 = scmp.eq.s32.totalorder %s14, 0
    %p160 = por %p158, %p159
    %p161 = scmp.ne.s32.totalorder %s153, %s155
    %p162 = scmp.eq.s32.totalorder %s19, 1
    %p163 = por %p161, %p162
    %p164 = scmp.ne.s32.totalorder %s155, %s156
    %p165 = scmp.eq.s32.totalorder %s19, 0
    %p166 = por %p164, %p165
    %p167 = scmp.ne.s32.totalorder %s155, %s156
    %p168 = scmp.eq.s32.totalorder %s20, 1
    %p169 = por %p167, %p168
    %p171 = scmp.ne.s32.totalorder %s156, %s170
    %p172 = scmp.eq.s32.totalorder %s20, 0
    %p173 = por %p171, %p172
    %s175 = sadd.s32 %s174, 1
    %p178 = scmp.eq.s32.totalorder %s14, 1
    %p179 = scmp.ne.s32.totalorder %s174, %s176
    %p180 = scmp.eq.s32.totalorder %s14, 0
    %p181 = por %p179, %p180
    %p182 = scmp.ne.s32.totalorder %s174, %s176
    %p183 = scmp.eq.s32.totalorder %s19, 1
    %p184 = por %p182, %p183
    %p185 = scmp.ne.s32.totalorder %s176, %s177
    %p186 = scmp.eq.s32.totalorder %s19, 0
    %p187 = por %p185, %p186
    %p188 = scmp.ne.s32.totalorder %s176, %s177
    %p189 = scmp.eq.s32.totalorder %s20, 1
    %p190 = por %p188, %p189
    %p192 = scmp.ne.s32.totalorder %s177, %s191
    %p193 = scmp.eq.s32.totalorder %s20, 0
    %p194 = por %p192, %p193
    %s195 = ssub.s32 %s14, %s21
    %p196 = scmp.eq.s32.totalorder %s195, 0
    %s198 = sadd.s32 %s197, 1
    %s199 = scalar_select %p196, %s197, %s198
    %p202 = pneg %p196
    %p203 = scmp.eq.s32.totalorder %s14, 1
    %p204 = por %p202, %p203
    %p205 = scmp.ne.s32.totalorder %s197, %s200
    %p206 = scmp.eq.s32.totalorder %s14, 0
    %p207 = por %p205, %p206
    %p208 = scmp.ne.s32.totalorder %s197, %s200
    %p209 = scmp.eq.s32.totalorder %s19, 1
    %p210 = por %p208, %p209
    %p211 = scmp.ne.s32.totalorder %s200, %s201
    %p212 = scmp.eq.s32.totalorder %s19, 0
    %p213 = por %p211, %p212
    %p214 = scmp.ne.s32.totalorder %s200, %s201
    %p215 = scmp.eq.s32.totalorder %s20, 1
    %p216 = por %p214, %p215
    %p218 = scmp.ne.s32.totalorder %s201, %s217
    %p219 = scmp.eq.s32.totalorder %s20, 0
    %p220 = por %p218, %p219
    %p221 = scmp.le.s32.totalorder 1, %s14
    %p222 = scmp.lt.s32.totalorder %s14, 3
    %p223 = pnand %p221, %p222
    %p224 = pneg %p223
    // Predicated region
    $region9: #{preact_block_forward.1} parent=5 // pred_check
      _
    $region10: #{preact_block_forward.1} parent=5 // pred_check_branch
      %226 = sbr.rel (%p223) target = $region12
    $region11: #{preact_block_forward.1} parent=5 // pred_region
      %s227 = ssub.s32 %s14, 1
      // Predicated region
      $region13: #{preact_block_forward.1} parent=11 // pred_check
        %p228 = pneg %p61
      $region14: #{preact_block_forward.1} parent=11 // pred_check_branch
        %230 = sbr.rel (%p228) target = $region16
      $region15: #{preact_block_forward.1} parent=11 // pred_region
        _
      $region16: #{preact_block_forward.1} parent=11 // pred_fallthru
        _
      // Predicated region
      $region17: #{preact_block_forward.1} parent=11 // pred_check
        %p231 = pneg %p82
      $region18: #{preact_block_forward.1} parent=11 // pred_check_branch
        %233 = sbr.rel (%p231) target = $region20
      $region19: #{preact_block_forward.1} parent=11 // pred_region
        _
      $region20: #{preact_block_forward.1} parent=11 // pred_fallthru
        _
      // Predicated region
      $region21: #{preact_block_forward.1} parent=11 // pred_check
        %p234 = pneg %p103
      $region22: #{preact_block_forward.1} parent=11 // pred_check_branch
        %236 = sbr.rel (%p234) target = $region24
      $region23: #{preact_block_forward.1} parent=11 // pred_region
        _
      $region24: #{preact_block_forward.1} parent=11 // pred_fallthru
        _
      // Predicated region
      $region25: #{preact_block_forward.1} parent=11 // pred_check
        %p237 = pneg %p124
      $region26: #{preact_block_forward.1} parent=11 // pred_check_branch
        %239 = sbr.rel (%p237) target = $region28
      $region27: #{preact_block_forward.1} parent=11 // pred_region
        _
      $region28: #{preact_block_forward.1} parent=11 // pred_fallthru
        _
      // Predicated region
      $region29: #{preact_block_forward.1} parent=11 // pred_check
        %p240 = pneg %p145
      $region30: #{preact_block_forward.1} parent=11 // pred_check_branch
        %242 = sbr.rel (%p240) target = $region32
      $region31: #{preact_block_forward.1} parent=11 // pred_region
        _
      $region32: #{preact_block_forward.1} parent=11 // pred_fallthru
        _
      // Predicated region
      $region33: #{preact_block_forward.1} parent=11 // pred_check
        %p243 = pneg %p166
      $region34: #{preact_block_forward.1} parent=11 // pred_check_branch
        %245 = sbr.rel (%p243) target = $region36
      $region35: #{preact_block_forward.1} parent=11 // pred_region
        _
      $region36: #{preact_block_forward.1} parent=11 // pred_fallthru
        _
      // Predicated region
      $region37: #{preact_block_forward.1} parent=11 // pred_check
        %p246 = pneg %p187
      $region38: #{preact_block_forward.1} parent=11 // pred_check_branch
        %248 = sbr.rel (%p246) target = $region40
      $region39: #{preact_block_forward.1} parent=11 // pred_region
        _
      $region40: #{preact_block_forward.1} parent=11 // pred_fallthru
        _
    $region12: #{preact_block_forward.1} parent=5 // pred_fallthru
      _
    %p249 = scmp.lt.s32.totalorder %s14, 2
    // Predicated region
    $region41: #{preact_block_forward.1} parent=5 // pred_check
      %p250 = pneg %p249
    $region42: #{preact_block_forward.1} parent=5 // pred_check_branch
      %252 = sbr.rel (%p250) target = $region44
    $region43: #{preact_block_forward.1} parent=5 // pred_region
      // Predicated region
      $region45: #{preact_block_forward.1} parent=43 // pred_check
        %p253 = pneg %p34
      $region46: #{preact_block_forward.1} parent=43 // pred_check_branch
        %255 = sbr.rel (%p253) target = $region48
      $region47: #{preact_block_forward.1} parent=43 // pred_region
        %p256 = scmp.lt.s32.totalorder %s14, 1
        %s257 = scalar_select %p256, %s14, 1
        %s258 = smul.addr %s257, 32
        %s259 = smul.addr %s258, 8
        %s260 = scalar_lea.vmem %s0, %s259
      $region48: #{preact_block_forward.1} parent=43 // pred_fallthru
        _
    $region44: #{preact_block_forward.1} parent=5 // pred_fallthru
      _
    %p261 = scmp.le.s32.totalorder 1, %s14
    %p262 = scmp.lt.s32.totalorder %s14, 3
    %p263 = pnand %p261, %p262
    %p264 = pneg %p263
    // Predicated region
    $region49: #{preact_block_forward.1} parent=5 // pred_check
      _
    $region50: #{preact_block_forward.1} parent=5 // pred_check_branch
      %266 = sbr.rel (%p263) target = $region52
    $region51: #{preact_block_forward.1} parent=5 // pred_region
      %s267 = ssub.s32 %s14, 1
      %p268 = scmp.lt.s32.totalorder %s19, 1
      %s269 = scalar_select %p268, %s19, 1
      %s270 = smul.addr %s269, 32
      %s271 = smul.addr %s270, 8
      %s272 = scalar_lea.vmem %s0, %s271
      %p273 = pneg %p40
      %p274 = pneg %p37
      %p275 = pneg %p61
      %p276 = pneg %p58
      %p277 = pneg %p82
      %p278 = pneg %p79
      %p279 = pneg %p103
      %p280 = pneg %p100
      %p281 = pneg %p124
      %p282 = pneg %p121
      %p283 = pneg %p145
      %p284 = pneg %p142
      %p285 = pneg %p166
      %p286 = pneg %p163
      %p287 = pneg %p187
      %p288 = pneg %p184
      %p289 = pneg %p213
      %p290 = pneg %p210
      %p291 = scmp.lt.s32.totalorder %s19, 1
      %s292 = scalar_select %p291, %s19, 1
      %s293 = smul.addr %s292, 8
      %s294 = smul.addr %s293, 8
      %s295 = scalar_lea.vmem %s8, %s294
      %p296 = scmp.lt.s32.totalorder %s19, 1
      %s297 = scalar_select %p296, %s19, 1
      %s298 = smul.addr %s297, 32
      %s299 = smul.addr %s298, 8
      %s300 = scalar_lea.vmem %s0, %s299
      %p301 = scmp.lt.s32.totalorder %s19, 1
      %s302 = scalar_select %p301, %s19, 1
      %s303 = smul.addr %s302, 8
      %s304 = smul.addr %s303, 8
      %s305 = scalar_lea.vmem %s8, %s304
      %307 = vst [vmem:[#allocation2] sm:$0xff] 0.0
      %308 = vst [vmem:[#allocation2 + $0x8] sm:$0xff] 0.0
      %309 = vst [vmem:[#allocation2 + $0x10] sm:$0x3] 0.0
      %s310 = scalar_lea.vmem [#allocation2], 408
      %311 = vst [vmem:[%s310] sm:$0xff] 0.0
      %312 = vst [vmem:[%s310 + $0x8] sm:$0xff] 0.0
      %313 = vst [vmem:[%s310 + $0x10] sm:$0x3] 0.0
      %314 = vst [vmem:[#allocation2] sm:$0x1] 0.0
      %315 = vst [vmem:[#allocation2 + $0x18] sm:$0x1] 0.0
      %316 = vst [vmem:[#allocation2 + $0x30] sm:$0x1] 0.0
      %317 = vst [vmem:[#allocation2 + $0x48] sm:$0x1] 0.0
      %318 = vst [vmem:[#allocation2 + $0x60] sm:$0x1] 0.0
      %319 = vst [vmem:[#allocation2 + $0x78] sm:$0x1] 0.0
      %320 = vst [vmem:[#allocation2 + $0x90] sm:$0x1] 0.0
      %321 = vst [vmem:[#allocation2 + $0xa8] sm:$0x1] 0.0
      %322 = vst [vmem:[#allocation2 + $0xc0] sm:$0x1] 0.0
      %323 = vst [vmem:[#allocation2 + $0xd8] sm:$0x1] 0.0
      %324 = vst [vmem:[#allocation2 + $0xf0] sm:$0x1] 0.0
      %325 = vst [vmem:[#allocation2 + $0x108] sm:$0x1] 0.0
      %326 = vst [vmem:[#allocation2 + $0x120] sm:$0x1] 0.0
      %327 = vst [vmem:[#allocation2 + $0x138] sm:$0x1] 0.0
      %328 = vst [vmem:[#allocation2 + $0x150] sm:$0x1] 0.0
      %329 = vst [vmem:[#allocation2 + $0x168] sm:$0x1] 0.0
      %330 = vst [vmem:[#allocation2 + $0x180] sm:$0x1] 0.0
      %331 = vst [vmem:[#allocation2 + $0x198] sm:$0x1] 0.0
      %332 = vst [vmem:[#allocation2 + $0x11] sm:$0x1] 0.0
      %333 = vst [vmem:[#allocation2 + $0x29] sm:$0x1] 0.0
      %334 = vst [vmem:[#allocation2 + $0x41] sm:$0x1] 0.0
      %335 = vst [vmem:[#allocation2 + $0x59] sm:$0x1] 0.0
      %336 = vst [vmem:[#allocation2 + $0x71] sm:$0x1] 0.0
      %337 = vst [vmem:[#allocation2 + $0x89] sm:$0x1] 0.0
      %338 = vst [vmem:[#allocation2 + $0xa1] sm:$0x1] 0.0
      %339 = vst [vmem:[#allocation2 + $0xb9] sm:$0x1] 0.0
      %340 = vst [vmem:[#allocation2 + $0xd1] sm:$0x1] 0.0
      %341 = vst [vmem:[#allocation2 + $0xe9] sm:$0x1] 0.0
      %342 = vst [vmem:[#allocation2 + $0x101] sm:$0x1] 0.0
      %343 = vst [vmem:[#allocation2 + $0x119] sm:$0x1] 0.0
      %344 = vst [vmem:[#allocation2 + $0x131] sm:$0x1] 0.0
      %345 = vst [vmem:[#allocation2 + $0x149] sm:$0x1] 0.0
      %346 = vst [vmem:[#allocation2 + $0x161] sm:$0x1] 0.0
      %347 = vst [vmem:[#allocation2 + $0x179] sm:$0x1] 0.0
      %348 = vst [vmem:[#allocation2 + $0x191] sm:$0x1] 0.0
      %349 = vst [vmem:[#allocation2 + $0x1a9] sm:$0x1] 0.0
      %v350 = vld [vmem:[%s300] sm:$0xff]
      %v351 = vld [vmem:[%s300 + $0x8] sm:$0xff]
      %v352 = vld [vmem:[%s300 + $0x10] sm:$0xff]
      %v353 = vld [vmem:[%s300 + $0x18] sm:$0xff]
      %v354 = vld [vmem:[%s300 + $0x20] sm:$0xff]
      %v355 = vld [vmem:[%s300 + $0x28] sm:$0xff]
      %v356 = vld [vmem:[%s300 + $0x30] sm:$0xff]
      %v357 = vld [vmem:[%s300 + $0x38] sm:$0xff]
      %v358 = vld [vmem:[%s300 + $0x40] sm:$0xff]
      %v359 = vld [vmem:[%s300 + $0x48] sm:$0xff]
      %v360 = vld [vmem:[%s300 + $0x50] sm:$0xff]
      %v361 = vld [vmem:[%s300 + $0x58] sm:$0xff]
      %v362 = vld [vmem:[%s300 + $0x60] sm:$0xff]
      %v363 = vld [vmem:[%s300 + $0x68] sm:$0xff]
      %v364 = vld [vmem:[%s300 + $0x70] sm:$0xff]
      %v365 = vld [vmem:[%s300 + $0x78] sm:$0xff]
      %v366 = vld [vmem:[%s300 + $0x80] sm:$0xff]
      %v367 = vld [vmem:[%s300 + $0x88] sm:$0xff]
      %v368 = vld [vmem:[%s300 + $0x90] sm:$0xff]
      %v369 = vld [vmem:[%s300 + $0x98] sm:$0xff]
      %v370 = vld [vmem:[%s300 + $0xa0] sm:$0xff]
      %v371 = vld [vmem:[%s300 + $0xa8] sm:$0xff]
      %v372 = vld [vmem:[%s300 + $0xb0] sm:$0xff]
      %v373 = vld [vmem:[%s300 + $0xb8] sm:$0xff]
      %v374 = vld [vmem:[%s300 + $0xc0] sm:$0xff]
      %v375 = vld [vmem:[%s300 + $0xc8] sm:$0xff]
      %v376 = vld [vmem:[%s300 + $0xd0] sm:$0xff]
      %v377 = vld [vmem:[%s300 + $0xd8] sm:$0xff]
      %v378 = vld [vmem:[%s300 + $0xe0] sm:$0xff]
      %v379 = vld [vmem:[%s300 + $0xe8] sm:$0xff]
      %v380 = vld [vmem:[%s300 + $0xf0] sm:$0xff]
      %v381 = vld [vmem:[%s300 + $0xf8] sm:$0xff]
      %v382 = vld [vmem:[%s1] sm:$0x1]
      %v384 = vlaneseq
      %v385 = vshrl.u32 %v384, 7
      %v386 = vsub.s32 0, %v385
      %v387 = vrot.slane %v382, %v386
      %v389 = vmul.f32 %v350, %v387
      %v390 = vmul.f32 %v351, %v387
      %v391 = vmul.f32 %v352, %v387
      %v392 = vmul.f32 %v353, %v387
      %v393 = vmul.f32 %v354, %v387
      %v394 = vmul.f32 %v355, %v387
      %v395 = vmul.f32 %v356, %v387
      %v396 = vmul.f32 %v357, %v387
      %v397 = vmul.f32 %v358, %v387
      %v398 = vmul.f32 %v359, %v387
      %v399 = vmul.f32 %v360, %v387
      %v400 = vmul.f32 %v361, %v387
      %v401 = vmul.f32 %v362, %v387
      %v402 = vmul.f32 %v363, %v387
      %v403 = vmul.f32 %v364, %v387
      %v404 = vmul.f32 %v365, %v387
      %v405 = vmul.f32 %v366, %v387
      %v406 = vmul.f32 %v367, %v387
      %v407 = vmul.f32 %v368, %v387
      %v408 = vmul.f32 %v369, %v387
      %v409 = vmul.f32 %v370, %v387
      %v410 = vmul.f32 %v371, %v387
      %v411 = vmul.f32 %v372, %v387
      %v412 = vmul.f32 %v373, %v387
      %v413 = vmul.f32 %v374, %v387
      %v414 = vmul.f32 %v375, %v387
      %v415 = vmul.f32 %v376, %v387
      %v416 = vmul.f32 %v377, %v387
      %v417 = vmul.f32 %v378, %v387
      %v418 = vmul.f32 %v379, %v387
      %v419 = vmul.f32 %v380, %v387
      %v420 = vmul.f32 %v381, %v387
      %v421 = vld [vmem:[%s2] sm:$0x1]
      %v423 = vlaneseq
      %v424 = vshrl.u32 %v423, 7
      %v425 = vsub.s32 0, %v424
      %v426 = vrot.slane %v421, %v425
      %v428 = vadd.f32 %v389, %v426
      %v429 = vadd.f32 %v390, %v426
      %v430 = vadd.f32 %v391, %v426
      %v431 = vadd.f32 %v392, %v426
      %v432 = vadd.f32 %v393, %v426
      %v433 = vadd.f32 %v394, %v426
      %v434 = vadd.f32 %v395, %v426
      %v435 = vadd.f32 %v396, %v426
      %v436 = vadd.f32 %v397, %v426
      %v437 = vadd.f32 %v398, %v426
      %v438 = vadd.f32 %v399, %v426
      %v439 = vadd.f32 %v400, %v426
      %v440 = vadd.f32 %v401, %v426
      %v441 = vadd.f32 %v402, %v426
      %v442 = vadd.f32 %v403, %v426
      %v443 = vadd.f32 %v404, %v426
      %v444 = vadd.f32 %v405, %v426
      %v445 = vadd.f32 %v406, %v426
      %v446 = vadd.f32 %v407, %v426
      %v447 = vadd.f32 %v408, %v426
      %v448 = vadd.f32 %v409, %v426
      %v449 = vadd.f32 %v410, %v426
      %v450 = vadd.f32 %v411, %v426
      %v451 = vadd.f32 %v412, %v426
      %v452 = vadd.f32 %v413, %v426
      %v453 = vadd.f32 %v414, %v426
      %v454 = vadd.f32 %v415, %v426
      %v455 = vadd.f32 %v416, %v426
      %v456 = vadd.f32 %v417, %v426
      %v457 = vadd.f32 %v418, %v426
      %v458 = vadd.f32 %v419, %v426
      %v459 = vadd.f32 %v420, %v426
      %v460 = vmax.f32 %v428, 0.0
      %v461 = vmax.f32 %v429, 0.0
      %v462 = vmax.f32 %v430, 0.0
      %v463 = vmax.f32 %v431, 0.0
      %v464 = vmax.f32 %v432, 0.0
      %v465 = vmax.f32 %v433, 0.0
      %v466 = vmax.f32 %v434, 0.0
      %v467 = vmax.f32 %v435, 0.0
      %v468 = vmax.f32 %v436, 0.0
      %v469 = vmax.f32 %v437, 0.0
      %v470 = vmax.f32 %v438, 0.0
      %v471 = vmax.f32 %v439, 0.0
      %v472 = vmax.f32 %v440, 0.0
      %v473 = vmax.f32 %v441, 0.0
      %v474 = vmax.f32 %v442, 0.0
      %v475 = vmax.f32 %v443, 0.0
      %v476 = vmax.f32 %v444, 0.0
      %v477 = vmax.f32 %v445, 0.0
      %v478 = vmax.f32 %v446, 0.0
      %v479 = vmax.f32 %v447, 0.0
      %v480 = vmax.f32 %v448, 0.0
      %v481 = vmax.f32 %v449, 0.0
      %v482 = vmax.f32 %v450, 0.0
      %v483 = vmax.f32 %v451, 0.0
      %v484 = vmax.f32 %v452, 0.0
      %v485 = vmax.f32 %v453, 0.0
      %v486 = vmax.f32 %v454, 0.0
      %v487 = vmax.f32 %v455, 0.0
      %v488 = vmax.f32 %v456, 0.0
      %v489 = vmax.f32 %v457, 0.0
      %v490 = vmax.f32 %v458, 0.0
      %v491 = vmax.f32 %v459, 0.0
      %s492 = scalar_lea.vmem [#allocation2], 24
      %493 = vst [vmem:[%s492 + $0x1] sm:$0xff] %v460
      %494 = vst [vmem:[%s492 + $0x9] sm:$0xff] %v461
      %495 = vst [vmem:[%s492 + $0x19] sm:$0xff] %v462
      %496 = vst [vmem:[%s492 + $0x21] sm:$0xff] %v463
      %497 = vst [vmem:[%s492 + $0x31] sm:$0xff] %v464
      %498 = vst [vmem:[%s492 + $0x39] sm:$0xff] %v465
      %499 = vst [vmem:[%s492 + $0x49] sm:$0xff] %v466
      %500 = vst [vmem:[%s492 + $0x51] sm:$0xff] %v467
      %501 = vst [vmem:[%s492 + $0x61] sm:$0xff] %v468
      %502 = vst [vmem:[%s492 + $0x69] sm:$0xff] %v469
      %503 = vst [vmem:[%s492 + $0x79] sm:$0xff] %v470
      %504 = vst [vmem:[%s492 + $0x81] sm:$0xff] %v471
      %505 = vst [vmem:[%s492 + $0x91] sm:$0xff] %v472
      %506 = vst [vmem:[%s492 + $0x99] sm:$0xff] %v473
      %507 = vst [vmem:[%s492 + $0xa9] sm:$0xff] %v474
      %508 = vst [vmem:[%s492 + $0xb1] sm:$0xff] %v475
      %509 = vst [vmem:[%s492 + $0xc1] sm:$0xff] %v476
      %510 = vst [vmem:[%s492 + $0xc9] sm:$0xff] %v477
      %511 = vst [vmem:[%s492 + $0xd9] sm:$0xff] %v478
      %512 = vst [vmem:[%s492 + $0xe1] sm:$0xff] %v479
      %513 = vst [vmem:[%s492 + $0xf1] sm:$0xff] %v480
      %514 = vst [vmem:[%s492 + $0xf9] sm:$0xff] %v481
      %515 = vst [vmem:[%s492 + $0x109] sm:$0xff] %v482
      %516 = vst [vmem:[%s492 + $0x111] sm:$0xff] %v483
      %517 = vst [vmem:[%s492 + $0x121] sm:$0xff] %v484
      %518 = vst [vmem:[%s492 + $0x129] sm:$0xff] %v485
      %519 = vst [vmem:[%s492 + $0x139] sm:$0xff] %v486
      %520 = vst [vmem:[%s492 + $0x141] sm:$0xff] %v487
      %521 = vst [vmem:[%s492 + $0x151] sm:$0xff] %v488
      %522 = vst [vmem:[%s492 + $0x159] sm:$0xff] %v489
      %523 = vst [vmem:[%s492 + $0x169] sm:$0xff] %v490
      %524 = vst [vmem:[%s492 + $0x171] sm:$0xff] %v491
      %v525 = vld [vmem:[#allocation2] ss:$2 sm:$0xff]
      %s526 = scalar_lea.vmem [#allocation2], 48
      %v527 = vld [vmem:[%s526] ss:$2 sm:$0xff]
      %s528 = scalar_lea.vmem [#allocation2], 96
      %v529 = vld [vmem:[%s528] ss:$2 sm:$0xff]
      %s530 = scalar_lea.vmem [#allocation2], 144
      %v531 = vld [vmem:[%s530] ss:$2 sm:$0xff]
      %s532 = scalar_lea.vmem [#allocation2], 192
      %v533 = vld [vmem:[%s532] ss:$2 sm:$0xff]
      %s534 = scalar_lea.vmem [#allocation2], 240
      %v535 = vld [vmem:[%s534] ss:$2 sm:$0xff]
      %s536 = scalar_lea.vmem [#allocation2], 288
      %v537 = vld [vmem:[%s536] ss:$2 sm:$0xff]
      %s538 = scalar_lea.vmem [#allocation2], 336
      %v539 = vld [vmem:[%s538] ss:$2 sm:$0xff]
      %v540 = vpack.c.bf16 %v527, %v525
      %v541 = vpack.c.bf16 %v531, %v529
      %v542 = vpack.c.bf16 %v535, %v533
      %v543 = vpack.c.bf16 %v539, %v537
      %v544 = vld [vmem:[%s3] sm:$0xf]
      %v545 = vld [vmem:[%s3 + $0x4] sm:$0xf]
      %v546 = vld [vmem:[%s3 + $0x8] sm:$0xf]
      %v547 = vld [vmem:[%s3 + $0xc] sm:$0xf]
      %v548 = vld [vmem:[%s3 + $0x10] sm:$0xf]
      %v549 = vld [vmem:[%s3 + $0x14] sm:$0xf]
      %v550 = vld [vmem:[%s3 + $0x18] sm:$0xf]
      %v551 = vld [vmem:[%s3 + $0x1c] sm:$0xf]
      %v552 = vld [vmem:[%s3 + $0x20] sm:$0xf]
      %v553 = vld [vmem:[%s3 + $0x24] sm:$0xf]
      %v554 = vld [vmem:[%s3 + $0x28] sm:$0xf]
      %v555 = vld [vmem:[%s3 + $0x2c] sm:$0xf]
      %v556 = vld [vmem:[%s3 + $0x30] sm:$0xf]
      %v557 = vld [vmem:[%s3 + $0x34] sm:$0xf]
      %v558 = vld [vmem:[%s3 + $0x38] sm:$0xf]
      %v559 = vld [vmem:[%s3 + $0x3c] sm:$0xf]
      %s560 = scalar_lea.vmem [#allocation2], 1
      %v561 = vld [vmem:[%s560] ss:$2 sm:$0xff]
      %s562 = scalar_lea.vmem [#allocation2], 49
      %v563 = vld [vmem:[%s562] ss:$2 sm:$0xff]
      %s564 = scalar_lea.vmem [#allocation2], 97
      %v565 = vld [vmem:[%s564] ss:$2 sm:$0xff]
      %s566 = scalar_lea.vmem [#allocation2], 145
      %v567 = vld [vmem:[%s566] ss:$2 sm:$0xff]
      %s568 = scalar_lea.vmem [#allocation2], 193
      %v569 = vld [vmem:[%s568] ss:$2 sm:$0xff]
      %s570 = scalar_lea.vmem [#allocation2], 241
      %v571 = vld [vmem:[%s570] ss:$2 sm:$0xff]
      %s572 = scalar_lea.vmem [#allocation2], 289
      %v573 = vld [vmem:[%s572] ss:$2 sm:$0xff]
      %s574 = scalar_lea.vmem [#allocation2], 337
      %v575 = vld [vmem:[%s574] ss:$2 sm:$0xff]
      %v576 = vpack.c.bf16 %v563, %v561
      %v577 = vpack.c.bf16 %v567, %v565
      %v578 = vpack.c.bf16 %v571, %v569
      %v579 = vpack.c.bf16 %v575, %v573
      %v580 = vld [vmem:[%s3 + $0x40] sm:$0xf]
      %v581 = vld [vmem:[%s3 + $0x44] sm:$0xf]
      %v582 = vld [vmem:[%s3 + $0x48] sm:$0xf]
      %v583 = vld [vmem:[%s3 + $0x4c] sm:$0xf]
      %v584 = vld [vmem:[%s3 + $0x50] sm:$0xf]
      %v585 = vld [vmem:[%s3 + $0x54] sm:$0xf]
      %v586 = vld [vmem:[%s3 + $0x58] sm:$0xf]
      %v587 = vld [vmem:[%s3 + $0x5c] sm:$0xf]
      %v588 = vld [vmem:[%s3 + $0x60] sm:$0xf]
      %v589 = vld [vmem:[%s3 + $0x64] sm:$0xf]
      %v590 = vld [vmem:[%s3 + $0x68] sm:$0xf]
      %v591 = vld [vmem:[%s3 + $0x6c] sm:$0xf]
      %v592 = vld [vmem:[%s3 + $0x70] sm:$0xf]
      %v593 = vld [vmem:[%s3 + $0x74] sm:$0xf]
      %v594 = vld [vmem:[%s3 + $0x78] sm:$0xf]
      %v595 = vld [vmem:[%s3 + $0x7c] sm:$0xf]
      %v612 = vunpack.c.l.b16 %v580
      %v613 = vunpack.c.l.b16 %v581
      %v614 = vunpack.c.l.b16 %v582
      %v615 = vunpack.c.l.b16 %v583
      %v616 = vunpack.c.l.b16 %v584
      %v617 = vunpack.c.l.b16 %v585
      %v618 = vunpack.c.l.b16 %v586
      %v619 = vunpack.c.l.b16 %v587
      %v620 = vunpack.c.l.b16 %v588
      %v621 = vunpack.c.l.b16 %v589
      %v622 = vunpack.c.l.b16 %v590
      %v623 = vunpack.c.l.b16 %v591
      %v624 = vunpack.c.l.b16 %v592
      %v625 = vunpack.c.l.b16 %v593
      %v626 = vunpack.c.l.b16 %v594
      %v627 = vunpack.c.l.b16 %v595
      %v628 = vpack.c.b16 %v613, %v612
      %v629 = vpack.c.b16 %v615, %v614
      %v630 = vpack.c.b16 %v617, %v616
      %v631 = vpack.c.b16 %v619, %v618
      %v632 = vpack.c.b16 %v621, %v620
      %v633 = vpack.c.b16 %v623, %v622
      %v634 = vpack.c.b16 %v625, %v624
      %v635 = vpack.c.b16 %v627, %v626
      %644 = vmatprep.subr.bf16.mxu0 0
      %645 = vmatpush1.bf16.msra.mxu0 %v635
      %646 = vmatprep.subr.bf16.mxu0 0
      %647 = vmatpush1.bf16.msra.mxu0 %v634
      %648 = vmatprep.subr.bf16.mxu0 0
      %649 = vmatpush1.bf16.msra.mxu0 %v633
      %650 = vmatprep.subr.bf16.mxu0 0
      %651 = vmatpush1.bf16.msra.mxu0 %v632
      %652 = vmatprep.subr.bf16.mxu0 0
      %653 = vmatpush1.bf16.msra.mxu0 %v631
      %654 = vmatprep.subr.bf16.mxu0 0
      %655 = vmatpush1.bf16.msra.mxu0 %v630
      %656 = vmatprep.subr.bf16.mxu0 0
      %657 = vmatpush1.bf16.msra.mxu0 %v629
      %658 = vmatprep.subr.bf16.mxu0 0
      %659 = vmatpush1.bf16.msra.mxu0 %v628
      %660 = vmatprep.subr.bf16.mxu0 0
      %661 = vmatpush2.bf16.msra.mxu0 0
      %662 = vmatprep.subr.bf16.mxu0 0
      %663 = vmatpush2.bf16.msra.mxu0 0
      %664 = vmatprep.subr.bf16.mxu0 0
      %665 = vmatpush2.bf16.msra.mxu0 0
      %666 = vmatprep.subr.bf16.mxu0 0
      %667 = vmatpush2.bf16.msra.mxu0 0
      %668 = vmatprep.subr.bf16.mxu0 0
      %669 = vmatpush2.bf16.msra.mxu0 0
      %670 = vmatprep.subr.bf16.mxu0 0
      %671 = vmatpush2.bf16.msra.mxu0 0
      %672 = vmatprep.subr.bf16.mxu0 0
      %673 = vmatpush2.bf16.msra.mxu0 0
      %674 = vmatprep.subr.bf16.mxu0 0
      %675 = vmatpush2.bf16.msra.mxu0 0
      %676 = vmatprep.mubr.bf16.mxu0 0
      %677 = vmatmul.mubr.bf16.gmra.mxu0 %v576
      %v678 = vpop.f32.mrf.mxu0
      %v679 = vadd.f32 0.0, %v678
      %v680 = vpop.f32.mrf.mxu0
      %v681 = vpop.f32.mrf.mxu0
      %v682 = vadd.f32 0.0, %v681
      %v683 = vpop.f32.mrf.mxu0
      %684 = vmatprep.mubr.bf16.mxu0 0
      %685 = vmatmul.mubr.bf16.gmra.mxu0 %v577
      %v686 = vpop.f32.mrf.mxu0
      %v687 = vadd.f32 0.0, %v686
      %v688 = vpop.f32.mrf.mxu0
      %v689 = vpop.f32.mrf.mxu0
      %v690 = vadd.f32 0.0, %v689
      %v691 = vpop.f32.mrf.mxu0
      %692 = vmatprep.mubr.bf16.mxu0 0
      %693 = vmatmul.mubr.bf16.gmra.mxu0 %v578
      %v694 = vpop.f32.mrf.mxu0
      %v695 = vadd.f32 0.0, %v694
      %v696 = vpop.f32.mrf.mxu0
      %v697 = vpop.f32.mrf.mxu0
      %v698 = vadd.f32 0.0, %v697
      %v699 = vpop.f32.mrf.mxu0
      %700 = vmatprep.mubr.bf16.mxu0 0
      %701 = vmatmul.mubr.bf16.gmra.mxu0 %v579
      %v702 = vpop.f32.mrf.mxu0
      %v703 = vadd.f32 0.0, %v702
      %v704 = vpop.f32.mrf.mxu0
      %v705 = vpop.f32.mrf.mxu0
      %v706 = vadd.f32 0.0, %v705
      %v707 = vpop.f32.mrf.mxu0
      %708 = vdwg.mxu0
      %v725 = vunpack.c.l.b16 %v544
      %v726 = vunpack.c.l.b16 %v545
      %v727 = vunpack.c.l.b16 %v546
      %v728 = vunpack.c.l.b16 %v547
      %v729 = vunpack.c.l.b16 %v548
      %v730 = vunpack.c.l.b16 %v549
      %v731 = vunpack.c.l.b16 %v550
      %v732 = vunpack.c.l.b16 %v551
      %v733 = vunpack.c.l.b16 %v552
      %v734 = vunpack.c.l.b16 %v553
      %v735 = vunpack.c.l.b16 %v554
      %v736 = vunpack.c.l.b16 %v555
      %v737 = vunpack.c.l.b16 %v556
      %v738 = vunpack.c.l.b16 %v557
      %v739 = vunpack.c.l.b16 %v558
      %v740 = vunpack.c.l.b16 %v559
      %v741 = vpack.c.b16 %v726, %v725
      %v742 = vpack.c.b16 %v728, %v727
      %v743 = vpack.c.b16 %v730, %v729
      %v744 = vpack.c.b16 %v732, %v731
      %v745 = vpack.c.b16 %v734, %v733
      %v746 = vpack.c.b16 %v736, %v735
      %v747 = vpack.c.b16 %v738, %v737
      %v748 = vpack.c.b16 %v740, %v739
      %757 = vmatprep.subr.bf16.mxu0 0
      %758 = vmatpush1.bf16.msra.mxu0 %v748
      %759 = vmatprep.subr.bf16.mxu0 0
      %760 = vmatpush1.bf16.msra.mxu0 %v747
      %761 = vmatprep.subr.bf16.mxu0 0
      %762 = vmatpush1.bf16.msra.mxu0 %v746
      %763 = vmatprep.subr.bf16.mxu0 0
      %764 = vmatpush1.bf16.msra.mxu0 %v745
      %765 = vmatprep.subr.bf16.mxu0 0
      %766 = vmatpush1.bf16.msra.mxu0 %v744
      %767 = vmatprep.subr.bf16.mxu0 0
      %768 = vmatpush1.bf16.msra.mxu0 %v743
      %769 = vmatprep.subr.bf16.mxu0 0
      %770 = vmatpush1.bf16.msra.mxu0 %v742
      %771 = vmatprep.subr.bf16.mxu0 0
      %772 = vmatpush1.bf16.msra.mxu0 %v741
      %773 = vmatprep.subr.bf16.mxu0 0
      %774 = vmatpush2.bf16.msra.mxu0 0
      %775 = vmatprep.subr.bf16.mxu0 0
      %776 = vmatpush2.bf16.msra.mxu0 0
      %777 = vmatprep.subr.bf16.mxu0 0
      %778 = vmatpush2.bf16.msra.mxu0 0
      %779 = vmatprep.subr.bf16.mxu0 0
      %780 = vmatpush2.bf16.msra.mxu0 0
      %781 = vmatprep.subr.bf16.mxu0 0
      %782 = vmatpush2.bf16.msra.mxu0 0
      %783 = vmatprep.subr.bf16.mxu0 0
      %784 = vmatpush2.bf16.msra.mxu0 0
      %785 = vmatprep.subr.bf16.mxu0 0
      %786 = vmatpush2.bf16.msra.mxu0 0
      %787 = vmatprep.subr.bf16.mxu0 0
      %788 = vmatpush2.bf16.msra.mxu0 0
      %789 = vmatprep.mubr.bf16.mxu0 0
      %790 = vmatmul.mubr.bf16.gmra.mxu0 %v540
      %v791 = vpop.f32.mrf.mxu0
      %v792 = vadd.f32 %v679, %v791
      %v793 = vpop.f32.mrf.mxu0
      %v794 = vpop.f32.mrf.mxu0
      %v795 = vadd.f32 %v682, %v794
      %v796 = vpop.f32.mrf.mxu0
      %797 = vmatprep.mubr.bf16.mxu0 0
      %798 = vmatmul.mubr.bf16.gmra.mxu0 %v541
      %v799 = vpop.f32.mrf.mxu0
      %v800 = vadd.f32 %v687, %v799
      %v801 = vpop.f32.mrf.mxu0
      %v802 = vpop.f32.mrf.mxu0
      %v803 = vadd.f32 %v690, %v802
      %v804 = vpop.f32.mrf.mxu0
      %805 = vmatprep.mubr.bf16.mxu0 0
      %806 = vmatmul.mubr.bf16.gmra.mxu0 %v542
      %v807 = vpop.f32.mrf.mxu0
      %v808 = vadd.f32 %v695, %v807
      %v809 = vpop.f32.mrf.mxu0
      %v810 = vpop.f32.mrf.mxu0
      %v811 = vadd.f32 %v698, %v810
      %v812 = vpop.f32.mrf.mxu0
      %813 = vmatprep.mubr.bf16.mxu0 0
      %814 = vmatmul.mubr.bf16.gmra.mxu0 %v543
      %v815 = vpop.f32.mrf.mxu0
      %v816 = vadd.f32 %v703, %v815
      %v817 = vpop.f32.mrf.mxu0
      %v818 = vpop.f32.mrf.mxu0
      %v819 = vadd.f32 %v706, %v818
      %v820 = vpop.f32.mrf.mxu0
      %821 = vdwg.mxu0
      %s822 = scalar_lea.vmem [#allocation2], 2
      %v823 = vld [vmem:[%s822] ss:$2 sm:$0xff]
      %s824 = scalar_lea.vmem [#allocation2], 50
      %v825 = vld [vmem:[%s824] ss:$2 sm:$0xff]
      %s826 = scalar_lea.vmem [#allocation2], 98
      %v827 = vld [vmem:[%s826] ss:$2 sm:$0xff]
      %s828 = scalar_lea.vmem [#allocation2], 146
      %v829 = vld [vmem:[%s828] ss:$2 sm:$0xff]
      %s830 = scalar_lea.vmem [#allocation2], 194
      %v831 = vld [vmem:[%s830] ss:$2 sm:$0xff]
      %s832 = scalar_lea.vmem [#allocation2], 242
      %v833 = vld [vmem:[%s832] ss:$2 sm:$0xff]
      %s834 = scalar_lea.vmem [#allocation2], 290
      %v835 = vld [vmem:[%s834] ss:$2 sm:$0xff]
      %s836 = scalar_lea.vmem [#allocation2], 338
      %v837 = vld [vmem:[%s836] ss:$2 sm:$0xff]
      %v838 = vpack.c.bf16 %v825, %v823
      %v839 = vpack.c.bf16 %v829, %v827
      %v840 = vpack.c.bf16 %v833, %v831
      %v841 = vpack.c.bf16 %v837, %v835
      %v842 = vld [vmem:[%s3 + $0x80] sm:$0xf]
      %v843 = vld [vmem:[%s3 + $0x84] sm:$0xf]
      %v844 = vld [vmem:[%s3 + $0x88] sm:$0xf]
      %v845 = vld [vmem:[%s3 + $0x8c] sm:$0xf]
      %v846 = vld [vmem:[%s3 + $0x90] sm:$0xf]
      %v847 = vld [vmem:[%s3 + $0x94] sm:$0xf]
      %v848 = vld [vmem:[%s3 + $0x98] sm:$0xf]
      %v849 = vld [vmem:[%s3 + $0x9c] sm:$0xf]
      %v850 = vld [vmem:[%s3 + $0xa0] sm:$0xf]
      %v851 = vld [vmem:[%s3 + $0xa4] sm:$0xf]
      %v852 = vld [vmem:[%s3 + $0xa8] sm:$0xf]
      %v853 = vld [vmem:[%s3 + $0xac] sm:$0xf]
      %v854 = vld [vmem:[%s3 + $0xb0] sm:$0xf]
      %v855 = vld [vmem:[%s3 + $0xb4] sm:$0xf]
      %v856 = vld [vmem:[%s3 + $0xb8] sm:$0xf]
      %v857 = vld [vmem:[%s3 + $0xbc] sm:$0xf]
      %v874 = vunpack.c.l.b16 %v842
      %v875 = vunpack.c.l.b16 %v843
      %v876 = vunpack.c.l.b16 %v844
      %v877 = vunpack.c.l.b16 %v845
      %v878 = vunpack.c.l.b16 %v846
      %v879 = vunpack.c.l.b16 %v847
      %v880 = vunpack.c.l.b16 %v848
      %v881 = vunpack.c.l.b16 %v849
      %v882 = vunpack.c.l.b16 %v850
      %v883 = vunpack.c.l.b16 %v851
      %v884 = vunpack.c.l.b16 %v852
      %v885 = vunpack.c.l.b16 %v853
      %v886 = vunpack.c.l.b16 %v854
      %v887 = vunpack.c.l.b16 %v855
      %v888 = vunpack.c.l.b16 %v856
      %v889 = vunpack.c.l.b16 %v857
      %v890 = vpack.c.b16 %v875, %v874
      %v891 = vpack.c.b16 %v877, %v876
      %v892 = vpack.c.b16 %v879, %v878
      %v893 = vpack.c.b16 %v881, %v880
      %v894 = vpack.c.b16 %v883, %v882
      %v895 = vpack.c.b16 %v885, %v884
      %v896 = vpack.c.b16 %v887, %v886
      %v897 = vpack.c.b16 %v889, %v888
      %906 = vmatprep.subr.bf16.mxu0 0
      %907 = vmatpush1.bf16.msra.mxu0 %v897
      %908 = vmatprep.subr.bf16.mxu0 0
      %909 = vmatpush1.bf16.msra.mxu0 %v896
      %910 = vmatprep.subr.bf16.mxu0 0
      %911 = vmatpush1.bf16.msra.mxu0 %v895
      %912 = vmatprep.subr.bf16.mxu0 0
      %913 = vmatpush1.bf16.msra.mxu0 %v894
      %914 = vmatprep.subr.bf16.mxu0 0
      %915 = vmatpush1.bf16.msra.mxu0 %v893
      %916 = vmatprep.subr.bf16.mxu0 0
      %917 = vmatpush1.bf16.msra.mxu0 %v892
      %918 = vmatprep.subr.bf16.mxu0 0
      %919 = vmatpush1.bf16.msra.mxu0 %v891
      %920 = vmatprep.subr.bf16.mxu0 0
      %921 = vmatpush1.bf16.msra.mxu0 %v890
      %922 = vmatprep.subr.bf16.mxu0 0
      %923 = vmatpush2.bf16.msra.mxu0 0
      %924 = vmatprep.subr.bf16.mxu0 0
      %925 = vmatpush2.bf16.msra.mxu0 0
      %926 = vmatprep.subr.bf16.mxu0 0
      %927 = vmatpush2.bf16.msra.mxu0 0
      %928 = vmatprep.subr.bf16.mxu0 0
      %929 = vmatpush2.bf16.msra.mxu0 0
      %930 = vmatprep.subr.bf16.mxu0 0
      %931 = vmatpush2.bf16.msra.mxu0 0
      %932 = vmatprep.subr.bf16.mxu0 0
      %933 = vmatpush2.bf16.msra.mxu0 0
      %934 = vmatprep.subr.bf16.mxu0 0
      %935 = vmatpush2.bf16.msra.mxu0 0
      %936 = vmatprep.subr.bf16.mxu0 0
      %937 = vmatpush2.bf16.msra.mxu0 0
      %938 = vmatprep.mubr.bf16.mxu0 0
      %939 = vmatmul.mubr.bf16.gmra.mxu0 %v838
      %v940 = vpop.f32.mrf.mxu0
      %v941 = vadd.f32 0.0, %v940
      %v942 = vpop.f32.mrf.mxu0
      %v943 = vpop.f32.mrf.mxu0
      %v944 = vadd.f32 0.0, %v943
      %v945 = vpop.f32.mrf.mxu0
      %946 = vmatprep.mubr.bf16.mxu0 0
      %947 = vmatmul.mubr.bf16.gmra.mxu0 %v839
      %v948 = vpop.f32.mrf.mxu0
      %v949 = vadd.f32 0.0, %v948
      %v950 = vpop.f32.mrf.mxu0
      %v951 = vpop.f32.mrf.mxu0
      %v952 = vadd.f32 0.0, %v951
      %v953 = vpop.f32.mrf.mxu0
      %954 = vmatprep.mubr.bf16.mxu0 0
      %955 = vmatmul.mubr.bf16.gmra.mxu0 %v840
      %v956 = vpop.f32.mrf.mxu0
      %v957 = vadd.f32 0.0, %v956
      %v958 = vpop.f32.mrf.mxu0
      %v959 = vpop.f32.mrf.mxu0
      %v960 = vadd.f32 0.0, %v959
      %v961 = vpop.f32.mrf.mxu0
      %962 = vmatprep.mubr.bf16.mxu0 0
      %963 = vmatmul.mubr.bf16.gmra.mxu0 %v841
      %v964 = vpop.f32.mrf.mxu0
      %v965 = vadd.f32 0.0, %v964
      %v966 = vpop.f32.mrf.mxu0
      %v967 = vpop.f32.mrf.mxu0
      %v968 = vadd.f32 0.0, %v967
      %v969 = vpop.f32.mrf.mxu0
      %970 = vdwg.mxu0
      %v971 = vadd.f32 %v792, %v941
      %v972 = vadd.f32 %v795, %v944
      %v973 = vadd.f32 %v800, %v949
      %v974 = vadd.f32 %v803, %v952
      %v975 = vadd.f32 %v808, %v957
      %v976 = vadd.f32 %v811, %v960
      %v977 = vadd.f32 %v816, %v965
      %v978 = vadd.f32 %v819, %v968
      %v979 = vld [vmem:[%s492] ss:$2 sm:$0xff]
      %s980 = scalar_lea.vmem %s492, 48 [#allocation2]
      %v981 = vld [vmem:[%s980] ss:$2 sm:$0xff]
      %s982 = scalar_lea.vmem %s492, 96 [#allocation2]
      %v983 = vld [vmem:[%s982] ss:$2 sm:$0xff]
      %s984 = scalar_lea.vmem %s492, 144 [#allocation2]
      %v985 = vld [vmem:[%s984] ss:$2 sm:$0xff]
      %s986 = scalar_lea.vmem %s492, 192 [#allocation2]
      %v987 = vld [vmem:[%s986] ss:$2 sm:$0xff]
      %s988 = scalar_lea.vmem %s492, 240 [#allocation2]
      %v989 = vld [vmem:[%s988] ss:$2 sm:$0xff]
      %s990 = scalar_lea.vmem %s492, 288 [#allocation2]
      %v991 = vld [vmem:[%s990] ss:$2 sm:$0xff]
      %s992 = scalar_lea.vmem %s492, 336 [#allocation2]
      %v993 = vld [vmem:[%s992] ss:$2 sm:$0xff]
      %v994 = vpack.c.bf16 %v981, %v979
      %v995 = vpack.c.bf16 %v985, %v983
      %v996 = vpack.c.bf16 %v989, %v987
      %v997 = vpack.c.bf16 %v993, %v991
      %v998 = vld [vmem:[%s3 + $0xc0] sm:$0xf]
      %v999 = vld [vmem:[%s3 + $0xc4] sm:$0xf]
      %v1000 = vld [vmem:[%s3 + $0xc8] sm:$0xf]
      %v1001 = vld [vmem:[%s3 + $0xcc] sm:$0xf]
      %v1002 = vld [vmem:[%s3 + $0xd0] sm:$0xf]
      %v1003 = vld [vmem:[%s3 + $0xd4] sm:$0xf]
      %v1004 = vld [vmem:[%s3 + $0xd8] sm:$0xf]
      %v1005 = vld [vmem:[%s3 + $0xdc] sm:$0xf]
      %v1006 = vld [vmem:[%s3 + $0xe0] sm:$0xf]
      %v1007 = vld [vmem:[%s3 + $0xe4] sm:$0xf]
      %v1008 = vld [vmem:[%s3 + $0xe8] sm:$0xf]
      %v1009 = vld [vmem:[%s3 + $0xec] sm:$0xf]
      %v1010 = vld [vmem:[%s3 + $0xf0] sm:$0xf]
      %v1011 = vld [vmem:[%s3 + $0xf4] sm:$0xf]
      %v1012 = vld [vmem:[%s3 + $0xf8] sm:$0xf]
      %v1013 = vld [vmem:[%s3 + $0xfc] sm:$0xf]
      %v1030 = vunpack.c.l.b16 %v998
      %v1031 = vunpack.c.l.b16 %v999
      %v1032 = vunpack.c.l.b16 %v1000
      %v1033 = vunpack.c.l.b16 %v1001
      %v1034 = vunpack.c.l.b16 %v1002
      %v1035 = vunpack.c.l.b16 %v1003
      %v1036 = vunpack.c.l.b16 %v1004
      %v1037 = vunpack.c.l.b16 %v1005
      %v1038 = vunpack.c.l.b16 %v1006
      %v1039 = vunpack.c.l.b16 %v1007
      %v1040 = vunpack.c.l.b16 %v1008
      %v1041 = vunpack.c.l.b16 %v1009
      %v1042 = vunpack.c.l.b16 %v1010
      %v1043 = vunpack.c.l.b16 %v1011
      %v1044 = vunpack.c.l.b16 %v1012
      %v1045 = vunpack.c.l.b16 %v1013
      %v1046 = vpack.c.b16 %v1031, %v1030
      %v1047 = vpack.c.b16 %v1033, %v1032
      %v1048 = vpack.c.b16 %v1035, %v1034
      %v1049 = vpack.c.b16 %v1037, %v1036
      %v1050 = vpack.c.b16 %v1039, %v1038
      %v1051 = vpack.c.b16 %v1041, %v1040
      %v1052 = vpack.c.b16 %v1043, %v1042
      %v1053 = vpack.c.b16 %v1045, %v1044
      %1062 = vmatprep.subr.bf16.mxu0 0
      %1063 = vmatpush1.bf16.msra.mxu0 %v1053
      %1064 = vmatprep.subr.bf16.mxu0 0
      %1065 = vmatpush1.bf16.msra.mxu0 %v1052
      %1066 = vmatprep.subr.bf16.mxu0 0
      %1067 = vmatpush1.bf16.msra.mxu0 %v1051
      %1068 = vmatprep.subr.bf16.mxu0 0
      %1069 = vmatpush1.bf16.msra.mxu0 %v1050
      %1070 = vmatprep.subr.bf16.mxu0 0
      %1071 = vmatpush1.bf16.msra.mxu0 %v1049
      %1072 = vmatprep.subr.bf16.mxu0 0
      %1073 = vmatpush1.bf16.msra.mxu0 %v1048
      %1074 = vmatprep.subr.bf16.mxu0 0
      %1075 = vmatpush1.bf16.msra.mxu0 %v1047
      %1076 = vmatprep.subr.bf16.mxu0 0
      %1077 = vmatpush1.bf16.msra.mxu0 %v1046
      %1078 = vmatprep.subr.bf16.mxu0 0
      %1079 = vmatpush2.bf16.msra.mxu0 0
      %1080 = vmatprep.subr.bf16.mxu0 0
      %1081 = vmatpush2.bf16.msra.mxu0 0
      %1082 = vmatprep.subr.bf16.mxu0 0
      %1083 = vmatpush2.bf16.msra.mxu0 0
      %1084 = vmatprep.subr.bf16.mxu0 0
      %1085 = vmatpush2.bf16.msra.mxu0 0
      %1086 = vmatprep.subr.bf16.mxu0 0
      %1087 = vmatpush2.bf16.msra.mxu0 0
      %1088 = vmatprep.subr.bf16.mxu0 0
      %1089 = vmatpush2.bf16.msra.mxu0 0
      %1090 = vmatprep.subr.bf16.mxu0 0
      %1091 = vmatpush2.bf16.msra.mxu0 0
      %1092 = vmatprep.subr.bf16.mxu0 0
      %1093 = vmatpush2.bf16.msra.mxu0 0
      %1094 = vmatprep.mubr.bf16.mxu0 0
      %1095 = vmatmul.mubr.bf16.gmra.mxu0 %v994
      %v1096 = vpop.f32.mrf.mxu0
      %v1097 = vadd.f32 0.0, %v1096
      %v1098 = vpop.f32.mrf.mxu0
      %v1099 = vpop.f32.mrf.mxu0
      %v1100 = vadd.f32 0.0, %v1099
      %v1101 = vpop.f32.mrf.mxu0
      %1102 = vmatprep.mubr.bf16.mxu0 0
      %1103 = vmatmul.mubr.bf16.gmra.mxu0 %v995
      %v1104 = vpop.f32.mrf.mxu0
      %v1105 = vadd.f32 0.0, %v1104
      %v1106 = vpop.f32.mrf.mxu0
      %v1107 = vpop.f32.mrf.mxu0
      %v1108 = vadd.f32 0.0, %v1107
      %v1109 = vpop.f32.mrf.mxu0
      %1110 = vmatprep.mubr.bf16.mxu0 0
      %1111 = vmatmul.mubr.bf16.gmra.mxu0 %v996
      %v1112 = vpop.f32.mrf.mxu0
      %v1113 = vadd.f32 0.0, %v1112
      %v1114 = vpop.f32.mrf.mxu0
      %v1115 = vpop.f32.mrf.mxu0
      %v1116 = vadd.f32 0.0, %v1115
      %v1117 = vpop.f32.mrf.mxu0
      %1118 = vmatprep.mubr.bf16.mxu0 0
      %1119 = vmatmul.mubr.bf16.gmra.mxu0 %v997
      %v1120 = vpop.f32.mrf.mxu0
      %v1121 = vadd.f32 0.0, %v1120
      %v1122 = vpop.f32.mrf.mxu0
      %v1123 = vpop.f32.mrf.mxu0
      %v1124 = vadd.f32 0.0, %v1123
      %v1125 = vpop.f32.mrf.mxu0
      %1126 = vdwg.mxu0
      %v1127 = vadd.f32 %v971, %v1097
      %v1128 = vadd.f32 %v972, %v1100
      %v1129 = vadd.f32 %v973, %v1105
      %v1130 = vadd.f32 %v974, %v1108
      %v1131 = vadd.f32 %v975, %v1113
      %v1132 = vadd.f32 %v976, %v1116
      %v1133 = vadd.f32 %v977, %v1121
      %v1134 = vadd.f32 %v978, %v1124
      %s1135 = scalar_lea.vmem %s492, 1 [#allocation2]
      %v1136 = vld [vmem:[%s1135] ss:$2 sm:$0xff]
      %s1137 = scalar_lea.vmem %s492, 49 [#allocation2]
      %v1138 = vld [vmem:[%s1137] ss:$2 sm:$0xff]
      %s1139 = scalar_lea.vmem %s492, 97 [#allocation2]
      %v1140 = vld [vmem:[%s1139] ss:$2 sm:$0xff]
      %s1141 = scalar_lea.vmem %s492, 145 [#allocation2]
      %v1142 = vld [vmem:[%s1141] ss:$2 sm:$0xff]
      %s1143 = scalar_lea.vmem %s492, 193 [#allocation2]
      %v1144 = vld [vmem:[%s1143] ss:$2 sm:$0xff]
      %s1145 = scalar_lea.vmem %s492, 241 [#allocation2]
      %v1146 = vld [vmem:[%s1145] ss:$2 sm:$0xff]
      %s1147 = scalar_lea.vmem %s492, 289 [#allocation2]
      %v1148 = vld [vmem:[%s1147] ss:$2 sm:$0xff]
      %s1149 = scalar_lea.vmem %s492, 337 [#allocation2]
      %v1150 = vld [vmem:[%s1149] ss:$2 sm:$0xff]
      %v1151 = vpack.c.bf16 %v1138, %v1136
      %v1152 = vpack.c.bf16 %v1142, %v1140
      %v1153 = vpack.c.bf16 %v1146, %v1144
      %v1154 = vpack.c.bf16 %v1150, %v1148
      %v1155 = vld [vmem:[%s3 + $0x100] sm:$0xf]
      %v1156 = vld [vmem:[%s3 + $0x104] sm:$0xf]
      %v1157 = vld [vmem:[%s3 + $0x108] sm:$0xf]
      %v1158 = vld [vmem:[%s3 + $0x10c] sm:$0xf]
      %v1159 = vld [vmem:[%s3 + $0x110] sm:$0xf]
      %v1160 = vld [vmem:[%s3 + $0x114] sm:$0xf]
      %v1161 = vld [vmem:[%s3 + $0x118] sm:$0xf]
      %v1162 = vld [vmem:[%s3 + $0x11c] sm:$0xf]
      %v1163 = vld [vmem:[%s3 + $0x120] sm:$0xf]
      %v1164 = vld [vmem:[%s3 + $0x124] sm:$0xf]
      %v1165 = vld [vmem:[%s3 + $0x128] sm:$0xf]
      %v1166 = vld [vmem:[%s3 + $0x12c] sm:$0xf]
      %v1167 = vld [vmem:[%s3 + $0x130] sm:$0xf]
      %v1168 = vld [vmem:[%s3 + $0x134] sm:$0xf]
      %v1169 = vld [vmem:[%s3 + $0x138] sm:$0xf]
      %v1170 = vld [vmem:[%s3 + $0x13c] sm:$0xf]
      %v1187 = vunpack.c.l.b16 %v1155
      %v1188 = vunpack.c.l.b16 %v1156
      %v1189 = vunpack.c.l.b16 %v1157
      %v1190 = vunpack.c.l.b16 %v1158
      %v1191 = vunpack.c.l.b16 %v1159
      %v1192 = vunpack.c.l.b16 %v1160
      %v1193 = vunpack.c.l.b16 %v1161
      %v1194 = vunpack.c.l.b16 %v1162
      %v1195 = vunpack.c.l.b16 %v1163
      %v1196 = vunpack.c.l.b16 %v1164
      %v1197 = vunpack.c.l.b16 %v1165
      %v1198 = vunpack.c.l.b16 %v1166
      %v1199 = vunpack.c.l.b16 %v1167
      %v1200 = vunpack.c.l.b16 %v1168
      %v1201 = vunpack.c.l.b16 %v1169
      %v1202 = vunpack.c.l.b16 %v1170
      %v1203 = vpack.c.b16 %v1188, %v1187
      %v1204 = vpack.c.b16 %v1190, %v1189
      %v1205 = vpack.c.b16 %v1192, %v1191
      %v1206 = vpack.c.b16 %v1194, %v1193
      %v1207 = vpack.c.b16 %v1196, %v1195
      %v1208 = vpack.c.b16 %v1198, %v1197
      %v1209 = vpack.c.b16 %v1200, %v1199
      %v1210 = vpack.c.b16 %v1202, %v1201
      %1219 = vmatprep.subr.bf16.mxu0 0
      %1220 = vmatpush1.bf16.msra.mxu0 %v1210
      %1221 = vmatprep.subr.bf16.mxu0 0
      %1222 = vmatpush1.bf16.msra.mxu0 %v1209
      %1223 = vmatprep.subr.bf16.mxu0 0
      %1224 = vmatpush1.bf16.msra.mxu0 %v1208
      %1225 = vmatprep.subr.bf16.mxu0 0
      %1226 = vmatpush1.bf16.msra.mxu0 %v1207
      %1227 = vmatprep.subr.bf16.mxu0 0
      %1228 = vmatpush1.bf16.msra.mxu0 %v1206
      %1229 = vmatprep.subr.bf16.mxu0 0
      %1230 = vmatpush1.bf16.msra.mxu0 %v1205
      %1231 = vmatprep.subr.bf16.mxu0 0
      %1232 = vmatpush1.bf16.msra.mxu0 %v1204
      %1233 = vmatprep.subr.bf16.mxu0 0
      %1234 = vmatpush1.bf16.msra.mxu0 %v1203
      %1235 = vmatprep.subr.bf16.mxu0 0
      %1236 = vmatpush2.bf16.msra.mxu0 0
      %1237 = vmatprep.subr.bf16.mxu0 0
      %1238 = vmatpush2.bf16.msra.mxu0 0
      %1239 = vmatprep.subr.bf16.mxu0 0
      %1240 = vmatpush2.bf16.msra.mxu0 0
      %1241 = vmatprep.subr.bf16.mxu0 0
      %1242 = vmatpush2.bf16.msra.mxu0 0
      %1243 = vmatprep.subr.bf16.mxu0 0
      %1244 = vmatpush2.bf16.msra.mxu0 0
      %1245 = vmatprep.subr.bf16.mxu0 0
      %1246 = vmatpush2.bf16.msra.mxu0 0
      %1247 = vmatprep.subr.bf16.mxu0 0
      %1248 = vmatpush2.bf16.msra.mxu0 0
      %1249 = vmatprep.subr.bf16.mxu0 0
      %1250 = vmatpush2.bf16.msra.mxu0 0
      %1251 = vmatprep.mubr.bf16.mxu0 0
      %1252 = vmatmul.mubr.bf16.gmra.mxu0 %v1151
      %v1253 = vpop.f32.mrf.mxu0
      %v1254 = vadd.f32 0.0, %v1253
      %v1255 = vpop.f32.mrf.mxu0
      %v1256 = vpop.f32.mrf.mxu0
      %v1257 = vadd.f32 0.0, %v1256
      %v1258 = vpop.f32.mrf.mxu0
      %1259 = vmatprep.mubr.bf16.mxu0 0
      %1260 = vmatmul.mubr.bf16.gmra.mxu0 %v1152
      %v1261 = vpop.f32.mrf.mxu0
      %v1262 = vadd.f32 0.0, %v1261
      %v1263 = vpop.f32.mrf.mxu0
      %v1264 = vpop.f32.mrf.mxu0
      %v1265 = vadd.f32 0.0, %v1264
      %v1266 = vpop.f32.mrf.mxu0
      %1267 = vmatprep.mubr.bf16.mxu0 0
      %1268 = vmatmul.mubr.bf16.gmra.mxu0 %v1153
      %v1269 = vpop.f32.mrf.mxu0
      %v1270 = vadd.f32 0.0, %v1269
      %v1271 = vpop.f32.mrf.mxu0
      %v1272 = vpop.f32.mrf.mxu0
      %v1273 = vadd.f32 0.0, %v1272
      %v1274 = vpop.f32.mrf.mxu0
      %1275 = vmatprep.mubr.bf16.mxu0 0
      %1276 = vmatmul.mubr.bf16.gmra.mxu0 %v1154
      %v1277 = vpop.f32.mrf.mxu0
      %v1278 = vadd.f32 0.0, %v1277
      %v1279 = vpop.f32.mrf.mxu0
      %v1280 = vpop.f32.mrf.mxu0
      %v1281 = vadd.f32 0.0, %v1280
      %v1282 = vpop.f32.mrf.mxu0
      %1283 = vdwg.mxu0
      %v1284 = vadd.f32 %v1127, %v1254
      %v1285 = vadd.f32 %v1128, %v1257
      %v1286 = vadd.f32 %v1129, %v1262
      %v1287 = vadd.f32 %v1130, %v1265
      %v1288 = vadd.f32 %v1131, %v1270
      %v1289 = vadd.f32 %v1132, %v1273
      %v1290 = vadd.f32 %v1133, %v1278
      %v1291 = vadd.f32 %v1134, %v1281
      %s1292 = scalar_lea.vmem %s492, 2 [#allocation2]
      %v1293 = vld [vmem:[%s1292] ss:$2 sm:$0xff]
      %s1294 = scalar_lea.vmem %s492, 50 [#allocation2]
      %v1295 = vld [vmem:[%s1294] ss:$2 sm:$0xff]
      %s1296 = scalar_lea.vmem %s492, 98 [#allocation2]
      %v1297 = vld [vmem:[%s1296] ss:$2 sm:$0xff]
      %s1298 = scalar_lea.vmem %s492, 146 [#allocation2]
      %v1299 = vld [vmem:[%s1298] ss:$2 sm:$0xff]
      %s1300 = scalar_lea.vmem %s492, 194 [#allocation2]
      %v1301 = vld [vmem:[%s1300] ss:$2 sm:$0xff]
      %s1302 = scalar_lea.vmem %s492, 242 [#allocation2]
      %v1303 = vld [vmem:[%s1302] ss:$2 sm:$0xff]
      %s1304 = scalar_lea.vmem %s492, 290 [#allocation2]
      %v1305 = vld [vmem:[%s1304] ss:$2 sm:$0xff]
      %s1306 = scalar_lea.vmem %s492, 338 [#allocation2]
      %v1307 = vld [vmem:[%s1306] ss:$2 sm:$0xff]
      %v1308 = vpack.c.bf16 %v1295, %v1293
      %v1309 = vpack.c.bf16 %v1299, %v1297
      %v1310 = vpack.c.bf16 %v1303, %v1301
      %v1311 = vpack.c.bf16 %v1307, %v1305
      %v1312 = vld [vmem:[%s3 + $0x140] sm:$0xf]
      %v1313 = vld [vmem:[%s3 + $0x144] sm:$0xf]
      %v1314 = vld [vmem:[%s3 + $0x148] sm:$0xf]
      %v1315 = vld [vmem:[%s3 + $0x14c] sm:$0xf]
      %v1316 = vld [vmem:[%s3 + $0x150] sm:$0xf]
      %v1317 = vld [vmem:[%s3 + $0x154] sm:$0xf]
      %v1318 = vld [vmem:[%s3 + $0x158] sm:$0xf]
      %v1319 = vld [vmem:[%s3 + $0x15c] sm:$0xf]
      %v1320 = vld [vmem:[%s3 + $0x160] sm:$0xf]
      %v1321 = vld [vmem:[%s3 + $0x164] sm:$0xf]
      %v1322 = vld [vmem:[%s3 + $0x168] sm:$0xf]
      %v1323 = vld [vmem:[%s3 + $0x16c] sm:$0xf]
      %v1324 = vld [vmem:[%s3 + $0x170] sm:$0xf]
      %v1325 = vld [vmem:[%s3 + $0x174] sm:$0xf]
      %v1326 = vld [vmem:[%s3 + $0x178] sm:$0xf]
      %v1327 = vld [vmem:[%s3 + $0x17c] sm:$0xf]
      %v1344 = vunpack.c.l.b16 %v1312
      %v1345 = vunpack.c.l.b16 %v1313
      %v1346 = vunpack.c.l.b16 %v1314
      %v1347 = vunpack.c.l.b16 %v1315
      %v1348 = vunpack.c.l.b16 %v1316
      %v1349 = vunpack.c.l.b16 %v1317
      %v1350 = vunpack.c.l.b16 %v1318
      %v1351 = vunpack.c.l.b16 %v1319
      %v1352 = vunpack.c.l.b16 %v1320
      %v1353 = vunpack.c.l.b16 %v1321
      %v1354 = vunpack.c.l.b16 %v1322
      %v1355 = vunpack.c.l.b16 %v1323
      %v1356 = vunpack.c.l.b16 %v1324
      %v1357 = vunpack.c.l.b16 %v1325
      %v1358 = vunpack.c.l.b16 %v1326
      %v1359 = vunpack.c.l.b16 %v1327
      %v1360 = vpack.c.b16 %v1345, %v1344
      %v1361 = vpack.c.b16 %v1347, %v1346
      %v1362 = vpack.c.b16 %v1349, %v1348
      %v1363 = vpack.c.b16 %v1351, %v1350
      %v1364 = vpack.c.b16 %v1353, %v1352
      %v1365 = vpack.c.b16 %v1355, %v1354
      %v1366 = vpack.c.b16 %v1357, %v1356
      %v1367 = vpack.c.b16 %v1359, %v1358
      %1376 = vmatprep.subr.bf16.mxu0 0
      %1377 = vmatpush1.bf16.msra.mxu0 %v1367
      %1378 = vmatprep.subr.bf16.mxu0 0
      %1379 = vmatpush1.bf16.msra.mxu0 %v1366
      %1380 = vmatprep.subr.bf16.mxu0 0
      %1381 = vmatpush1.bf16.msra.mxu0 %v1365
      %1382 = vmatprep.subr.bf16.mxu0 0
      %1383 = vmatpush1.bf16.msra.mxu0 %v1364
      %1384 = vmatprep.subr.bf16.mxu0 0
      %1385 = vmatpush1.bf16.msra.mxu0 %v1363
      %1386 = vmatprep.subr.bf16.mxu0 0
      %1387 = vmatpush1.bf16.msra.mxu0 %v1362
      %1388 = vmatprep.subr.bf16.mxu0 0
      %1389 = vmatpush1.bf16.msra.mxu0 %v1361
      %1390 = vmatprep.subr.bf16.mxu0 0
      %1391 = vmatpush1.bf16.msra.mxu0 %v1360
      %1392 = vmatprep.subr.bf16.mxu0 0
      %1393 = vmatpush2.bf16.msra.mxu0 0
      %1394 = vmatprep.subr.bf16.mxu0 0
      %1395 = vmatpush2.bf16.msra.mxu0 0
      %1396 = vmatprep.subr.bf16.mxu0 0
      %1397 = vmatpush2.bf16.msra.mxu0 0
      %1398 = vmatprep.subr.bf16.mxu0 0
      %1399 = vmatpush2.bf16.msra.mxu0 0
      %1400 = vmatprep.subr.bf16.mxu0 0
      %1401 = vmatpush2.bf16.msra.mxu0 0
      %1402 = vmatprep.subr.bf16.mxu0 0
      %1403 = vmatpush2.bf16.msra.mxu0 0
      %1404 = vmatprep.subr.bf16.mxu0 0
      %1405 = vmatpush2.bf16.msra.mxu0 0
      %1406 = vmatprep.subr.bf16.mxu0 0
      %1407 = vmatpush2.bf16.msra.mxu0 0
      %1408 = vmatprep.mubr.bf16.mxu0 0
      %1409 = vmatmul.mubr.bf16.gmra.mxu0 %v1308
      %v1410 = vpop.f32.mrf.mxu0
      %v1411 = vadd.f32 0.0, %v1410
      %v1412 = vpop.f32.mrf.mxu0
      %v1413 = vpop.f32.mrf.mxu0
      %v1414 = vadd.f32 0.0, %v1413
      %v1415 = vpop.f32.mrf.mxu0
      %1416 = vmatprep.mubr.bf16.mxu0 0
      %1417 = vmatmul.mubr.bf16.gmra.mxu0 %v1309
      %v1418 = vpop.f32.mrf.mxu0
      %v1419 = vadd.f32 0.0, %v1418
      %v1420 = vpop.f32.mrf.mxu0
      %v1421 = vpop.f32.mrf.mxu0
      %v1422 = vadd.f32 0.0, %v1421
      %v1423 = vpop.f32.mrf.mxu0
      %1424 = vmatprep.mubr.bf16.mxu0 0
      %1425 = vmatmul.mubr.bf16.gmra.mxu0 %v1310
      %v1426 = vpop.f32.mrf.mxu0
      %v1427 = vadd.f32 0.0, %v1426
      %v1428 = vpop.f32.mrf.mxu0
      %v1429 = vpop.f32.mrf.mxu0
      %v1430 = vadd.f32 0.0, %v1429
      %v1431 = vpop.f32.mrf.mxu0
      %1432 = vmatprep.mubr.bf16.mxu0 0
      %1433 = vmatmul.mubr.bf16.gmra.mxu0 %v1311
      %v1434 = vpop.f32.mrf.mxu0
      %v1435 = vadd.f32 0.0, %v1434
      %v1436 = vpop.f32.mrf.mxu0
      %v1437 = vpop.f32.mrf.mxu0
      %v1438 = vadd.f32 0.0, %v1437
      %v1439 = vpop.f32.mrf.mxu0
      %1440 = vdwg.mxu0
      %v1441 = vadd.f32 %v1284, %v1411
      %v1442 = vadd.f32 %v1285, %v1414
      %v1443 = vadd.f32 %v1286, %v1419
      %v1444 = vadd.f32 %v1287, %v1422
      %v1445 = vadd.f32 %v1288, %v1427
      %v1446 = vadd.f32 %v1289, %v1430
      %v1447 = vadd.f32 %v1290, %v1435
      %v1448 = vadd.f32 %v1291, %v1438
      %s1449 = scalar_lea.vmem [#allocation2], 48
      %v1450 = vld [vmem:[%s1449] ss:$2 sm:$0xff]
      %s1451 = scalar_lea.vmem %s1449, 48 [#allocation2]
      %v1452 = vld [vmem:[%s1451] ss:$2 sm:$0xff]
      %s1453 = scalar_lea.vmem %s1449, 96 [#allocation2]
      %v1454 = vld [vmem:[%s1453] ss:$2 sm:$0xff]
      %s1455 = scalar_lea.vmem %s1449, 144 [#allocation2]
      %v1456 = vld [vmem:[%s1455] ss:$2 sm:$0xff]
      %s1457 = scalar_lea.vmem %s1449, 192 [#allocation2]
      %v1458 = vld [vmem:[%s1457] ss:$2 sm:$0xff]
      %s1459 = scalar_lea.vmem %s1449, 240 [#allocation2]
      %v1460 = vld [vmem:[%s1459] ss:$2 sm:$0xff]
      %s1461 = scalar_lea.vmem %s1449, 288 [#allocation2]
      %v1462 = vld [vmem:[%s1461] ss:$2 sm:$0xff]
      %s1463 = scalar_lea.vmem %s1449, 336 [#allocation2]
      %v1464 = vld [vmem:[%s1463] ss:$2 sm:$0xff]
      %v1465 = vpack.c.bf16 %v1452, %v1450
      %v1466 = vpack.c.bf16 %v1456, %v1454
      %v1467 = vpack.c.bf16 %v1460, %v1458
      %v1468 = vpack.c.bf16 %v1464, %v1462
      %v1469 = vld [vmem:[%s3 + $0x180] sm:$0xf]
      %v1470 = vld [vmem:[%s3 + $0x184] sm:$0xf]
      %v1471 = vld [vmem:[%s3 + $0x188] sm:$0xf]
      %v1472 = vld [vmem:[%s3 + $0x18c] sm:$0xf]
      %v1473 = vld [vmem:[%s3 + $0x190] sm:$0xf]
      %v1474 = vld [vmem:[%s3 + $0x194] sm:$0xf]
      %v1475 = vld [vmem:[%s3 + $0x198] sm:$0xf]
      %v1476 = vld [vmem:[%s3 + $0x19c] sm:$0xf]
      %v1477 = vld [vmem:[%s3 + $0x1a0] sm:$0xf]
      %v1478 = vld [vmem:[%s3 + $0x1a4] sm:$0xf]
      %v1479 = vld [vmem:[%s3 + $0x1a8] sm:$0xf]
      %v1480 = vld [vmem:[%s3 + $0x1ac] sm:$0xf]
      %v1481 = vld [vmem:[%s3 + $0x1b0] sm:$0xf]
      %v1482 = vld [vmem:[%s3 + $0x1b4] sm:$0xf]
      %v1483 = vld [vmem:[%s3 + $0x1b8] sm:$0xf]
      %v1484 = vld [vmem:[%s3 + $0x1bc] sm:$0xf]
      %v1501 = vunpack.c.l.b16 %v1469
      %v1502 = vunpack.c.l.b16 %v1470
      %v1503 = vunpack.c.l.b16 %v1471
      %v1504 = vunpack.c.l.b16 %v1472
      %v1505 = vunpack.c.l.b16 %v1473
      %v1506 = vunpack.c.l.b16 %v1474
      %v1507 = vunpack.c.l.b16 %v1475
      %v1508 = vunpack.c.l.b16 %v1476
      %v1509 = vunpack.c.l.b16 %v1477
      %v1510 = vunpack.c.l.b16 %v1478
      %v1511 = vunpack.c.l.b16 %v1479
      %v1512 = vunpack.c.l.b16 %v1480
      %v1513 = vunpack.c.l.b16 %v1481
      %v1514 = vunpack.c.l.b16 %v1482
      %v1515 = vunpack.c.l.b16 %v1483
      %v1516 = vunpack.c.l.b16 %v1484
      %v1517 = vpack.c.b16 %v1502, %v1501
      %v1518 = vpack.c.b16 %v1504, %v1503
      %v1519 = vpack.c.b16 %v1506, %v1505
      %v1520 = vpack.c.b16 %v1508, %v1507
      %v1521 = vpack.c.b16 %v1510, %v1509
      %v1522 = vpack.c.b16 %v1512, %v1511
      %v1523 = vpack.c.b16 %v1514, %v1513
      %v1524 = vpack.c.b16 %v1516, %v1515
      %1533 = vmatprep.subr.bf16.mxu0 0
      %1534 = vmatpush1.bf16.msra.mxu0 %v1524
      %1535 = vmatprep.subr.bf16.mxu0 0
      %1536 = vmatpush1.bf16.msra.mxu0 %v1523
      %1537 = vmatprep.subr.bf16.mxu0 0
      %1538 = vmatpush1.bf16.msra.mxu0 %v1522
      %1539 = vmatprep.subr.bf16.mxu0 0
      %1540 = vmatpush1.bf16.msra.mxu0 %v1521
      %1541 = vmatprep.subr.bf16.mxu0 0
      %1542 = vmatpush1.bf16.msra.mxu0 %v1520
      %1543 = vmatprep.subr.bf16.mxu0 0
      %1544 = vmatpush1.bf16.msra.mxu0 %v1519
      %1545 = vmatprep.subr.bf16.mxu0 0
      %1546 = vmatpush1.bf16.msra.mxu0 %v1518
      %1547 = vmatprep.subr.bf16.mxu0 0
      %1548 = vmatpush1.bf16.msra.mxu0 %v1517
      %1549 = vmatprep.subr.bf16.mxu0 0
      %1550 = vmatpush2.bf16.msra.mxu0 0
      %1551 = vmatprep.subr.bf16.mxu0 0
      %1552 = vmatpush2.bf16.msra.mxu0 0
      %1553 = vmatprep.subr.bf16.mxu0 0
      %1554 = vmatpush2.bf16.msra.mxu0 0
      %1555 = vmatprep.subr.bf16.mxu0 0
      %1556 = vmatpush2.bf16.msra.mxu0 0
      %1557 = vmatprep.subr.bf16.mxu0 0
      %1558 = vmatpush2.bf16.msra.mxu0 0
      %1559 = vmatprep.subr.bf16.mxu0 0
      %1560 = vmatpush2.bf16.msra.mxu0 0
      %1561 = vmatprep.subr.bf16.mxu0 0
      %1562 = vmatpush2.bf16.msra.mxu0 0
      %1563 = vmatprep.subr.bf16.mxu0 0
      %1564 = vmatpush2.bf16.msra.mxu0 0
      %1565 = vmatprep.mubr.bf16.mxu0 0
      %1566 = vmatmul.mubr.bf16.gmra.mxu0 %v1465
      %v1567 = vpop.f32.mrf.mxu0
      %v1568 = vadd.f32 0.0, %v1567
      %v1569 = vpop.f32.mrf.mxu0
      %v1570 = vpop.f32.mrf.mxu0
      %v1571 = vadd.f32 0.0, %v1570
      %v1572 = vpop.f32.mrf.mxu0
      %1573 = vmatprep.mubr.bf16.mxu0 0
      %1574 = vmatmul.mubr.bf16.gmra.mxu0 %v1466
      %v1575 = vpop.f32.mrf.mxu0
      %v1576 = vadd.f32 0.0, %v1575
      %v1577 = vpop.f32.mrf.mxu0
      %v1578 = vpop.f32.mrf.mxu0
      %v1579 = vadd.f32 0.0, %v1578
      %v1580 = vpop.f32.mrf.mxu0
      %1581 = vmatprep.mubr.bf16.mxu0 0
      %1582 = vmatmul.mubr.bf16.gmra.mxu0 %v1467
      %v1583 = vpop.f32.mrf.mxu0
      %v1584 = vadd.f32 0.0, %v1583
      %v1585 = vpop.f32.mrf.mxu0
      %v1586 = vpop.f32.mrf.mxu0
      %v1587 = vadd.f32 0.0, %v1586
      %v1588 = vpop.f32.mrf.mxu0
      %1589 = vmatprep.mubr.bf16.mxu0 0
      %1590 = vmatmul.mubr.bf16.gmra.mxu0 %v1468
      %v1591 = vpop.f32.mrf.mxu0
      %v1592 = vadd.f32 0.0, %v1591
      %v1593 = vpop.f32.mrf.mxu0
      %v1594 = vpop.f32.mrf.mxu0
      %v1595 = vadd.f32 0.0, %v1594
      %v1596 = vpop.f32.mrf.mxu0
      %1597 = vdwg.mxu0
      %v1598 = vadd.f32 %v1441, %v1568
      %v1599 = vadd.f32 %v1442, %v1571
      %v1600 = vadd.f32 %v1443, %v1576
      %v1601 = vadd.f32 %v1444, %v1579
      %v1602 = vadd.f32 %v1445, %v1584
      %v1603 = vadd.f32 %v1446, %v1587
      %v1604 = vadd.f32 %v1447, %v1592
      %v1605 = vadd.f32 %v1448, %v1595
      %s1606 = scalar_lea.vmem %s1449, 1 [#allocation2]
      %v1607 = vld [vmem:[%s1606] ss:$2 sm:$0xff]
      %s1608 = scalar_lea.vmem %s1449, 49 [#allocation2]
      %v1609 = vld [vmem:[%s1608] ss:$2 sm:$0xff]
      %s1610 = scalar_lea.vmem %s1449, 97 [#allocation2]
      %v1611 = vld [vmem:[%s1610] ss:$2 sm:$0xff]
      %s1612 = scalar_lea.vmem %s1449, 145 [#allocation2]
      %v1613 = vld [vmem:[%s1612] ss:$2 sm:$0xff]
      %s1614 = scalar_lea.vmem %s1449, 193 [#allocation2]
      %v1615 = vld [vmem:[%s1614] ss:$2 sm:$0xff]
      %s1616 = scalar_lea.vmem %s1449, 241 [#allocation2]
      %v1617 = vld [vmem:[%s1616] ss:$2 sm:$0xff]
      %s1618 = scalar_lea.vmem %s1449, 289 [#allocation2]
      %v1619 = vld [vmem:[%s1618] ss:$2 sm:$0xff]
      %s1620 = scalar_lea.vmem %s1449, 337 [#allocation2]
      %v1621 = vld [vmem:[%s1620] ss:$2 sm:$0xff]
      %v1622 = vpack.c.bf16 %v1609, %v1607
      %v1623 = vpack.c.bf16 %v1613, %v1611
      %v1624 = vpack.c.bf16 %v1617, %v1615
      %v1625 = vpack.c.bf16 %v1621, %v1619
      %v1626 = vld [vmem:[%s3 + $0x1c0] sm:$0xf]
      %v1627 = vld [vmem:[%s3 + $0x1c4] sm:$0xf]
      %v1628 = vld [vmem:[%s3 + $0x1c8] sm:$0xf]
      %v1629 = vld [vmem:[%s3 + $0x1cc] sm:$0xf]
      %v1630 = vld [vmem:[%s3 + $0x1d0] sm:$0xf]
      %v1631 = vld [vmem:[%s3 + $0x1d4] sm:$0xf]
      %v1632 = vld [vmem:[%s3 + $0x1d8] sm:$0xf]
      %v1633 = vld [vmem:[%s3 + $0x1dc] sm:$0xf]
      %v1634 = vld [vmem:[%s3 + $0x1e0] sm:$0xf]
      %v1635 = vld [vmem:[%s3 + $0x1e4] sm:$0xf]
      %v1636 = vld [vmem:[%s3 + $0x1e8] sm:$0xf]
      %v1637 = vld [vmem:[%s3 + $0x1ec] sm:$0xf]
      %v1638 = vld [vmem:[%s3 + $0x1f0] sm:$0xf]
      %v1639 = vld [vmem:[%s3 + $0x1f4] sm:$0xf]
      %v1640 = vld [vmem:[%s3 + $0x1f8] sm:$0xf]
      %v1641 = vld [vmem:[%s3 + $0x1fc] sm:$0xf]
      %v1658 = vunpack.c.l.b16 %v1626
      %v1659 = vunpack.c.l.b16 %v1627
      %v1660 = vunpack.c.l.b16 %v1628
      %v1661 = vunpack.c.l.b16 %v1629
      %v1662 = vunpack.c.l.b16 %v1630
      %v1663 = vunpack.c.l.b16 %v1631
      %v1664 = vunpack.c.l.b16 %v1632
      %v1665 = vunpack.c.l.b16 %v1633
      %v1666 = vunpack.c.l.b16 %v1634
      %v1667 = vunpack.c.l.b16 %v1635
      %v1668 = vunpack.c.l.b16 %v1636
      %v1669 = vunpack.c.l.b16 %v1637
      %v1670 = vunpack.c.l.b16 %v1638
      %v1671 = vunpack.c.l.b16 %v1639
      %v1672 = vunpack.c.l.b16 %v1640
      %v1673 = vunpack.c.l.b16 %v1641
      %v1674 = vpack.c.b16 %v1659, %v1658
      %v1675 = vpack.c.b16 %v1661, %v1660
      %v1676 = vpack.c.b16 %v1663, %v1662
      %v1677 = vpack.c.b16 %v1665, %v1664
      %v1678 = vpack.c.b16 %v1667, %v1666
      %v1679 = vpack.c.b16 %v1669, %v1668
      %v1680 = vpack.c.b16 %v1671, %v1670
      %v1681 = vpack.c.b16 %v1673, %v1672
      %1690 = vmatprep.subr.bf16.mxu0 0
      %1691 = vmatpush1.bf16.msra.mxu0 %v1681
      %1692 = vmatprep.subr.bf16.mxu0 0
      %1693 = vmatpush1.bf16.msra.mxu0 %v1680
      %1694 = vmatprep.subr.bf16.mxu0 0
      %1695 = vmatpush1.bf16.msra.mxu0 %v1679
      %1696 = vmatprep.subr.bf16.mxu0 0
      %1697 = vmatpush1.bf16.msra.mxu0 %v1678
      %1698 = vmatprep.subr.bf16.mxu0 0
      %1699 = vmatpush1.bf16.msra.mxu0 %v1677
      %1700 = vmatprep.subr.bf16.mxu0 0
      %1701 = vmatpush1.bf16.msra.mxu0 %v1676
      %1702 = vmatprep.subr.bf16.mxu0 0
      %1703 = vmatpush1.bf16.msra.mxu0 %v1675
      %1704 = vmatprep.subr.bf16.mxu0 0
      %1705 = vmatpush1.bf16.msra.mxu0 %v1674
      %1706 = vmatprep.subr.bf16.mxu0 0
      %1707 = vmatpush2.bf16.msra.mxu0 0
      %1708 = vmatprep.subr.bf16.mxu0 0
      %1709 = vmatpush2.bf16.msra.mxu0 0
      %1710 = vmatprep.subr.bf16.mxu0 0
      %1711 = vmatpush2.bf16.msra.mxu0 0
      %1712 = vmatprep.subr.bf16.mxu0 0
      %1713 = vmatpush2.bf16.msra.mxu0 0
      %1714 = vmatprep.subr.bf16.mxu0 0
      %1715 = vmatpush2.bf16.msra.mxu0 0
      %1716 = vmatprep.subr.bf16.mxu0 0
      %1717 = vmatpush2.bf16.msra.mxu0 0
      %1718 = vmatprep.subr.bf16.mxu0 0
      %1719 = vmatpush2.bf16.msra.mxu0 0
      %1720 = vmatprep.subr.bf16.mxu0 0
      %1721 = vmatpush2.bf16.msra.mxu0 0
      %1722 = vmatprep.mubr.bf16.mxu0 0
      %1723 = vmatmul.mubr.bf16.gmra.mxu0 %v1622
      %v1724 = vpop.f32.mrf.mxu0
      %v1725 = vadd.f32 0.0, %v1724
      %v1726 = vpop.f32.mrf.mxu0
      %v1727 = vpop.f32.mrf.mxu0
      %v1728 = vadd.f32 0.0, %v1727
      %v1729 = vpop.f32.mrf.mxu0
      %1730 = vmatprep.mubr.bf16.mxu0 0
      %1731 = vmatmul.mubr.bf16.gmra.mxu0 %v1623
      %v1732 = vpop.f32.mrf.mxu0
      %v1733 = vadd.f32 0.0, %v1732
      %v1734 = vpop.f32.mrf.mxu0
      %v1735 = vpop.f32.mrf.mxu0
      %v1736 = vadd.f32 0.0, %v1735
      %v1737 = vpop.f32.mrf.mxu0
      %1738 = vmatprep.mubr.bf16.mxu0 0
      %1739 = vmatmul.mubr.bf16.gmra.mxu0 %v1624
      %v1740 = vpop.f32.mrf.mxu0
      %v1741 = vadd.f32 0.0, %v1740
      %v1742 = vpop.f32.mrf.mxu0
      %v1743 = vpop.f32.mrf.mxu0
      %v1744 = vadd.f32 0.0, %v1743
      %v1745 = vpop.f32.mrf.mxu0
      %1746 = vmatprep.mubr.bf16.mxu0 0
      %1747 = vmatmul.mubr.bf16.gmra.mxu0 %v1625
      %v1748 = vpop.f32.mrf.mxu0
      %v1749 = vadd.f32 0.0, %v1748
      %v1750 = vpop.f32.mrf.mxu0
      %v1751 = vpop.f32.mrf.mxu0
      %v1752 = vadd.f32 0.0, %v1751
      %v1753 = vpop.f32.mrf.mxu0
      %1754 = vdwg.mxu0
      %v1755 = vadd.f32 %v1598, %v1725
      %v1756 = vadd.f32 %v1599, %v1728
      %v1757 = vadd.f32 %v1600, %v1733
      %v1758 = vadd.f32 %v1601, %v1736
      %v1759 = vadd.f32 %v1602, %v1741
      %v1760 = vadd.f32 %v1603, %v1744
      %v1761 = vadd.f32 %v1604, %v1749
      %v1762 = vadd.f32 %v1605, %v1752
      %s1763 = scalar_lea.vmem %s1449, 2 [#allocation2]
      %v1764 = vld [vmem:[%s1763] ss:$2 sm:$0xff]
      %s1765 = scalar_lea.vmem %s1449, 50 [#allocation2]
      %v1766 = vld [vmem:[%s1765] ss:$2 sm:$0xff]
      %s1767 = scalar_lea.vmem %s1449, 98 [#allocation2]
      %v1768 = vld [vmem:[%s1767] ss:$2 sm:$0xff]
      %s1769 = scalar_lea.vmem %s1449, 146 [#allocation2]
      %v1770 = vld [vmem:[%s1769] ss:$2 sm:$0xff]
      %s1771 = scalar_lea.vmem %s1449, 194 [#allocation2]
      %v1772 = vld [vmem:[%s1771] ss:$2 sm:$0xff]
      %s1773 = scalar_lea.vmem %s1449, 242 [#allocation2]
      %v1774 = vld [vmem:[%s1773] ss:$2 sm:$0xff]
      %s1775 = scalar_lea.vmem %s1449, 290 [#allocation2]
      %v1776 = vld [vmem:[%s1775] ss:$2 sm:$0xff]
      %s1777 = scalar_lea.vmem %s1449, 338 [#allocation2]
      %v1778 = vld [vmem:[%s1777] ss:$2 sm:$0xff]
      %v1779 = vpack.c.bf16 %v1766, %v1764
      %v1780 = vpack.c.bf16 %v1770, %v1768
      %v1781 = vpack.c.bf16 %v1774, %v1772
      %v1782 = vpack.c.bf16 %v1778, %v1776
      %v1783 = vld [vmem:[%s3 + $0x200] sm:$0xf]
      %v1784 = vld [vmem:[%s3 + $0x204] sm:$0xf]
      %v1785 = vld [vmem:[%s3 + $0x208] sm:$0xf]
      %v1786 = vld [vmem:[%s3 + $0x20c] sm:$0xf]
      %v1787 = vld [vmem:[%s3 + $0x210] sm:$0xf]
      %v1788 = vld [vmem:[%s3 + $0x214] sm:$0xf]
      %v1789 = vld [vmem:[%s3 + $0x218] sm:$0xf]
      %v1790 = vld [vmem:[%s3 + $0x21c] sm:$0xf]
      %v1791 = vld [vmem:[%s3 + $0x220] sm:$0xf]
      %v1792 = vld [vmem:[%s3 + $0x224] sm:$0xf]
      %v1793 = vld [vmem:[%s3 + $0x228] sm:$0xf]
      %v1794 = vld [vmem:[%s3 + $0x22c] sm:$0xf]
      %v1795 = vld [vmem:[%s3 + $0x230] sm:$0xf]
      %v1796 = vld [vmem:[%s3 + $0x234] sm:$0xf]
      %v1797 = vld [vmem:[%s3 + $0x238] sm:$0xf]
      %v1798 = vld [vmem:[%s3 + $0x23c] sm:$0xf]
      %v1815 = vunpack.c.l.b16 %v1783
      %v1816 = vunpack.c.l.b16 %v1784
      %v1817 = vunpack.c.l.b16 %v1785
      %v1818 = vunpack.c.l.b16 %v1786
      %v1819 = vunpack.c.l.b16 %v1787
      %v1820 = vunpack.c.l.b16 %v1788
      %v1821 = vunpack.c.l.b16 %v1789
      %v1822 = vunpack.c.l.b16 %v1790
      %v1823 = vunpack.c.l.b16 %v1791
      %v1824 = vunpack.c.l.b16 %v1792
      %v1825 = vunpack.c.l.b16 %v1793
      %v1826 = vunpack.c.l.b16 %v1794
      %v1827 = vunpack.c.l.b16 %v1795
      %v1828 = vunpack.c.l.b16 %v1796
      %v1829 = vunpack.c.l.b16 %v1797
      %v1830 = vunpack.c.l.b16 %v1798
      %v1831 = vpack.c.b16 %v1816, %v1815
      %v1832 = vpack.c.b16 %v1818, %v1817
      %v1833 = vpack.c.b16 %v1820, %v1819
      %v1834 = vpack.c.b16 %v1822, %v1821
      %v1835 = vpack.c.b16 %v1824, %v1823
      %v1836 = vpack.c.b16 %v1826, %v1825
      %v1837 = vpack.c.b16 %v1828, %v1827
      %v1838 = vpack.c.b16 %v1830, %v1829
      %1847 = vmatprep.subr.bf16.mxu0 0
      %1848 = vmatpush1.bf16.msra.mxu0 %v1838
      %1849 = vmatprep.subr.bf16.mxu0 0
      %1850 = vmatpush1.bf16.msra.mxu0 %v1837
      %1851 = vmatprep.subr.bf16.mxu0 0
      %1852 = vmatpush1.bf16.msra.mxu0 %v1836
      %1853 = vmatprep.subr.bf16.mxu0 0
      %1854 = vmatpush1.bf16.msra.mxu0 %v1835
      %1855 = vmatprep.subr.bf16.mxu0 0
      %1856 = vmatpush1.bf16.msra.mxu0 %v1834
      %1857 = vmatprep.subr.bf16.mxu0 0
      %1858 = vmatpush1.bf16.msra.mxu0 %v1833
      %1859 = vmatprep.subr.bf16.mxu0 0
      %1860 = vmatpush1.bf16.msra.mxu0 %v1832
      %1861 = vmatprep.subr.bf16.mxu0 0
      %1862 = vmatpush1.bf16.msra.mxu0 %v1831
      %1863 = vmatprep.subr.bf16.mxu0 0
      %1864 = vmatpush2.bf16.msra.mxu0 0
      %1865 = vmatprep.subr.bf16.mxu0 0
      %1866 = vmatpush2.bf16.msra.mxu0 0
      %1867 = vmatprep.subr.bf16.mxu0 0
      %1868 = vmatpush2.bf16.msra.mxu0 0
      %1869 = vmatprep.subr.bf16.mxu0 0
      %1870 = vmatpush2.bf16.msra.mxu0 0
      %1871 = vmatprep.subr.bf16.mxu0 0
      %1872 = vmatpush2.bf16.msra.mxu0 0
      %1873 = vmatprep.subr.bf16.mxu0 0
      %1874 = vmatpush2.bf16.msra.mxu0 0
      %1875 = vmatprep.subr.bf16.mxu0 0
      %1876 = vmatpush2.bf16.msra.mxu0 0
      %1877 = vmatprep.subr.bf16.mxu0 0
      %1878 = vmatpush2.bf16.msra.mxu0 0
      %1879 = vmatprep.mubr.bf16.mxu0 0
      %1880 = vmatmul.mubr.bf16.gmra.mxu0 %v1779
      %v1881 = vpop.f32.mrf.mxu0
      %v1882 = vadd.f32 0.0, %v1881
      %v1883 = vpop.f32.mrf.mxu0
      %v1884 = vpop.f32.mrf.mxu0
      %v1885 = vadd.f32 0.0, %v1884
      %v1886 = vpop.f32.mrf.mxu0
      %1887 = vmatprep.mubr.bf16.mxu0 0
      %1888 = vmatmul.mubr.bf16.gmra.mxu0 %v1780
      %v1889 = vpop.f32.mrf.mxu0
      %v1890 = vadd.f32 0.0, %v1889
      %v1891 = vpop.f32.mrf.mxu0
      %v1892 = vpop.f32.mrf.mxu0
      %v1893 = vadd.f32 0.0, %v1892
      %v1894 = vpop.f32.mrf.mxu0
      %1895 = vmatprep.mubr.bf16.mxu0 0
      %1896 = vmatmul.mubr.bf16.gmra.mxu0 %v1781
      %v1897 = vpop.f32.mrf.mxu0
      %v1898 = vadd.f32 0.0, %v1897
      %v1899 = vpop.f32.mrf.mxu0
      %v1900 = vpop.f32.mrf.mxu0
      %v1901 = vadd.f32 0.0, %v1900
      %v1902 = vpop.f32.mrf.mxu0
      %1903 = vmatprep.mubr.bf16.mxu0 0
      %1904 = vmatmul.mubr.bf16.gmra.mxu0 %v1782
      %v1905 = vpop.f32.mrf.mxu0
      %v1906 = vadd.f32 0.0, %v1905
      %v1907 = vpop.f32.mrf.mxu0
      %v1908 = vpop.f32.mrf.mxu0
      %v1909 = vadd.f32 0.0, %v1908
      %v1910 = vpop.f32.mrf.mxu0
      %1911 = vdwg.mxu0
      %v1912 = vadd.f32 %v1755, %v1882
      %v1913 = vadd.f32 %v1756, %v1885
      %v1914 = vadd.f32 %v1757, %v1890
      %v1915 = vadd.f32 %v1758, %v1893
      %v1916 = vadd.f32 %v1759, %v1898
      %v1917 = vadd.f32 %v1760, %v1901
      %v1918 = vadd.f32 %v1761, %v1906
      %v1919 = vadd.f32 %v1762, %v1909
      %v1920 = vld [vmem:[%s4] sm:$0x1]
      %v1922 = vlaneseq
      %v1923 = vshrl.u32 %v1922, 7
      %v1924 = vsub.s32 0, %v1923
      %v1925 = vrot.slane %v1920, %v1924
      %v1927 = vmul.f32 %v1912, %v1925
      %v1928 = vmul.f32 %v1913, %v1925
      %v1929 = vmul.f32 %v1914, %v1925
      %v1930 = vmul.f32 %v1915, %v1925
      %v1931 = vmul.f32 %v1916, %v1925
      %v1932 = vmul.f32 %v1917, %v1925
      %v1933 = vmul.f32 %v1918, %v1925
      %v1934 = vmul.f32 %v1919, %v1925
      %v1935 = vld [vmem:[%s5] sm:$0x1]
      %v1937 = vlaneseq
      %v1938 = vshrl.u32 %v1937, 7
      %v1939 = vsub.s32 0, %v1938
      %v1940 = vrot.slane %v1935, %v1939
      %v1942 = vadd.f32 %v1927, %v1940
      %v1943 = vadd.f32 %v1928, %v1940
      %v1944 = vadd.f32 %v1929, %v1940
      %v1945 = vadd.f32 %v1930, %v1940
      %v1946 = vadd.f32 %v1931, %v1940
      %v1947 = vadd.f32 %v1932, %v1940
      %v1948 = vadd.f32 %v1933, %v1940
      %v1949 = vadd.f32 %v1934, %v1940
      %v1950 = vmax.f32 %v1942, 0.0
      %v1951 = vmax.f32 %v1943, 0.0
      %v1952 = vmax.f32 %v1944, 0.0
      %v1953 = vmax.f32 %v1945, 0.0
      %v1954 = vmax.f32 %v1946, 0.0
      %v1955 = vmax.f32 %v1947, 0.0
      %v1956 = vmax.f32 %v1948, 0.0
      %v1957 = vmax.f32 %v1949, 0.0
      %1958 = vst [vmem:[#allocation3] sm:$0xff] 0.0
      %1959 = vst [vmem:[#allocation3 + $0x8] sm:$0x3] 0.0
      %s1960 = scalar_lea.vmem [#allocation3], 144
      %1961 = vst [vmem:[%s1960] sm:$0xff] 0.0
      %1962 = vst [vmem:[%s1960 + $0x8] sm:$0x3] 0.0
      %1963 = vst [vmem:[#allocation3] sm:$0x1] 0.0
      %1964 = vst [vmem:[#allocation3 + $0x10] sm:$0x1] 0.0
      %1965 = vst [vmem:[#allocation3 + $0x20] sm:$0x1] 0.0
      %1966 = vst [vmem:[#allocation3 + $0x30] sm:$0x1] 0.0
      %1967 = vst [vmem:[#allocation3 + $0x40] sm:$0x1] 0.0
      %1968 = vst [vmem:[#allocation3 + $0x50] sm:$0x1] 0.0
      %1969 = vst [vmem:[#allocation3 + $0x60] sm:$0x1] 0.0
      %1970 = vst [vmem:[#allocation3 + $0x70] sm:$0x1] 0.0
      %1971 = vst [vmem:[#allocation3 + $0x80] sm:$0x1] 0.0
      %1972 = vst [vmem:[#allocation3 + $0x90] sm:$0x1] 0.0
      %1973 = vst [vmem:[#allocation3 + $0x9] sm:$0x1] 0.0
      %1974 = vst [vmem:[#allocation3 + $0x19] sm:$0x1] 0.0
      %1975 = vst [vmem:[#allocation3 + $0x29] sm:$0x1] 0.0
      %1976 = vst [vmem:[#allocation3 + $0x39] sm:$0x1] 0.0
      %1977 = vst [vmem:[#allocation3 + $0x49] sm:$0x1] 0.0
      %1978 = vst [vmem:[#allocation3 + $0x59] sm:$0x1] 0.0
      %1979 = vst [vmem:[#allocation3 + $0x69] sm:$0x1] 0.0
      %1980 = vst [vmem:[#allocation3 + $0x79] sm:$0x1] 0.0
      %1981 = vst [vmem:[#allocation3 + $0x89] sm:$0x1] 0.0
      %1982 = vst [vmem:[#allocation3 + $0x99] sm:$0x1] 0.0
      %s1983 = scalar_lea.vmem [#allocation3], 16
      %1984 = vst [vmem:[%s1983 + $0x1] sm:$0xff] %v1950
      %1985 = vst [vmem:[%s1983 + $0x11] sm:$0xff] %v1951
      %1986 = vst [vmem:[%s1983 + $0x21] sm:$0xff] %v1952
      %1987 = vst [vmem:[%s1983 + $0x31] sm:$0xff] %v1953
      %1988 = vst [vmem:[%s1983 + $0x41] sm:$0xff] %v1954
      %1989 = vst [vmem:[%s1983 + $0x51] sm:$0xff] %v1955
      %1990 = vst [vmem:[%s1983 + $0x61] sm:$0xff] %v1956
      %1991 = vst [vmem:[%s1983 + $0x71] sm:$0xff] %v1957
      %v1992 = vld [vmem:[%s1135] ss:$2 sm:$0xff]
      %v1993 = vld [vmem:[%s1137] ss:$2 sm:$0xff]
      %v1994 = vld [vmem:[%s1139] ss:$2 sm:$0xff]
      %v1995 = vld [vmem:[%s1141] ss:$2 sm:$0xff]
      %v1996 = vld [vmem:[%s1143] ss:$2 sm:$0xff]
      %v1997 = vld [vmem:[%s1145] ss:$2 sm:$0xff]
      %v1998 = vld [vmem:[%s1147] ss:$2 sm:$0xff]
      %v1999 = vld [vmem:[%s1149] ss:$2 sm:$0xff]
      %v2000 = vpack.c.bf16 %v1993, %v1992
      %v2001 = vpack.c.bf16 %v1995, %v1994
      %v2002 = vpack.c.bf16 %v1997, %v1996
      %v2003 = vpack.c.bf16 %v1999, %v1998
      %v2004 = vld [vmem:[%s7] sm:$0xf]
      %v2005 = vld [vmem:[%s7 + $0x4] sm:$0xf]
      %v2006 = vld [vmem:[%s7 + $0x8] sm:$0xf]
      %v2007 = vld [vmem:[%s7 + $0xc] sm:$0xf]
      %v2008 = vld [vmem:[%s7 + $0x10] sm:$0xf]
      %v2009 = vld [vmem:[%s7 + $0x14] sm:$0xf]
      %v2010 = vld [vmem:[%s7 + $0x18] sm:$0xf]
      %v2011 = vld [vmem:[%s7 + $0x1c] sm:$0xf]
      %v2012 = vld [vmem:[%s7 + $0x20] sm:$0xf]
      %v2013 = vld [vmem:[%s7 + $0x24] sm:$0xf]
      %v2014 = vld [vmem:[%s7 + $0x28] sm:$0xf]
      %v2015 = vld [vmem:[%s7 + $0x2c] sm:$0xf]
      %v2016 = vld [vmem:[%s7 + $0x30] sm:$0xf]
      %v2017 = vld [vmem:[%s7 + $0x34] sm:$0xf]
      %v2018 = vld [vmem:[%s7 + $0x38] sm:$0xf]
      %v2019 = vld [vmem:[%s7 + $0x3c] sm:$0xf]
      %v2020 = vld [vmem:[#allocation3] sm:$0xff]
      %v2021 = vld [vmem:[#allocation3 + $0x10] sm:$0xff]
      %v2022 = vld [vmem:[#allocation3 + $0x20] sm:$0xff]
      %v2023 = vld [vmem:[#allocation3 + $0x30] sm:$0xff]
      %v2024 = vld [vmem:[#allocation3 + $0x40] sm:$0xff]
      %v2025 = vld [vmem:[#allocation3 + $0x50] sm:$0xff]
      %v2026 = vld [vmem:[#allocation3 + $0x60] sm:$0xff]
      %v2027 = vld [vmem:[#allocation3 + $0x70] sm:$0xff]
      %v2028 = vpack.c.bf16 %v2021, %v2020
      %v2029 = vpack.c.bf16 %v2023, %v2022
      %v2030 = vpack.c.bf16 %v2025, %v2024
      %v2031 = vpack.c.bf16 %v2027, %v2026
      %v2032 = vld [vmem:[%s6] sm:$0xf]
      %v2033 = vld [vmem:[%s6 + $0x4] sm:$0xf]
      %v2034 = vld [vmem:[%s6 + $0x8] sm:$0xf]
      %v2035 = vld [vmem:[%s6 + $0xc] sm:$0xf]
      %v2036 = vld [vmem:[%s6 + $0x10] sm:$0xf]
      %v2037 = vld [vmem:[%s6 + $0x14] sm:$0xf]
      %v2038 = vld [vmem:[%s6 + $0x18] sm:$0xf]
      %v2039 = vld [vmem:[%s6 + $0x1c] sm:$0xf]
      %v2040 = vld [vmem:[%s6 + $0x20] sm:$0xf]
      %v2041 = vld [vmem:[%s6 + $0x24] sm:$0xf]
      %v2042 = vld [vmem:[%s6 + $0x28] sm:$0xf]
      %v2043 = vld [vmem:[%s6 + $0x2c] sm:$0xf]
      %v2044 = vld [vmem:[%s6 + $0x30] sm:$0xf]
      %v2045 = vld [vmem:[%s6 + $0x34] sm:$0xf]
      %v2046 = vld [vmem:[%s6 + $0x38] sm:$0xf]
      %v2047 = vld [vmem:[%s6 + $0x3c] sm:$0xf]
      %v2064 = vunpack.c.l.b16 %v2032
      %v2065 = vunpack.c.l.b16 %v2033
      %v2066 = vunpack.c.l.b16 %v2034
      %v2067 = vunpack.c.l.b16 %v2035
      %v2068 = vunpack.c.l.b16 %v2036
      %v2069 = vunpack.c.l.b16 %v2037
      %v2070 = vunpack.c.l.b16 %v2038
      %v2071 = vunpack.c.l.b16 %v2039
      %v2072 = vunpack.c.l.b16 %v2040
      %v2073 = vunpack.c.l.b16 %v2041
      %v2074 = vunpack.c.l.b16 %v2042
      %v2075 = vunpack.c.l.b16 %v2043
      %v2076 = vunpack.c.l.b16 %v2044
      %v2077 = vunpack.c.l.b16 %v2045
      %v2078 = vunpack.c.l.b16 %v2046
      %v2079 = vunpack.c.l.b16 %v2047
      %v2080 = vpack.c.b16 %v2065, %v2064
      %v2081 = vpack.c.b16 %v2067, %v2066
      %v2082 = vpack.c.b16 %v2069, %v2068
      %v2083 = vpack.c.b16 %v2071, %v2070
      %v2084 = vpack.c.b16 %v2073, %v2072
      %v2085 = vpack.c.b16 %v2075, %v2074
      %v2086 = vpack.c.b16 %v2077, %v2076
      %v2087 = vpack.c.b16 %v2079, %v2078
      %2096 = vmatprep.subr.bf16.mxu0 0
      %2097 = vmatpush1.bf16.msra.mxu0 %v2087
      %2098 = vmatprep.subr.bf16.mxu0 0
      %2099 = vmatpush1.bf16.msra.mxu0 %v2086
      %2100 = vmatprep.subr.bf16.mxu0 0
      %2101 = vmatpush1.bf16.msra.mxu0 %v2085
      %2102 = vmatprep.subr.bf16.mxu0 0
      %2103 = vmatpush1.bf16.msra.mxu0 %v2084
      %2104 = vmatprep.subr.bf16.mxu0 0
      %2105 = vmatpush1.bf16.msra.mxu0 %v2083
      %2106 = vmatprep.subr.bf16.mxu0 0
      %2107 = vmatpush1.bf16.msra.mxu0 %v2082
      %2108 = vmatprep.subr.bf16.mxu0 0
      %2109 = vmatpush1.bf16.msra.mxu0 %v2081
      %2110 = vmatprep.subr.bf16.mxu0 0
      %2111 = vmatpush1.bf16.msra.mxu0 %v2080
      %2112 = vmatprep.subr.bf16.mxu0 0
      %2113 = vmatpush2.bf16.msra.mxu0 0
      %2114 = vmatprep.subr.bf16.mxu0 0
      %2115 = vmatpush2.bf16.msra.mxu0 0
      %2116 = vmatprep.subr.bf16.mxu0 0
      %2117 = vmatpush2.bf16.msra.mxu0 0
      %2118 = vmatprep.subr.bf16.mxu0 0
      %2119 = vmatpush2.bf16.msra.mxu0 0
      %2120 = vmatprep.subr.bf16.mxu0 0
      %2121 = vmatpush2.bf16.msra.mxu0 0
      %2122 = vmatprep.subr.bf16.mxu0 0
      %2123 = vmatpush2.bf16.msra.mxu0 0
      %2124 = vmatprep.subr.bf16.mxu0 0
      %2125 = vmatpush2.bf16.msra.mxu0 0
      %2126 = vmatprep.subr.bf16.mxu0 0
      %2127 = vmatpush2.bf16.msra.mxu0 0
      %2128 = vmatprep.mubr.bf16.mxu0 0
      %2129 = vmatmul.mubr.bf16.gmra.mxu0 %v2028
      %v2130 = vpop.f32.mrf.mxu0
      %v2131 = vadd.f32 0.0, %v2130
      %v2132 = vpop.f32.mrf.mxu0
      %v2133 = vpop.f32.mrf.mxu0
      %v2134 = vadd.f32 0.0, %v2133
      %v2135 = vpop.f32.mrf.mxu0
      %2136 = vmatprep.mubr.bf16.mxu0 0
      %2137 = vmatmul.mubr.bf16.gmra.mxu0 %v2029
      %v2138 = vpop.f32.mrf.mxu0
      %v2139 = vadd.f32 0.0, %v2138
      %v2140 = vpop.f32.mrf.mxu0
      %v2141 = vpop.f32.mrf.mxu0
      %v2142 = vadd.f32 0.0, %v2141
      %v2143 = vpop.f32.mrf.mxu0
      %2144 = vmatprep.mubr.bf16.mxu0 0
      %2145 = vmatmul.mubr.bf16.gmra.mxu0 %v2030
      %v2146 = vpop.f32.mrf.mxu0
      %v2147 = vadd.f32 0.0, %v2146
      %v2148 = vpop.f32.mrf.mxu0
      %v2149 = vpop.f32.mrf.mxu0
      %v2150 = vadd.f32 0.0, %v2149
      %v2151 = vpop.f32.mrf.mxu0
      %2152 = vmatprep.mubr.bf16.mxu0 0
      %2153 = vmatmul.mubr.bf16.gmra.mxu0 %v2031
      %v2154 = vpop.f32.mrf.mxu0
      %v2155 = vadd.f32 0.0, %v2154
      %v2156 = vpop.f32.mrf.mxu0
      %v2157 = vpop.f32.mrf.mxu0
      %v2158 = vadd.f32 0.0, %v2157
      %v2159 = vpop.f32.mrf.mxu0
      %2160 = vdwg.mxu0
      %v2177 = vunpack.c.l.b16 %v2004
      %v2178 = vunpack.c.l.b16 %v2005
      %v2179 = vunpack.c.l.b16 %v2006
      %v2180 = vunpack.c.l.b16 %v2007
      %v2181 = vunpack.c.l.b16 %v2008
      %v2182 = vunpack.c.l.b16 %v2009
      %v2183 = vunpack.c.l.b16 %v2010
      %v2184 = vunpack.c.l.b16 %v2011
      %v2185 = vunpack.c.l.b16 %v2012
      %v2186 = vunpack.c.l.b16 %v2013
      %v2187 = vunpack.c.l.b16 %v2014
      %v2188 = vunpack.c.l.b16 %v2015
      %v2189 = vunpack.c.l.b16 %v2016
      %v2190 = vunpack.c.l.b16 %v2017
      %v2191 = vunpack.c.l.b16 %v2018
      %v2192 = vunpack.c.l.b16 %v2019
      %v2193 = vpack.c.b16 %v2178, %v2177
      %v2194 = vpack.c.b16 %v2180, %v2179
      %v2195 = vpack.c.b16 %v2182, %v2181
      %v2196 = vpack.c.b16 %v2184, %v2183
      %v2197 = vpack.c.b16 %v2186, %v2185
      %v2198 = vpack.c.b16 %v2188, %v2187
      %v2199 = vpack.c.b16 %v2190, %v2189
      %v2200 = vpack.c.b16 %v2192, %v2191
      %2209 = vmatprep.subr.bf16.mxu0 0
      %2210 = vmatpush1.bf16.msra.mxu0 %v2200
      %2211 = vmatprep.subr.bf16.mxu0 0
      %2212 = vmatpush1.bf16.msra.mxu0 %v2199
      %2213 = vmatprep.subr.bf16.mxu0 0
      %2214 = vmatpush1.bf16.msra.mxu0 %v2198
      %2215 = vmatprep.subr.bf16.mxu0 0
      %2216 = vmatpush1.bf16.msra.mxu0 %v2197
      %2217 = vmatprep.subr.bf16.mxu0 0
      %2218 = vmatpush1.bf16.msra.mxu0 %v2196
      %2219 = vmatprep.subr.bf16.mxu0 0
      %2220 = vmatpush1.bf16.msra.mxu0 %v2195
      %2221 = vmatprep.subr.bf16.mxu0 0
      %2222 = vmatpush1.bf16.msra.mxu0 %v2194
      %2223 = vmatprep.subr.bf16.mxu0 0
      %2224 = vmatpush1.bf16.msra.mxu0 %v2193
      %2225 = vmatprep.subr.bf16.mxu0 0
      %2226 = vmatpush2.bf16.msra.mxu0 0
      %2227 = vmatprep.subr.bf16.mxu0 0
      %2228 = vmatpush2.bf16.msra.mxu0 0
      %2229 = vmatprep.subr.bf16.mxu0 0
      %2230 = vmatpush2.bf16.msra.mxu0 0
      %2231 = vmatprep.subr.bf16.mxu0 0
      %2232 = vmatpush2.bf16.msra.mxu0 0
      %2233 = vmatprep.subr.bf16.mxu0 0
      %2234 = vmatpush2.bf16.msra.mxu0 0
      %2235 = vmatprep.subr.bf16.mxu0 0
      %2236 = vmatpush2.bf16.msra.mxu0 0
      %2237 = vmatprep.subr.bf16.mxu0 0
      %2238 = vmatpush2.bf16.msra.mxu0 0
      %2239 = vmatprep.subr.bf16.mxu0 0
      %2240 = vmatpush2.bf16.msra.mxu0 0
      %2241 = vmatprep.mubr.bf16.mxu0 0
      %2242 = vmatmul.mubr.bf16.gmra.mxu0 %v2000
      %v2243 = vpop.f32.mrf.mxu0
      %v2244 = vadd.f32 %v2131, %v2243
      %v2245 = vpop.f32.mrf.mxu0
      %v2246 = vpop.f32.mrf.mxu0
      %v2247 = vadd.f32 %v2134, %v2246
      %v2248 = vpop.f32.mrf.mxu0
      %2249 = vmatprep.mubr.bf16.mxu0 0
      %2250 = vmatmul.mubr.bf16.gmra.mxu0 %v2001
      %v2251 = vpop.f32.mrf.mxu0
      %v2252 = vadd.f32 %v2139, %v2251
      %v2253 = vpop.f32.mrf.mxu0
      %v2254 = vpop.f32.mrf.mxu0
      %v2255 = vadd.f32 %v2142, %v2254
      %v2256 = vpop.f32.mrf.mxu0
      %2257 = vmatprep.mubr.bf16.mxu0 0
      %2258 = vmatmul.mubr.bf16.gmra.mxu0 %v2002
      %v2259 = vpop.f32.mrf.mxu0
      %v2260 = vadd.f32 %v2147, %v2259
      %v2261 = vpop.f32.mrf.mxu0
      %v2262 = vpop.f32.mrf.mxu0
      %v2263 = vadd.f32 %v2150, %v2262
      %v2264 = vpop.f32.mrf.mxu0
      %2265 = vmatprep.mubr.bf16.mxu0 0
      %2266 = vmatmul.mubr.bf16.gmra.mxu0 %v2003
      %v2267 = vpop.f32.mrf.mxu0
      %v2268 = vadd.f32 %v2155, %v2267
      %v2269 = vpop.f32.mrf.mxu0
      %v2270 = vpop.f32.mrf.mxu0
      %v2271 = vadd.f32 %v2158, %v2270
      %v2272 = vpop.f32.mrf.mxu0
      %2273 = vdwg.mxu0
      %v2274 = vld [vmem:[#allocation3 + $0x1] sm:$0xff]
      %v2275 = vld [vmem:[#allocation3 + $0x11] sm:$0xff]
      %v2276 = vld [vmem:[#allocation3 + $0x21] sm:$0xff]
      %v2277 = vld [vmem:[#allocation3 + $0x31] sm:$0xff]
      %v2278 = vld [vmem:[#allocation3 + $0x41] sm:$0xff]
      %v2279 = vld [vmem:[#allocation3 + $0x51] sm:$0xff]
      %v2280 = vld [vmem:[#allocation3 + $0x61] sm:$0xff]
      %v2281 = vld [vmem:[#allocation3 + $0x71] sm:$0xff]
      %v2282 = vpack.c.bf16 %v2275, %v2274
      %v2283 = vpack.c.bf16 %v2277, %v2276
      %v2284 = vpack.c.bf16 %v2279, %v2278
      %v2285 = vpack.c.bf16 %v2281, %v2280
      %v2286 = vld [vmem:[%s6 + $0x40] sm:$0xf]
      %v2287 = vld [vmem:[%s6 + $0x44] sm:$0xf]
      %v2288 = vld [vmem:[%s6 + $0x48] sm:$0xf]
      %v2289 = vld [vmem:[%s6 + $0x4c] sm:$0xf]
      %v2290 = vld [vmem:[%s6 + $0x50] sm:$0xf]
      %v2291 = vld [vmem:[%s6 + $0x54] sm:$0xf]
      %v2292 = vld [vmem:[%s6 + $0x58] sm:$0xf]
      %v2293 = vld [vmem:[%s6 + $0x5c] sm:$0xf]
      %v2294 = vld [vmem:[%s6 + $0x60] sm:$0xf]
      %v2295 = vld [vmem:[%s6 + $0x64] sm:$0xf]
      %v2296 = vld [vmem:[%s6 + $0x68] sm:$0xf]
      %v2297 = vld [vmem:[%s6 + $0x6c] sm:$0xf]
      %v2298 = vld [vmem:[%s6 + $0x70] sm:$0xf]
      %v2299 = vld [vmem:[%s6 + $0x74] sm:$0xf]
      %v2300 = vld [vmem:[%s6 + $0x78] sm:$0xf]
      %v2301 = vld [vmem:[%s6 + $0x7c] sm:$0xf]
      %v2318 = vunpack.c.l.b16 %v2286
      %v2319 = vunpack.c.l.b16 %v2287
      %v2320 = vunpack.c.l.b16 %v2288
      %v2321 = vunpack.c.l.b16 %v2289
      %v2322 = vunpack.c.l.b16 %v2290
      %v2323 = vunpack.c.l.b16 %v2291
      %v2324 = vunpack.c.l.b16 %v2292
      %v2325 = vunpack.c.l.b16 %v2293
      %v2326 = vunpack.c.l.b16 %v2294
      %v2327 = vunpack.c.l.b16 %v2295
      %v2328 = vunpack.c.l.b16 %v2296
      %v2329 = vunpack.c.l.b16 %v2297
      %v2330 = vunpack.c.l.b16 %v2298
      %v2331 = vunpack.c.l.b16 %v2299
      %v2332 = vunpack.c.l.b16 %v2300
      %v2333 = vunpack.c.l.b16 %v2301
      %v2334 = vpack.c.b16 %v2319, %v2318
      %v2335 = vpack.c.b16 %v2321, %v2320
      %v2336 = vpack.c.b16 %v2323, %v2322
      %v2337 = vpack.c.b16 %v2325, %v2324
      %v2338 = vpack.c.b16 %v2327, %v2326
      %v2339 = vpack.c.b16 %v2329, %v2328
      %v2340 = vpack.c.b16 %v2331, %v2330
      %v2341 = vpack.c.b16 %v2333, %v2332
      %2350 = vmatprep.subr.bf16.mxu0 0
      %2351 = vmatpush1.bf16.msra.mxu0 %v2341
      %2352 = vmatprep.subr.bf16.mxu0 0
      %2353 = vmatpush1.bf16.msra.mxu0 %v2340
      %2354 = vmatprep.subr.bf16.mxu0 0
      %2355 = vmatpush1.bf16.msra.mxu0 %v2339
      %2356 = vmatprep.subr.bf16.mxu0 0
      %2357 = vmatpush1.bf16.msra.mxu0 %v2338
      %2358 = vmatprep.subr.bf16.mxu0 0
      %2359 = vmatpush1.bf16.msra.mxu0 %v2337
      %2360 = vmatprep.subr.bf16.mxu0 0
      %2361 = vmatpush1.bf16.msra.mxu0 %v2336
      %2362 = vmatprep.subr.bf16.mxu0 0
      %2363 = vmatpush1.bf16.msra.mxu0 %v2335
      %2364 = vmatprep.subr.bf16.mxu0 0
      %2365 = vmatpush1.bf16.msra.mxu0 %v2334
      %2366 = vmatprep.subr.bf16.mxu0 0
      %2367 = vmatpush2.bf16.msra.mxu0 0
      %2368 = vmatprep.subr.bf16.mxu0 0
      %2369 = vmatpush2.bf16.msra.mxu0 0
      %2370 = vmatprep.subr.bf16.mxu0 0
      %2371 = vmatpush2.bf16.msra.mxu0 0
      %2372 = vmatprep.subr.bf16.mxu0 0
      %2373 = vmatpush2.bf16.msra.mxu0 0
      %2374 = vmatprep.subr.bf16.mxu0 0
      %2375 = vmatpush2.bf16.msra.mxu0 0
      %2376 = vmatprep.subr.bf16.mxu0 0
      %2377 = vmatpush2.bf16.msra.mxu0 0
      %2378 = vmatprep.subr.bf16.mxu0 0
      %2379 = vmatpush2.bf16.msra.mxu0 0
      %2380 = vmatprep.subr.bf16.mxu0 0
      %2381 = vmatpush2.bf16.msra.mxu0 0
      %2382 = vmatprep.mubr.bf16.mxu0 0
      %2383 = vmatmul.mubr.bf16.gmra.mxu0 %v2282
      %v2384 = vpop.f32.mrf.mxu0
      %v2385 = vadd.f32 0.0, %v2384
      %v2386 = vpop.f32.mrf.mxu0
      %v2387 = vpop.f32.mrf.mxu0
      %v2388 = vadd.f32 0.0, %v2387
      %v2389 = vpop.f32.mrf.mxu0
      %2390 = vmatprep.mubr.bf16.mxu0 0
      %2391 = vmatmul.mubr.bf16.gmra.mxu0 %v2283
      %v2392 = vpop.f32.mrf.mxu0
      %v2393 = vadd.f32 0.0, %v2392
      %v2394 = vpop.f32.mrf.mxu0
      %v2395 = vpop.f32.mrf.mxu0
      %v2396 = vadd.f32 0.0, %v2395
      %v2397 = vpop.f32.mrf.mxu0
      %2398 = vmatprep.mubr.bf16.mxu0 0
      %2399 = vmatmul.mubr.bf16.gmra.mxu0 %v2284
      %v2400 = vpop.f32.mrf.mxu0
      %v2401 = vadd.f32 0.0, %v2400
      %v2402 = vpop.f32.mrf.mxu0
      %v2403 = vpop.f32.mrf.mxu0
      %v2404 = vadd.f32 0.0, %v2403
      %v2405 = vpop.f32.mrf.mxu0
      %2406 = vmatprep.mubr.bf16.mxu0 0
      %2407 = vmatmul.mubr.bf16.gmra.mxu0 %v2285
      %v2408 = vpop.f32.mrf.mxu0
      %v2409 = vadd.f32 0.0, %v2408
      %v2410 = vpop.f32.mrf.mxu0
      %v2411 = vpop.f32.mrf.mxu0
      %v2412 = vadd.f32 0.0, %v2411
      %v2413 = vpop.f32.mrf.mxu0
      %2414 = vdwg.mxu0
      %v2415 = vadd.f32 %v2244, %v2385
      %v2416 = vadd.f32 %v2247, %v2388
      %v2417 = vadd.f32 %v2252, %v2393
      %v2418 = vadd.f32 %v2255, %v2396
      %v2419 = vadd.f32 %v2260, %v2401
      %v2420 = vadd.f32 %v2263, %v2404
      %v2421 = vadd.f32 %v2268, %v2409
      %v2422 = vadd.f32 %v2271, %v2412
      %v2423 = vld [vmem:[#allocation3 + $0x2] sm:$0xff]
      %v2424 = vld [vmem:[#allocation3 + $0x12] sm:$0xff]
      %v2425 = vld [vmem:[#allocation3 + $0x22] sm:$0xff]
      %v2426 = vld [vmem:[#allocation3 + $0x32] sm:$0xff]
      %v2427 = vld [vmem:[#allocation3 + $0x42] sm:$0xff]
      %v2428 = vld [vmem:[#allocation3 + $0x52] sm:$0xff]
      %v2429 = vld [vmem:[#allocation3 + $0x62] sm:$0xff]
      %v2430 = vld [vmem:[#allocation3 + $0x72] sm:$0xff]
      %v2431 = vpack.c.bf16 %v2424, %v2423
      %v2432 = vpack.c.bf16 %v2426, %v2425
      %v2433 = vpack.c.bf16 %v2428, %v2427
      %v2434 = vpack.c.bf16 %v2430, %v2429
      %v2435 = vld [vmem:[%s6 + $0x80] sm:$0xf]
      %v2436 = vld [vmem:[%s6 + $0x84] sm:$0xf]
      %v2437 = vld [vmem:[%s6 + $0x88] sm:$0xf]
      %v2438 = vld [vmem:[%s6 + $0x8c] sm:$0xf]
      %v2439 = vld [vmem:[%s6 + $0x90] sm:$0xf]
      %v2440 = vld [vmem:[%s6 + $0x94] sm:$0xf]
      %v2441 = vld [vmem:[%s6 + $0x98] sm:$0xf]
      %v2442 = vld [vmem:[%s6 + $0x9c] sm:$0xf]
      %v2443 = vld [vmem:[%s6 + $0xa0] sm:$0xf]
      %v2444 = vld [vmem:[%s6 + $0xa4] sm:$0xf]
      %v2445 = vld [vmem:[%s6 + $0xa8] sm:$0xf]
      %v2446 = vld [vmem:[%s6 + $0xac] sm:$0xf]
      %v2447 = vld [vmem:[%s6 + $0xb0] sm:$0xf]
      %v2448 = vld [vmem:[%s6 + $0xb4] sm:$0xf]
      %v2449 = vld [vmem:[%s6 + $0xb8] sm:$0xf]
      %v2450 = vld [vmem:[%s6 + $0xbc] sm:$0xf]
      %v2467 = vunpack.c.l.b16 %v2435
      %v2468 = vunpack.c.l.b16 %v2436
      %v2469 = vunpack.c.l.b16 %v2437
      %v2470 = vunpack.c.l.b16 %v2438
      %v2471 = vunpack.c.l.b16 %v2439
      %v2472 = vunpack.c.l.b16 %v2440
      %v2473 = vunpack.c.l.b16 %v2441
      %v2474 = vunpack.c.l.b16 %v2442
      %v2475 = vunpack.c.l.b16 %v2443
      %v2476 = vunpack.c.l.b16 %v2444
      %v2477 = vunpack.c.l.b16 %v2445
      %v2478 = vunpack.c.l.b16 %v2446
      %v2479 = vunpack.c.l.b16 %v2447
      %v2480 = vunpack.c.l.b16 %v2448
      %v2481 = vunpack.c.l.b16 %v2449
      %v2482 = vunpack.c.l.b16 %v2450
      %v2483 = vpack.c.b16 %v2468, %v2467
      %v2484 = vpack.c.b16 %v2470, %v2469
      %v2485 = vpack.c.b16 %v2472, %v2471
      %v2486 = vpack.c.b16 %v2474, %v2473
      %v2487 = vpack.c.b16 %v2476, %v2475
      %v2488 = vpack.c.b16 %v2478, %v2477
      %v2489 = vpack.c.b16 %v2480, %v2479
      %v2490 = vpack.c.b16 %v2482, %v2481
      %2499 = vmatprep.subr.bf16.mxu0 0
      %2500 = vmatpush1.bf16.msra.mxu0 %v2490
      %2501 = vmatprep.subr.bf16.mxu0 0
      %2502 = vmatpush1.bf16.msra.mxu0 %v2489
      %2503 = vmatprep.subr.bf16.mxu0 0
      %2504 = vmatpush1.bf16.msra.mxu0 %v2488
      %2505 = vmatprep.subr.bf16.mxu0 0
      %2506 = vmatpush1.bf16.msra.mxu0 %v2487
      %2507 = vmatprep.subr.bf16.mxu0 0
      %2508 = vmatpush1.bf16.msra.mxu0 %v2486
      %2509 = vmatprep.subr.bf16.mxu0 0
      %2510 = vmatpush1.bf16.msra.mxu0 %v2485
      %2511 = vmatprep.subr.bf16.mxu0 0
      %2512 = vmatpush1.bf16.msra.mxu0 %v2484
      %2513 = vmatprep.subr.bf16.mxu0 0
      %2514 = vmatpush1.bf16.msra.mxu0 %v2483
      %2515 = vmatprep.subr.bf16.mxu0 0
      %2516 = vmatpush2.bf16.msra.mxu0 0
      %2517 = vmatprep.subr.bf16.mxu0 0
      %2518 = vmatpush2.bf16.msra.mxu0 0
      %2519 = vmatprep.subr.bf16.mxu0 0
      %2520 = vmatpush2.bf16.msra.mxu0 0
      %2521 = vmatprep.subr.bf16.mxu0 0
      %2522 = vmatpush2.bf16.msra.mxu0 0
      %2523 = vmatprep.subr.bf16.mxu0 0
      %2524 = vmatpush2.bf16.msra.mxu0 0
      %2525 = vmatprep.subr.bf16.mxu0 0
      %2526 = vmatpush2.bf16.msra.mxu0 0
      %2527 = vmatprep.subr.bf16.mxu0 0
      %2528 = vmatpush2.bf16.msra.mxu0 0
      %2529 = vmatprep.subr.bf16.mxu0 0
      %2530 = vmatpush2.bf16.msra.mxu0 0
      %2531 = vmatprep.mubr.bf16.mxu0 0
      %2532 = vmatmul.mubr.bf16.gmra.mxu0 %v2431
      %v2533 = vpop.f32.mrf.mxu0
      %v2534 = vadd.f32 0.0, %v2533
      %v2535 = vpop.f32.mrf.mxu0
      %v2536 = vpop.f32.mrf.mxu0
      %v2537 = vadd.f32 0.0, %v2536
      %v2538 = vpop.f32.mrf.mxu0
      %2539 = vmatprep.mubr.bf16.mxu0 0
      %2540 = vmatmul.mubr.bf16.gmra.mxu0 %v2432
      %v2541 = vpop.f32.mrf.mxu0
      %v2542 = vadd.f32 0.0, %v2541
      %v2543 = vpop.f32.mrf.mxu0
      %v2544 = vpop.f32.mrf.mxu0
      %v2545 = vadd.f32 0.0, %v2544
      %v2546 = vpop.f32.mrf.mxu0
      %2547 = vmatprep.mubr.bf16.mxu0 0
      %2548 = vmatmul.mubr.bf16.gmra.mxu0 %v2433
      %v2549 = vpop.f32.mrf.mxu0
      %v2550 = vadd.f32 0.0, %v2549
      %v2551 = vpop.f32.mrf.mxu0
      %v2552 = vpop.f32.mrf.mxu0
      %v2553 = vadd.f32 0.0, %v2552
      %v2554 = vpop.f32.mrf.mxu0
      %2555 = vmatprep.mubr.bf16.mxu0 0
      %2556 = vmatmul.mubr.bf16.gmra.mxu0 %v2434
      %v2557 = vpop.f32.mrf.mxu0
      %v2558 = vadd.f32 0.0, %v2557
      %v2559 = vpop.f32.mrf.mxu0
      %v2560 = vpop.f32.mrf.mxu0
      %v2561 = vadd.f32 0.0, %v2560
      %v2562 = vpop.f32.mrf.mxu0
      %2563 = vdwg.mxu0
      %v2564 = vadd.f32 %v2415, %v2534
      %v2565 = vadd.f32 %v2416, %v2537
      %v2566 = vadd.f32 %v2417, %v2542
      %v2567 = vadd.f32 %v2418, %v2545
      %v2568 = vadd.f32 %v2419, %v2550
      %v2569 = vadd.f32 %v2420, %v2553
      %v2570 = vadd.f32 %v2421, %v2558
      %v2571 = vadd.f32 %v2422, %v2561
      %v2572 = vld [vmem:[%s1983] sm:$0xff]
      %v2573 = vld [vmem:[%s1983 + $0x10] sm:$0xff]
      %v2574 = vld [vmem:[%s1983 + $0x20] sm:$0xff]
      %v2575 = vld [vmem:[%s1983 + $0x30] sm:$0xff]
      %v2576 = vld [vmem:[%s1983 + $0x40] sm:$0xff]
      %v2577 = vld [vmem:[%s1983 + $0x50] sm:$0xff]
      %v2578 = vld [vmem:[%s1983 + $0x60] sm:$0xff]
      %v2579 = vld [vmem:[%s1983 + $0x70] sm:$0xff]
      %v2580 = vpack.c.bf16 %v2573, %v2572
      %v2581 = vpack.c.bf16 %v2575, %v2574
      %v2582 = vpack.c.bf16 %v2577, %v2576
      %v2583 = vpack.c.bf16 %v2579, %v2578
      %v2584 = vld [vmem:[%s6 + $0xc0] sm:$0xf]
      %v2585 = vld [vmem:[%s6 + $0xc4] sm:$0xf]
      %v2586 = vld [vmem:[%s6 + $0xc8] sm:$0xf]
      %v2587 = vld [vmem:[%s6 + $0xcc] sm:$0xf]
      %v2588 = vld [vmem:[%s6 + $0xd0] sm:$0xf]
      %v2589 = vld [vmem:[%s6 + $0xd4] sm:$0xf]
      %v2590 = vld [vmem:[%s6 + $0xd8] sm:$0xf]
      %v2591 = vld [vmem:[%s6 + $0xdc] sm:$0xf]
      %v2592 = vld [vmem:[%s6 + $0xe0] sm:$0xf]
      %v2593 = vld [vmem:[%s6 + $0xe4] sm:$0xf]
      %v2594 = vld [vmem:[%s6 + $0xe8] sm:$0xf]
      %v2595 = vld [vmem:[%s6 + $0xec] sm:$0xf]
      %v2596 = vld [vmem:[%s6 + $0xf0] sm:$0xf]
      %v2597 = vld [vmem:[%s6 + $0xf4] sm:$0xf]
      %v2598 = vld [vmem:[%s6 + $0xf8] sm:$0xf]
      %v2599 = vld [vmem:[%s6 + $0xfc] sm:$0xf]
      %v2616 = vunpack.c.l.b16 %v2584
      %v2617 = vunpack.c.l.b16 %v2585
      %v2618 = vunpack.c.l.b16 %v2586
      %v2619 = vunpack.c.l.b16 %v2587
      %v2620 = vunpack.c.l.b16 %v2588
      %v2621 = vunpack.c.l.b16 %v2589
      %v2622 = vunpack.c.l.b16 %v2590
      %v2623 = vunpack.c.l.b16 %v2591
      %v2624 = vunpack.c.l.b16 %v2592
      %v2625 = vunpack.c.l.b16 %v2593
      %v2626 = vunpack.c.l.b16 %v2594
      %v2627 = vunpack.c.l.b16 %v2595
      %v2628 = vunpack.c.l.b16 %v2596
      %v2629 = vunpack.c.l.b16 %v2597
      %v2630 = vunpack.c.l.b16 %v2598
      %v2631 = vunpack.c.l.b16 %v2599
      %v2632 = vpack.c.b16 %v2617, %v2616
      %v2633 = vpack.c.b16 %v2619, %v2618
      %v2634 = vpack.c.b16 %v2621, %v2620
      %v2635 = vpack.c.b16 %v2623, %v2622
      %v2636 = vpack.c.b16 %v2625, %v2624
      %v2637 = vpack.c.b16 %v2627, %v2626
      %v2638 = vpack.c.b16 %v2629, %v2628
      %v2639 = vpack.c.b16 %v2631, %v2630
      %2648 = vmatprep.subr.bf16.mxu0 0
      %2649 = vmatpush1.bf16.msra.mxu0 %v2639
      %2650 = vmatprep.subr.bf16.mxu0 0
      %2651 = vmatpush1.bf16.msra.mxu0 %v2638
      %2652 = vmatprep.subr.bf16.mxu0 0
      %2653 = vmatpush1.bf16.msra.mxu0 %v2637
      %2654 = vmatprep.subr.bf16.mxu0 0
      %2655 = vmatpush1.bf16.msra.mxu0 %v2636
      %2656 = vmatprep.subr.bf16.mxu0 0
      %2657 = vmatpush1.bf16.msra.mxu0 %v2635
      %2658 = vmatprep.subr.bf16.mxu0 0
      %2659 = vmatpush1.bf16.msra.mxu0 %v2634
      %2660 = vmatprep.subr.bf16.mxu0 0
      %2661 = vmatpush1.bf16.msra.mxu0 %v2633
      %2662 = vmatprep.subr.bf16.mxu0 0
      %2663 = vmatpush1.bf16.msra.mxu0 %v2632
      %2664 = vmatprep.subr.bf16.mxu0 0
      %2665 = vmatpush2.bf16.msra.mxu0 0
      %2666 = vmatprep.subr.bf16.mxu0 0
      %2667 = vmatpush2.bf16.msra.mxu0 0
      %2668 = vmatprep.subr.bf16.mxu0 0
      %2669 = vmatpush2.bf16.msra.mxu0 0
      %2670 = vmatprep.subr.bf16.mxu0 0
      %2671 = vmatpush2.bf16.msra.mxu0 0
      %2672 = vmatprep.subr.bf16.mxu0 0
      %2673 = vmatpush2.bf16.msra.mxu0 0
      %2674 = vmatprep.subr.bf16.mxu0 0
      %2675 = vmatpush2.bf16.msra.mxu0 0
      %2676 = vmatprep.subr.bf16.mxu0 0
      %2677 = vmatpush2.bf16.msra.mxu0 0
      %2678 = vmatprep.subr.bf16.mxu0 0
      %2679 = vmatpush2.bf16.msra.mxu0 0
      %2680 = vmatprep.mubr.bf16.mxu0 0
      %2681 = vmatmul.mubr.bf16.gmra.mxu0 %v2580
      %v2682 = vpop.f32.mrf.mxu0
      %v2683 = vadd.f32 0.0, %v2682
      %v2684 = vpop.f32.mrf.mxu0
      %v2685 = vpop.f32.mrf.mxu0
      %v2686 = vadd.f32 0.0, %v2685
      %v2687 = vpop.f32.mrf.mxu0
      %2688 = vmatprep.mubr.bf16.mxu0 0
      %2689 = vmatmul.mubr.bf16.gmra.mxu0 %v2581
      %v2690 = vpop.f32.mrf.mxu0
      %v2691 = vadd.f32 0.0, %v2690
      %v2692 = vpop.f32.mrf.mxu0
      %v2693 = vpop.f32.mrf.mxu0
      %v2694 = vadd.f32 0.0, %v2693
      %v2695 = vpop.f32.mrf.mxu0
      %2696 = vmatprep.mubr.bf16.mxu0 0
      %2697 = vmatmul.mubr.bf16.gmra.mxu0 %v2582
      %v2698 = vpop.f32.mrf.mxu0
      %v2699 = vadd.f32 0.0, %v2698
      %v2700 = vpop.f32.mrf.mxu0
      %v2701 = vpop.f32.mrf.mxu0
      %v2702 = vadd.f32 0.0, %v2701
      %v2703 = vpop.f32.mrf.mxu0
      %2704 = vmatprep.mubr.bf16.mxu0 0
      %2705 = vmatmul.mubr.bf16.gmra.mxu0 %v2583
      %v2706 = vpop.f32.mrf.mxu0
      %v2707 = vadd.f32 0.0, %v2706
      %v2708 = vpop.f32.mrf.mxu0
      %v2709 = vpop.f32.mrf.mxu0
      %v2710 = vadd.f32 0.0, %v2709
      %v2711 = vpop.f32.mrf.mxu0
      %2712 = vdwg.mxu0
      %v2713 = vadd.f32 %v2564, %v2683
      %v2714 = vadd.f32 %v2565, %v2686
      %v2715 = vadd.f32 %v2566, %v2691
      %v2716 = vadd.f32 %v2567, %v2694
      %v2717 = vadd.f32 %v2568, %v2699
      %v2718 = vadd.f32 %v2569, %v2702
      %v2719 = vadd.f32 %v2570, %v2707
      %v2720 = vadd.f32 %v2571, %v2710
      %v2721 = vld [vmem:[%s1983 + $0x1] sm:$0xff]
      %v2722 = vld [vmem:[%s1983 + $0x11] sm:$0xff]
      %v2723 = vld [vmem:[%s1983 + $0x21] sm:$0xff]
      %v2724 = vld [vmem:[%s1983 + $0x31] sm:$0xff]
      %v2725 = vld [vmem:[%s1983 + $0x41] sm:$0xff]
      %v2726 = vld [vmem:[%s1983 + $0x51] sm:$0xff]
      %v2727 = vld [vmem:[%s1983 + $0x61] sm:$0xff]
      %v2728 = vld [vmem:[%s1983 + $0x71] sm:$0xff]
      %v2729 = vpack.c.bf16 %v2722, %v2721
      %v2730 = vpack.c.bf16 %v2724, %v2723
      %v2731 = vpack.c.bf16 %v2726, %v2725
      %v2732 = vpack.c.bf16 %v2728, %v2727
      %v2733 = vld [vmem:[%s6 + $0x100] sm:$0xf]
      %v2734 = vld [vmem:[%s6 + $0x104] sm:$0xf]
      %v2735 = vld [vmem:[%s6 + $0x108] sm:$0xf]
      %v2736 = vld [vmem:[%s6 + $0x10c] sm:$0xf]
      %v2737 = vld [vmem:[%s6 + $0x110] sm:$0xf]
      %v2738 = vld [vmem:[%s6 + $0x114] sm:$0xf]
      %v2739 = vld [vmem:[%s6 + $0x118] sm:$0xf]
      %v2740 = vld [vmem:[%s6 + $0x11c] sm:$0xf]
      %v2741 = vld [vmem:[%s6 + $0x120] sm:$0xf]
      %v2742 = vld [vmem:[%s6 + $0x124] sm:$0xf]
      %v2743 = vld [vmem:[%s6 + $0x128] sm:$0xf]
      %v2744 = vld [vmem:[%s6 + $0x12c] sm:$0xf]
      %v2745 = vld [vmem:[%s6 + $0x130] sm:$0xf]
      %v2746 = vld [vmem:[%s6 + $0x134] sm:$0xf]
      %v2747 = vld [vmem:[%s6 + $0x138] sm:$0xf]
      %v2748 = vld [vmem:[%s6 + $0x13c] sm:$0xf]
      %v2765 = vunpack.c.l.b16 %v2733
      %v2766 = vunpack.c.l.b16 %v2734
      %v2767 = vunpack.c.l.b16 %v2735
      %v2768 = vunpack.c.l.b16 %v2736
      %v2769 = vunpack.c.l.b16 %v2737
      %v2770 = vunpack.c.l.b16 %v2738
      %v2771 = vunpack.c.l.b16 %v2739
      %v2772 = vunpack.c.l.b16 %v2740
      %v2773 = vunpack.c.l.b16 %v2741
      %v2774 = vunpack.c.l.b16 %v2742
      %v2775 = vunpack.c.l.b16 %v2743
      %v2776 = vunpack.c.l.b16 %v2744
      %v2777 = vunpack.c.l.b16 %v2745
      %v2778 = vunpack.c.l.b16 %v2746
      %v2779 = vunpack.c.l.b16 %v2747
      %v2780 = vunpack.c.l.b16 %v2748
      %v2781 = vpack.c.b16 %v2766, %v2765
      %v2782 = vpack.c.b16 %v2768, %v2767
      %v2783 = vpack.c.b16 %v2770, %v2769
      %v2784 = vpack.c.b16 %v2772, %v2771
      %v2785 = vpack.c.b16 %v2774, %v2773
      %v2786 = vpack.c.b16 %v2776, %v2775
      %v2787 = vpack.c.b16 %v2778, %v2777
      %v2788 = vpack.c.b16 %v2780, %v2779
      %2797 = vmatprep.subr.bf16.mxu0 0
      %2798 = vmatpush1.bf16.msra.mxu0 %v2788
      %2799 = vmatprep.subr.bf16.mxu0 0
      %2800 = vmatpush1.bf16.msra.mxu0 %v2787
      %2801 = vmatprep.subr.bf16.mxu0 0
      %2802 = vmatpush1.bf16.msra.mxu0 %v2786
      %2803 = vmatprep.subr.bf16.mxu0 0
      %2804 = vmatpush1.bf16.msra.mxu0 %v2785
      %2805 = vmatprep.subr.bf16.mxu0 0
      %2806 = vmatpush1.bf16.msra.mxu0 %v2784
      %2807 = vmatprep.subr.bf16.mxu0 0
      %2808 = vmatpush1.bf16.msra.mxu0 %v2783
      %2809 = vmatprep.subr.bf16.mxu0 0
      %2810 = vmatpush1.bf16.msra.mxu0 %v2782
      %2811 = vmatprep.subr.bf16.mxu0 0
      %2812 = vmatpush1.bf16.msra.mxu0 %v2781
      %2813 = vmatprep.subr.bf16.mxu0 0
      %2814 = vmatpush2.bf16.msra.mxu0 0
      %2815 = vmatprep.subr.bf16.mxu0 0
      %2816 = vmatpush2.bf16.msra.mxu0 0
      %2817 = vmatprep.subr.bf16.mxu0 0
      %2818 = vmatpush2.bf16.msra.mxu0 0
      %2819 = vmatprep.subr.bf16.mxu0 0
      %2820 = vmatpush2.bf16.msra.mxu0 0
      %2821 = vmatprep.subr.bf16.mxu0 0
      %2822 = vmatpush2.bf16.msra.mxu0 0
      %2823 = vmatprep.subr.bf16.mxu0 0
      %2824 = vmatpush2.bf16.msra.mxu0 0
      %2825 = vmatprep.subr.bf16.mxu0 0
      %2826 = vmatpush2.bf16.msra.mxu0 0
      %2827 = vmatprep.subr.bf16.mxu0 0
      %2828 = vmatpush2.bf16.msra.mxu0 0
      %2829 = vmatprep.mubr.bf16.mxu0 0
      %2830 = vmatmul.mubr.bf16.gmra.mxu0 %v2729
      %v2831 = vpop.f32.mrf.mxu0
      %v2832 = vadd.f32 0.0, %v2831
      %v2833 = vpop.f32.mrf.mxu0
      %v2834 = vpop.f32.mrf.mxu0
      %v2835 = vadd.f32 0.0, %v2834
      %v2836 = vpop.f32.mrf.mxu0
      %2837 = vmatprep.mubr.bf16.mxu0 0
      %2838 = vmatmul.mubr.bf16.gmra.mxu0 %v2730
      %v2839 = vpop.f32.mrf.mxu0
      %v2840 = vadd.f32 0.0, %v2839
      %v2841 = vpop.f32.mrf.mxu0
      %v2842 = vpop.f32.mrf.mxu0
      %v2843 = vadd.f32 0.0, %v2842
      %v2844 = vpop.f32.mrf.mxu0
      %2845 = vmatprep.mubr.bf16.mxu0 0
      %2846 = vmatmul.mubr.bf16.gmra.mxu0 %v2731
      %v2847 = vpop.f32.mrf.mxu0
      %v2848 = vadd.f32 0.0, %v2847
      %v2849 = vpop.f32.mrf.mxu0
      %v2850 = vpop.f32.mrf.mxu0
      %v2851 = vadd.f32 0.0, %v2850
      %v2852 = vpop.f32.mrf.mxu0
      %2853 = vmatprep.mubr.bf16.mxu0 0
      %2854 = vmatmul.mubr.bf16.gmra.mxu0 %v2732
      %v2855 = vpop.f32.mrf.mxu0
      %v2856 = vadd.f32 0.0, %v2855
      %v2857 = vpop.f32.mrf.mxu0
      %v2858 = vpop.f32.mrf.mxu0
      %v2859 = vadd.f32 0.0, %v2858
      %v2860 = vpop.f32.mrf.mxu0
      %2861 = vdwg.mxu0
      %v2862 = vadd.f32 %v2713, %v2832
      %v2863 = vadd.f32 %v2714, %v2835
      %v2864 = vadd.f32 %v2715, %v2840
      %v2865 = vadd.f32 %v2716, %v2843
      %v2866 = vadd.f32 %v2717, %v2848
      %v2867 = vadd.f32 %v2718, %v2851
      %v2868 = vadd.f32 %v2719, %v2856
      %v2869 = vadd.f32 %v2720, %v2859
      %v2870 = vld [vmem:[%s1983 + $0x2] sm:$0xff]
      %v2871 = vld [vmem:[%s1983 + $0x12] sm:$0xff]
      %v2872 = vld [vmem:[%s1983 + $0x22] sm:$0xff]
      %v2873 = vld [vmem:[%s1983 + $0x32] sm:$0xff]
      %v2874 = vld [vmem:[%s1983 + $0x42] sm:$0xff]
      %v2875 = vld [vmem:[%s1983 + $0x52] sm:$0xff]
      %v2876 = vld [vmem:[%s1983 + $0x62] sm:$0xff]
      %v2877 = vld [vmem:[%s1983 + $0x72] sm:$0xff]
      %v2878 = vpack.c.bf16 %v2871, %v2870
      %v2879 = vpack.c.bf16 %v2873, %v2872
      %v2880 = vpack.c.bf16 %v2875, %v2874
      %v2881 = vpack.c.bf16 %v2877, %v2876
      %v2882 = vld [vmem:[%s6 + $0x140] sm:$0xf]
      %v2883 = vld [vmem:[%s6 + $0x144] sm:$0xf]
      %v2884 = vld [vmem:[%s6 + $0x148] sm:$0xf]
      %v2885 = vld [vmem:[%s6 + $0x14c] sm:$0xf]
      %v2886 = vld [vmem:[%s6 + $0x150] sm:$0xf]
      %v2887 = vld [vmem:[%s6 + $0x154] sm:$0xf]
      %v2888 = vld [vmem:[%s6 + $0x158] sm:$0xf]
      %v2889 = vld [vmem:[%s6 + $0x15c] sm:$0xf]
      %v2890 = vld [vmem:[%s6 + $0x160] sm:$0xf]
      %v2891 = vld [vmem:[%s6 + $0x164] sm:$0xf]
      %v2892 = vld [vmem:[%s6 + $0x168] sm:$0xf]
      %v2893 = vld [vmem:[%s6 + $0x16c] sm:$0xf]
      %v2894 = vld [vmem:[%s6 + $0x170] sm:$0xf]
      %v2895 = vld [vmem:[%s6 + $0x174] sm:$0xf]
      %v2896 = vld [vmem:[%s6 + $0x178] sm:$0xf]
      %v2897 = vld [vmem:[%s6 + $0x17c] sm:$0xf]
      %v2914 = vunpack.c.l.b16 %v2882
      %v2915 = vunpack.c.l.b16 %v2883
      %v2916 = vunpack.c.l.b16 %v2884
      %v2917 = vunpack.c.l.b16 %v2885
      %v2918 = vunpack.c.l.b16 %v2886
      %v2919 = vunpack.c.l.b16 %v2887
      %v2920 = vunpack.c.l.b16 %v2888
      %v2921 = vunpack.c.l.b16 %v2889
      %v2922 = vunpack.c.l.b16 %v2890
      %v2923 = vunpack.c.l.b16 %v2891
      %v2924 = vunpack.c.l.b16 %v2892
      %v2925 = vunpack.c.l.b16 %v2893
      %v2926 = vunpack.c.l.b16 %v2894
      %v2927 = vunpack.c.l.b16 %v2895
      %v2928 = vunpack.c.l.b16 %v2896
      %v2929 = vunpack.c.l.b16 %v2897
      %v2930 = vpack.c.b16 %v2915, %v2914
      %v2931 = vpack.c.b16 %v2917, %v2916
      %v2932 = vpack.c.b16 %v2919, %v2918
      %v2933 = vpack.c.b16 %v2921, %v2920
      %v2934 = vpack.c.b16 %v2923, %v2922
      %v2935 = vpack.c.b16 %v2925, %v2924
      %v2936 = vpack.c.b16 %v2927, %v2926
      %v2937 = vpack.c.b16 %v2929, %v2928
      %2946 = vmatprep.subr.bf16.mxu0 0
      %2947 = vmatpush1.bf16.msra.mxu0 %v2937
      %2948 = vmatprep.subr.bf16.mxu0 0
      %2949 = vmatpush1.bf16.msra.mxu0 %v2936
      %2950 = vmatprep.subr.bf16.mxu0 0
      %2951 = vmatpush1.bf16.msra.mxu0 %v2935
      %2952 = vmatprep.subr.bf16.mxu0 0
      %2953 = vmatpush1.bf16.msra.mxu0 %v2934
      %2954 = vmatprep.subr.bf16.mxu0 0
      %2955 = vmatpush1.bf16.msra.mxu0 %v2933
      %2956 = vmatprep.subr.bf16.mxu0 0
      %2957 = vmatpush1.bf16.msra.mxu0 %v2932
      %2958 = vmatprep.subr.bf16.mxu0 0
      %2959 = vmatpush1.bf16.msra.mxu0 %v2931
      %2960 = vmatprep.subr.bf16.mxu0 0
      %2961 = vmatpush1.bf16.msra.mxu0 %v2930
      %2962 = vmatprep.subr.bf16.mxu0 0
      %2963 = vmatpush2.bf16.msra.mxu0 0
      %2964 = vmatprep.subr.bf16.mxu0 0
      %2965 = vmatpush2.bf16.msra.mxu0 0
      %2966 = vmatprep.subr.bf16.mxu0 0
      %2967 = vmatpush2.bf16.msra.mxu0 0
      %2968 = vmatprep.subr.bf16.mxu0 0
      %2969 = vmatpush2.bf16.msra.mxu0 0
      %2970 = vmatprep.subr.bf16.mxu0 0
      %2971 = vmatpush2.bf16.msra.mxu0 0
      %2972 = vmatprep.subr.bf16.mxu0 0
      %2973 = vmatpush2.bf16.msra.mxu0 0
      %2974 = vmatprep.subr.bf16.mxu0 0
      %2975 = vmatpush2.bf16.msra.mxu0 0
      %2976 = vmatprep.subr.bf16.mxu0 0
      %2977 = vmatpush2.bf16.msra.mxu0 0
      %2978 = vmatprep.mubr.bf16.mxu0 0
      %2979 = vmatmul.mubr.bf16.gmra.mxu0 %v2878
      %v2980 = vpop.f32.mrf.mxu0
      %v2981 = vadd.f32 0.0, %v2980
      %v2982 = vpop.f32.mrf.mxu0
      %v2983 = vpop.f32.mrf.mxu0
      %v2984 = vadd.f32 0.0, %v2983
      %v2985 = vpop.f32.mrf.mxu0
      %2986 = vmatprep.mubr.bf16.mxu0 0
      %2987 = vmatmul.mubr.bf16.gmra.mxu0 %v2879
      %v2988 = vpop.f32.mrf.mxu0
      %v2989 = vadd.f32 0.0, %v2988
      %v2990 = vpop.f32.mrf.mxu0
      %v2991 = vpop.f32.mrf.mxu0
      %v2992 = vadd.f32 0.0, %v2991
      %v2993 = vpop.f32.mrf.mxu0
      %2994 = vmatprep.mubr.bf16.mxu0 0
      %2995 = vmatmul.mubr.bf16.gmra.mxu0 %v2880
      %v2996 = vpop.f32.mrf.mxu0
      %v2997 = vadd.f32 0.0, %v2996
      %v2998 = vpop.f32.mrf.mxu0
      %v2999 = vpop.f32.mrf.mxu0
      %v3000 = vadd.f32 0.0, %v2999
      %v3001 = vpop.f32.mrf.mxu0
      %3002 = vmatprep.mubr.bf16.mxu0 0
      %3003 = vmatmul.mubr.bf16.gmra.mxu0 %v2881
      %v3004 = vpop.f32.mrf.mxu0
      %v3005 = vadd.f32 0.0, %v3004
      %v3006 = vpop.f32.mrf.mxu0
      %v3007 = vpop.f32.mrf.mxu0
      %v3008 = vadd.f32 0.0, %v3007
      %v3009 = vpop.f32.mrf.mxu0
      %3010 = vdwg.mxu0
      %v3011 = vadd.f32 %v2862, %v2981
      %v3012 = vadd.f32 %v2863, %v2984
      %v3013 = vadd.f32 %v2864, %v2989
      %v3014 = vadd.f32 %v2865, %v2992
      %v3015 = vadd.f32 %v2866, %v2997
      %v3016 = vadd.f32 %v2867, %v3000
      %v3017 = vadd.f32 %v2868, %v3005
      %v3018 = vadd.f32 %v2869, %v3008
      %s3019 = scalar_lea.vmem [#allocation3], 32
      %v3020 = vld [vmem:[%s3019] sm:$0xff]
      %v3021 = vld [vmem:[%s3019 + $0x10] sm:$0xff]
      %v3022 = vld [vmem:[%s3019 + $0x20] sm:$0xff]
      %v3023 = vld [vmem:[%s3019 + $0x30] sm:$0xff]
      %v3024 = vld [vmem:[%s3019 + $0x40] sm:$0xff]
      %v3025 = vld [vmem:[%s3019 + $0x50] sm:$0xff]
      %v3026 = vld [vmem:[%s3019 + $0x60] sm:$0xff]
      %v3027 = vld [vmem:[%s3019 + $0x70] sm:$0xff]
      %v3028 = vpack.c.bf16 %v3021, %v3020
      %v3029 = vpack.c.bf16 %v3023, %v3022
      %v3030 = vpack.c.bf16 %v3025, %v3024
      %v3031 = vpack.c.bf16 %v3027, %v3026
      %v3032 = vld [vmem:[%s6 + $0x180] sm:$0xf]
      %v3033 = vld [vmem:[%s6 + $0x184] sm:$0xf]
      %v3034 = vld [vmem:[%s6 + $0x188] sm:$0xf]
      %v3035 = vld [vmem:[%s6 + $0x18c] sm:$0xf]
      %v3036 = vld [vmem:[%s6 + $0x190] sm:$0xf]
      %v3037 = vld [vmem:[%s6 + $0x194] sm:$0xf]
      %v3038 = vld [vmem:[%s6 + $0x198] sm:$0xf]
      %v3039 = vld [vmem:[%s6 + $0x19c] sm:$0xf]
      %v3040 = vld [vmem:[%s6 + $0x1a0] sm:$0xf]
      %v3041 = vld [vmem:[%s6 + $0x1a4] sm:$0xf]
      %v3042 = vld [vmem:[%s6 + $0x1a8] sm:$0xf]
      %v3043 = vld [vmem:[%s6 + $0x1ac] sm:$0xf]
      %v3044 = vld [vmem:[%s6 + $0x1b0] sm:$0xf]
      %v3045 = vld [vmem:[%s6 + $0x1b4] sm:$0xf]
      %v3046 = vld [vmem:[%s6 + $0x1b8] sm:$0xf]
      %v3047 = vld [vmem:[%s6 + $0x1bc] sm:$0xf]
      %v3064 = vunpack.c.l.b16 %v3032
      %v3065 = vunpack.c.l.b16 %v3033
      %v3066 = vunpack.c.l.b16 %v3034
      %v3067 = vunpack.c.l.b16 %v3035
      %v3068 = vunpack.c.l.b16 %v3036
      %v3069 = vunpack.c.l.b16 %v3037
      %v3070 = vunpack.c.l.b16 %v3038
      %v3071 = vunpack.c.l.b16 %v3039
      %v3072 = vunpack.c.l.b16 %v3040
      %v3073 = vunpack.c.l.b16 %v3041
      %v3074 = vunpack.c.l.b16 %v3042
      %v3075 = vunpack.c.l.b16 %v3043
      %v3076 = vunpack.c.l.b16 %v3044
      %v3077 = vunpack.c.l.b16 %v3045
      %v3078 = vunpack.c.l.b16 %v3046
      %v3079 = vunpack.c.l.b16 %v3047
      %v3080 = vpack.c.b16 %v3065, %v3064
      %v3081 = vpack.c.b16 %v3067, %v3066
      %v3082 = vpack.c.b16 %v3069, %v3068
      %v3083 = vpack.c.b16 %v3071, %v3070
      %v3084 = vpack.c.b16 %v3073, %v3072
      %v3085 = vpack.c.b16 %v3075, %v3074
      %v3086 = vpack.c.b16 %v3077, %v3076
      %v3087 = vpack.c.b16 %v3079, %v3078
      %3096 = vmatprep.subr.bf16.mxu0 0
      %3097 = vmatpush1.bf16.msra.mxu0 %v3087
      %3098 = vmatprep.subr.bf16.mxu0 0
      %3099 = vmatpush1.bf16.msra.mxu0 %v3086
      %3100 = vmatprep.subr.bf16.mxu0 0
      %3101 = vmatpush1.bf16.msra.mxu0 %v3085
      %3102 = vmatprep.subr.bf16.mxu0 0
      %3103 = vmatpush1.bf16.msra.mxu0 %v3084
      %3104 = vmatprep.subr.bf16.mxu0 0
      %3105 = vmatpush1.bf16.msra.mxu0 %v3083
      %3106 = vmatprep.subr.bf16.mxu0 0
      %3107 = vmatpush1.bf16.msra.mxu0 %v3082
      %3108 = vmatprep.subr.bf16.mxu0 0
      %3109 = vmatpush1.bf16.msra.mxu0 %v3081
      %3110 = vmatprep.subr.bf16.mxu0 0
      %3111 = vmatpush1.bf16.msra.mxu0 %v3080
      %3112 = vmatprep.subr.bf16.mxu0 0
      %3113 = vmatpush2.bf16.msra.mxu0 0
      %3114 = vmatprep.subr.bf16.mxu0 0
      %3115 = vmatpush2.bf16.msra.mxu0 0
      %3116 = vmatprep.subr.bf16.mxu0 0
      %3117 = vmatpush2.bf16.msra.mxu0 0
      %3118 = vmatprep.subr.bf16.mxu0 0
      %3119 = vmatpush2.bf16.msra.mxu0 0
      %3120 = vmatprep.subr.bf16.mxu0 0
      %3121 = vmatpush2.bf16.msra.mxu0 0
      %3122 = vmatprep.subr.bf16.mxu0 0
      %3123 = vmatpush2.bf16.msra.mxu0 0
      %3124 = vmatprep.subr.bf16.mxu0 0
      %3125 = vmatpush2.bf16.msra.mxu0 0
      %3126 = vmatprep.subr.bf16.mxu0 0
      %3127 = vmatpush2.bf16.msra.mxu0 0
      %3128 = vmatprep.mubr.bf16.mxu0 0
      %3129 = vmatmul.mubr.bf16.gmra.mxu0 %v3028
      %v3130 = vpop.f32.mrf.mxu0
      %v3131 = vadd.f32 0.0, %v3130
      %v3132 = vpop.f32.mrf.mxu0
      %v3133 = vpop.f32.mrf.mxu0
      %v3134 = vadd.f32 0.0, %v3133
      %v3135 = vpop.f32.mrf.mxu0
      %3136 = vmatprep.mubr.bf16.mxu0 0
      %3137 = vmatmul.mubr.bf16.gmra.mxu0 %v3029
      %v3138 = vpop.f32.mrf.mxu0
      %v3139 = vadd.f32 0.0, %v3138
      %v3140 = vpop.f32.mrf.mxu0
      %v3141 = vpop.f32.mrf.mxu0
      %v3142 = vadd.f32 0.0, %v3141
      %v3143 = vpop.f32.mrf.mxu0
      %3144 = vmatprep.mubr.bf16.mxu0 0
      %3145 = vmatmul.mubr.bf16.gmra.mxu0 %v3030
      %v3146 = vpop.f32.mrf.mxu0
      %v3147 = vadd.f32 0.0, %v3146
      %v3148 = vpop.f32.mrf.mxu0
      %v3149 = vpop.f32.mrf.mxu0
      %v3150 = vadd.f32 0.0, %v3149
      %v3151 = vpop.f32.mrf.mxu0
      %3152 = vmatprep.mubr.bf16.mxu0 0
      %3153 = vmatmul.mubr.bf16.gmra.mxu0 %v3031
      %v3154 = vpop.f32.mrf.mxu0
      %v3155 = vadd.f32 0.0, %v3154
      %v3156 = vpop.f32.mrf.mxu0
      %v3157 = vpop.f32.mrf.mxu0
      %v3158 = vadd.f32 0.0, %v3157
      %v3159 = vpop.f32.mrf.mxu0
      %3160 = vdwg.mxu0
      %v3161 = vadd.f32 %v3011, %v3131
      %v3162 = vadd.f32 %v3012, %v3134
      %v3163 = vadd.f32 %v3013, %v3139
      %v3164 = vadd.f32 %v3014, %v3142
      %v3165 = vadd.f32 %v3015, %v3147
      %v3166 = vadd.f32 %v3016, %v3150
      %v3167 = vadd.f32 %v3017, %v3155
      %v3168 = vadd.f32 %v3018, %v3158
      %v3169 = vld [vmem:[%s3019 + $0x1] sm:$0xff]
      %v3170 = vld [vmem:[%s3019 + $0x11] sm:$0xff]
      %v3171 = vld [vmem:[%s3019 + $0x21] sm:$0xff]
      %v3172 = vld [vmem:[%s3019 + $0x31] sm:$0xff]
      %v3173 = vld [vmem:[%s3019 + $0x41] sm:$0xff]
      %v3174 = vld [vmem:[%s3019 + $0x51] sm:$0xff]
      %v3175 = vld [vmem:[%s3019 + $0x61] sm:$0xff]
      %v3176 = vld [vmem:[%s3019 + $0x71] sm:$0xff]
      %v3177 = vpack.c.bf16 %v3170, %v3169
      %v3178 = vpack.c.bf16 %v3172, %v3171
      %v3179 = vpack.c.bf16 %v3174, %v3173
      %v3180 = vpack.c.bf16 %v3176, %v3175
      %v3181 = vld [vmem:[%s6 + $0x1c0] sm:$0xf]
      %v3182 = vld [vmem:[%s6 + $0x1c4] sm:$0xf]
      %v3183 = vld [vmem:[%s6 + $0x1c8] sm:$0xf]
      %v3184 = vld [vmem:[%s6 + $0x1cc] sm:$0xf]
      %v3185 = vld [vmem:[%s6 + $0x1d0] sm:$0xf]
      %v3186 = vld [vmem:[%s6 + $0x1d4] sm:$0xf]
      %v3187 = vld [vmem:[%s6 + $0x1d8] sm:$0xf]
      %v3188 = vld [vmem:[%s6 + $0x1dc] sm:$0xf]
      %v3189 = vld [vmem:[%s6 + $0x1e0] sm:$0xf]
      %v3190 = vld [vmem:[%s6 + $0x1e4] sm:$0xf]
      %v3191 = vld [vmem:[%s6 + $0x1e8] sm:$0xf]
      %v3192 = vld [vmem:[%s6 + $0x1ec] sm:$0xf]
      %v3193 = vld [vmem:[%s6 + $0x1f0] sm:$0xf]
      %v3194 = vld [vmem:[%s6 + $0x1f4] sm:$0xf]
      %v3195 = vld [vmem:[%s6 + $0x1f8] sm:$0xf]
      %v3196 = vld [vmem:[%s6 + $0x1fc] sm:$0xf]
      %v3213 = vunpack.c.l.b16 %v3181
      %v3214 = vunpack.c.l.b16 %v3182
      %v3215 = vunpack.c.l.b16 %v3183
      %v3216 = vunpack.c.l.b16 %v3184
      %v3217 = vunpack.c.l.b16 %v3185
      %v3218 = vunpack.c.l.b16 %v3186
      %v3219 = vunpack.c.l.b16 %v3187
      %v3220 = vunpack.c.l.b16 %v3188
      %v3221 = vunpack.c.l.b16 %v3189
      %v3222 = vunpack.c.l.b16 %v3190
      %v3223 = vunpack.c.l.b16 %v3191
      %v3224 = vunpack.c.l.b16 %v3192
      %v3225 = vunpack.c.l.b16 %v3193
      %v3226 = vunpack.c.l.b16 %v3194
      %v3227 = vunpack.c.l.b16 %v3195
      %v3228 = vunpack.c.l.b16 %v3196
      %v3229 = vpack.c.b16 %v3214, %v3213
      %v3230 = vpack.c.b16 %v3216, %v3215
      %v3231 = vpack.c.b16 %v3218, %v3217
      %v3232 = vpack.c.b16 %v3220, %v3219
      %v3233 = vpack.c.b16 %v3222, %v3221
      %v3234 = vpack.c.b16 %v3224, %v3223
      %v3235 = vpack.c.b16 %v3226, %v3225
      %v3236 = vpack.c.b16 %v3228, %v3227
      %3245 = vmatprep.subr.bf16.mxu0 0
      %3246 = vmatpush1.bf16.msra.mxu0 %v3236
      %3247 = vmatprep.subr.bf16.mxu0 0
      %3248 = vmatpush1.bf16.msra.mxu0 %v3235
      %3249 = vmatprep.subr.bf16.mxu0 0
      %3250 = vmatpush1.bf16.msra.mxu0 %v3234
      %3251 = vmatprep.subr.bf16.mxu0 0
      %3252 = vmatpush1.bf16.msra.mxu0 %v3233
      %3253 = vmatprep.subr.bf16.mxu0 0
      %3254 = vmatpush1.bf16.msra.mxu0 %v3232
      %3255 = vmatprep.subr.bf16.mxu0 0
      %3256 = vmatpush1.bf16.msra.mxu0 %v3231
      %3257 = vmatprep.subr.bf16.mxu0 0
      %3258 = vmatpush1.bf16.msra.mxu0 %v3230
      %3259 = vmatprep.subr.bf16.mxu0 0
      %3260 = vmatpush1.bf16.msra.mxu0 %v3229
      %3261 = vmatprep.subr.bf16.mxu0 0
      %3262 = vmatpush2.bf16.msra.mxu0 0
      %3263 = vmatprep.subr.bf16.mxu0 0
      %3264 = vmatpush2.bf16.msra.mxu0 0
      %3265 = vmatprep.subr.bf16.mxu0 0
      %3266 = vmatpush2.bf16.msra.mxu0 0
      %3267 = vmatprep.subr.bf16.mxu0 0
      %3268 = vmatpush2.bf16.msra.mxu0 0
      %3269 = vmatprep.subr.bf16.mxu0 0
      %3270 = vmatpush2.bf16.msra.mxu0 0
      %3271 = vmatprep.subr.bf16.mxu0 0
      %3272 = vmatpush2.bf16.msra.mxu0 0
      %3273 = vmatprep.subr.bf16.mxu0 0
      %3274 = vmatpush2.bf16.msra.mxu0 0
      %3275 = vmatprep.subr.bf16.mxu0 0
      %3276 = vmatpush2.bf16.msra.mxu0 0
      %3277 = vmatprep.mubr.bf16.mxu0 0
      %3278 = vmatmul.mubr.bf16.gmra.mxu0 %v3177
      %v3279 = vpop.f32.mrf.mxu0
      %v3280 = vadd.f32 0.0, %v3279
      %v3281 = vpop.f32.mrf.mxu0
      %v3282 = vpop.f32.mrf.mxu0
      %v3283 = vadd.f32 0.0, %v3282
      %v3284 = vpop.f32.mrf.mxu0
      %3285 = vmatprep.mubr.bf16.mxu0 0
      %3286 = vmatmul.mubr.bf16.gmra.mxu0 %v3178
      %v3287 = vpop.f32.mrf.mxu0
      %v3288 = vadd.f32 0.0, %v3287
      %v3289 = vpop.f32.mrf.mxu0
      %v3290 = vpop.f32.mrf.mxu0
      %v3291 = vadd.f32 0.0, %v3290
      %v3292 = vpop.f32.mrf.mxu0
      %3293 = vmatprep.mubr.bf16.mxu0 0
      %3294 = vmatmul.mubr.bf16.gmra.mxu0 %v3179
      %v3295 = vpop.f32.mrf.mxu0
      %v3296 = vadd.f32 0.0, %v3295
      %v3297 = vpop.f32.mrf.mxu0
      %v3298 = vpop.f32.mrf.mxu0
      %v3299 = vadd.f32 0.0, %v3298
      %v3300 = vpop.f32.mrf.mxu0
      %3301 = vmatprep.mubr.bf16.mxu0 0
      %3302 = vmatmul.mubr.bf16.gmra.mxu0 %v3180
      %v3303 = vpop.f32.mrf.mxu0
      %v3304 = vadd.f32 0.0, %v3303
      %v3305 = vpop.f32.mrf.mxu0
      %v3306 = vpop.f32.mrf.mxu0
      %v3307 = vadd.f32 0.0, %v3306
      %v3308 = vpop.f32.mrf.mxu0
      %3309 = vdwg.mxu0
      %v3310 = vadd.f32 %v3161, %v3280
      %v3311 = vadd.f32 %v3162, %v3283
      %v3312 = vadd.f32 %v3163, %v3288
      %v3313 = vadd.f32 %v3164, %v3291
      %v3314 = vadd.f32 %v3165, %v3296
      %v3315 = vadd.f32 %v3166, %v3299
      %v3316 = vadd.f32 %v3167, %v3304
      %v3317 = vadd.f32 %v3168, %v3307
      %v3318 = vld [vmem:[%s3019 + $0x2] sm:$0xff]
      %v3319 = vld [vmem:[%s3019 + $0x12] sm:$0xff]
      %v3320 = vld [vmem:[%s3019 + $0x22] sm:$0xff]
      %v3321 = vld [vmem:[%s3019 + $0x32] sm:$0xff]
      %v3322 = vld [vmem:[%s3019 + $0x42] sm:$0xff]
      %v3323 = vld [vmem:[%s3019 + $0x52] sm:$0xff]
      %v3324 = vld [vmem:[%s3019 + $0x62] sm:$0xff]
      %v3325 = vld [vmem:[%s3019 + $0x72] sm:$0xff]
      %v3326 = vpack.c.bf16 %v3319, %v3318
      %v3327 = vpack.c.bf16 %v3321, %v3320
      %v3328 = vpack.c.bf16 %v3323, %v3322
      %v3329 = vpack.c.bf16 %v3325, %v3324
      %v3330 = vld [vmem:[%s6 + $0x200] sm:$0xf]
      %v3331 = vld [vmem:[%s6 + $0x204] sm:$0xf]
      %v3332 = vld [vmem:[%s6 + $0x208] sm:$0xf]
      %v3333 = vld [vmem:[%s6 + $0x20c] sm:$0xf]
      %v3334 = vld [vmem:[%s6 + $0x210] sm:$0xf]
      %v3335 = vld [vmem:[%s6 + $0x214] sm:$0xf]
      %v3336 = vld [vmem:[%s6 + $0x218] sm:$0xf]
      %v3337 = vld [vmem:[%s6 + $0x21c] sm:$0xf]
      %v3338 = vld [vmem:[%s6 + $0x220] sm:$0xf]
      %v3339 = vld [vmem:[%s6 + $0x224] sm:$0xf]
      %v3340 = vld [vmem:[%s6 + $0x228] sm:$0xf]
      %v3341 = vld [vmem:[%s6 + $0x22c] sm:$0xf]
      %v3342 = vld [vmem:[%s6 + $0x230] sm:$0xf]
      %v3343 = vld [vmem:[%s6 + $0x234] sm:$0xf]
      %v3344 = vld [vmem:[%s6 + $0x238] sm:$0xf]
      %v3345 = vld [vmem:[%s6 + $0x23c] sm:$0xf]
      %v3362 = vunpack.c.l.b16 %v3330
      %v3363 = vunpack.c.l.b16 %v3331
      %v3364 = vunpack.c.l.b16 %v3332
      %v3365 = vunpack.c.l.b16 %v3333
      %v3366 = vunpack.c.l.b16 %v3334
      %v3367 = vunpack.c.l.b16 %v3335
      %v3368 = vunpack.c.l.b16 %v3336
      %v3369 = vunpack.c.l.b16 %v3337
      %v3370 = vunpack.c.l.b16 %v3338
      %v3371 = vunpack.c.l.b16 %v3339
      %v3372 = vunpack.c.l.b16 %v3340
      %v3373 = vunpack.c.l.b16 %v3341
      %v3374 = vunpack.c.l.b16 %v3342
      %v3375 = vunpack.c.l.b16 %v3343
      %v3376 = vunpack.c.l.b16 %v3344
      %v3377 = vunpack.c.l.b16 %v3345
      %v3378 = vpack.c.b16 %v3363, %v3362
      %v3379 = vpack.c.b16 %v3365, %v3364
      %v3380 = vpack.c.b16 %v3367, %v3366
      %v3381 = vpack.c.b16 %v3369, %v3368
      %v3382 = vpack.c.b16 %v3371, %v3370
      %v3383 = vpack.c.b16 %v3373, %v3372
      %v3384 = vpack.c.b16 %v3375, %v3374
      %v3385 = vpack.c.b16 %v3377, %v3376
      %3394 = vmatprep.subr.bf16.mxu0 0
      %3395 = vmatpush1.bf16.msra.mxu0 %v3385
      %3396 = vmatprep.subr.bf16.mxu0 0
      %3397 = vmatpush1.bf16.msra.mxu0 %v3384
      %3398 = vmatprep.subr.bf16.mxu0 0
      %3399 = vmatpush1.bf16.msra.mxu0 %v3383
      %3400 = vmatprep.subr.bf16.mxu0 0
      %3401 = vmatpush1.bf16.msra.mxu0 %v3382
      %3402 = vmatprep.subr.bf16.mxu0 0
      %3403 = vmatpush1.bf16.msra.mxu0 %v3381
      %3404 = vmatprep.subr.bf16.mxu0 0
      %3405 = vmatpush1.bf16.msra.mxu0 %v3380
      %3406 = vmatprep.subr.bf16.mxu0 0
      %3407 = vmatpush1.bf16.msra.mxu0 %v3379
      %3408 = vmatprep.subr.bf16.mxu0 0
      %3409 = vmatpush1.bf16.msra.mxu0 %v3378
      %3410 = vmatprep.subr.bf16.mxu0 0
      %3411 = vmatpush2.bf16.msra.mxu0 0
      %3412 = vmatprep.subr.bf16.mxu0 0
      %3413 = vmatpush2.bf16.msra.mxu0 0
      %3414 = vmatprep.subr.bf16.mxu0 0
      %3415 = vmatpush2.bf16.msra.mxu0 0
      %3416 = vmatprep.subr.bf16.mxu0 0
      %3417 = vmatpush2.bf16.msra.mxu0 0
      %3418 = vmatprep.subr.bf16.mxu0 0
      %3419 = vmatpush2.bf16.msra.mxu0 0
      %3420 = vmatprep.subr.bf16.mxu0 0
      %3421 = vmatpush2.bf16.msra.mxu0 0
      %3422 = vmatprep.subr.bf16.mxu0 0
      %3423 = vmatpush2.bf16.msra.mxu0 0
      %3424 = vmatprep.subr.bf16.mxu0 0
      %3425 = vmatpush2.bf16.msra.mxu0 0
      %3426 = vmatprep.mubr.bf16.mxu0 0
      %3427 = vmatmul.mubr.bf16.gmra.mxu0 %v3326
      %v3428 = vpop.f32.mrf.mxu0
      %v3429 = vadd.f32 0.0, %v3428
      %v3430 = vpop.f32.mrf.mxu0
      %v3431 = vpop.f32.mrf.mxu0
      %v3432 = vadd.f32 0.0, %v3431
      %v3433 = vpop.f32.mrf.mxu0
      %3434 = vmatprep.mubr.bf16.mxu0 0
      %3435 = vmatmul.mubr.bf16.gmra.mxu0 %v3327
      %v3436 = vpop.f32.mrf.mxu0
      %v3437 = vadd.f32 0.0, %v3436
      %v3438 = vpop.f32.mrf.mxu0
      %v3439 = vpop.f32.mrf.mxu0
      %v3440 = vadd.f32 0.0, %v3439
      %v3441 = vpop.f32.mrf.mxu0
      %3442 = vmatprep.mubr.bf16.mxu0 0
      %3443 = vmatmul.mubr.bf16.gmra.mxu0 %v3328
      %v3444 = vpop.f32.mrf.mxu0
      %v3445 = vadd.f32 0.0, %v3444
      %v3446 = vpop.f32.mrf.mxu0
      %v3447 = vpop.f32.mrf.mxu0
      %v3448 = vadd.f32 0.0, %v3447
      %v3449 = vpop.f32.mrf.mxu0
      %3450 = vmatprep.mubr.bf16.mxu0 0
      %3451 = vmatmul.mubr.bf16.gmra.mxu0 %v3329
      %v3452 = vpop.f32.mrf.mxu0
      %v3453 = vadd.f32 0.0, %v3452
      %v3454 = vpop.f32.mrf.mxu0
      %v3455 = vpop.f32.mrf.mxu0
      %v3456 = vadd.f32 0.0, %v3455
      %v3457 = vpop.f32.mrf.mxu0
      %3458 = vdwg.mxu0
      %v3459 = vadd.f32 %v3310, %v3429
      %v3460 = vadd.f32 %v3311, %v3432
      %v3461 = vadd.f32 %v3312, %v3437
      %v3462 = vadd.f32 %v3313, %v3440
      %v3463 = vadd.f32 %v3314, %v3445
      %v3464 = vadd.f32 %v3315, %v3448
      %v3465 = vadd.f32 %v3316, %v3453
      %v3466 = vadd.f32 %v3317, %v3456
      %3467 = vst [vmem:[%s305] sm:$0xff] %v3459
      %3468 = vst [vmem:[%s305 + $0x8] sm:$0xff] %v3460
      %3469 = vst [vmem:[%s305 + $0x10] sm:$0xff] %v3461
      %3470 = vst [vmem:[%s305 + $0x18] sm:$0xff] %v3462
      %3471 = vst [vmem:[%s305 + $0x20] sm:$0xff] %v3463
      %3472 = vst [vmem:[%s305 + $0x28] sm:$0xff] %v3464
      %3473 = vst [vmem:[%s305 + $0x30] sm:$0xff] %v3465
      %3474 = vst [vmem:[%s305 + $0x38] sm:$0xff] %v3466
      %p3475 = scmp.lt.s32.totalorder %s19, 1
      %s3476 = scalar_select %p3475, %s19, 1
      %s3477 = smul.addr %s3476, 8
      %s3478 = smul.addr %s3477, 8
      %s3479 = scalar_lea.vmem %s8, %s3478
      // Predicated region
      $region53: #{preact_block_forward.1} parent=51 // pred_check
        %p3480 = pneg %p210
      $region54: #{preact_block_forward.1} parent=51 // pred_check_branch
        %3482 = sbr.rel (%p3480) target = $region56
      $region55: #{preact_block_forward.1} parent=51 // pred_region
        _
      $region56: #{preact_block_forward.1} parent=51 // pred_fallthru
        _
    $region52: #{preact_block_forward.1} parent=5 // pred_fallthru
      _
    %p3483 = scmp.le.s32.totalorder 2, %s14
    // Predicated region
    $region57: #{preact_block_forward.1} parent=5 // pred_check
      %p3484 = pneg %p3483
    $region58: #{preact_block_forward.1} parent=5 // pred_check_branch
      %3486 = sbr.rel (%p3484) target = $region60
    $region59: #{preact_block_forward.1} parent=5 // pred_region
      %s3487 = ssub.s32 %s14, 2
      // Predicated region
      $region61: #{preact_block_forward.1} parent=59 // pred_check
        %p3488 = pneg %p216
      $region62: #{preact_block_forward.1} parent=59 // pred_check_branch
        %3490 = sbr.rel (%p3488) target = $region64
      $region63: #{preact_block_forward.1} parent=59 // pred_region
        %p3491 = scmp.lt.s32.totalorder %s20, 1
        %s3492 = scalar_select %p3491, %s20, 1
        %s3493 = smul.addr %s3492, 8
        %s3494 = smul.addr %s3493, 8
        %s3495 = scalar_lea.vmem %s8, %s3494
      $region64: #{preact_block_forward.1} parent=59 // pred_fallthru
        _
    $region60: #{preact_block_forward.1} parent=5 // pred_fallthru
      _
  $region6: #{preact_block_forward.1} parent=0 // loop_footer
    %s18 = sadd.s32 1, %s14
  $region7: #{preact_block_forward.1} parent=0 // loop_footer_branch
    %13 = sbr.rel target = $region3
  $region8: #{preact_block_forward.1} parent=0 // loop_exit
    _

</llo_original>
